<compile_context>
chip_gen: v7x
topology: tpu7x:2x2x1
jax: 0.10.0
libtpu: 0.0.40
codegen_flags: <defaults>
</compile_context>

<pallas_src>
import functools

import jax
import jax.numpy as jnp
from jax import lax
from jax.experimental import pallas as pl
from jax.experimental.pallas import tpu as pltpu

# ---- model hyper-parameters (small shapes consistent with the module) ----
NUM_CLASSES = 5
NUM_FIXED = 2                      # assumed len(CRF.FIXED_CLASSES) == 2
NUM_TAGS = NUM_CLASSES + NUM_FIXED # K = 7
FEATURE_DIM = 32                   # feature_dim
FC_DIM = 16                        # fc_dim (bottleneck)
HIDDEN_DIM = 32                    # hidden_dim
BATCH = 2
SEQ = 8

G = 3 * HIDDEN_DIM                 # 96 gate lanes per direction
PACK_W = 2 * G                     # 192 lane width of the packed parameter array

# ---- static row offsets inside the single packed parameter array ----
R_WFC = 0                                   # (F, FC)       cols [0:FC]
R_WIH = R_WFC + FEATURE_DIM                 # (FC, 2G)      [W_ih fwd | W_ih bwd]
R_WHH = R_WIH + FC_DIM                      # (2H, 2G)      block-diag [Whh_f, 0; 0, Whh_b]
R_WOUT = R_WHH + 2 * HIDDEN_DIM             # (2H, K)       cols [0:K]
R_BFC = R_WOUT + 2 * HIDDEN_DIM             # (1, FC)
R_BIH = R_BFC + 1                           # (1, 2G)       [b_ih_f | b_ih_b]
R_BHH = R_BIH + 1                           # (1, 2G)       [b_hh_f | b_hh_b]
R_BOUT = R_BHH + 1                          # (1, K)
R_START = R_BOUT + 1                        # (1, K)
R_END = R_START + 1                         # (1, K)
R_TRANS = R_END + 1                         # (K, K)
PACK_ROWS = ((R_TRANS + NUM_TAGS + 7) // 8) * 8   # sublane-aligned row count (192)


def _vmem():
    return pl.BlockSpec(memory_space=pltpu.MemorySpace.VMEM)


# ---------------------------------------------------------------------------
# Fused kernel: bottleneck + BiGRU + output projection + Viterbi + backtrace
# ---------------------------------------------------------------------------
def fused_kernel(x_ref, p_ref, score_ref, path_ref, *, seq_len):
    T = seq_len
    BT, F = x_ref.shape
    B = BT // T
    H = HIDDEN_DIM
    K = NUM_TAGS
    FC = FC_DIM

    # ---- static views into the single packed parameter array ----
    wfc = p_ref[R_WFC:R_WFC + F, 0:FC]                 # (F, FC)
    bfc = p_ref[R_BFC:R_BFC + 1, 0:FC]                 # (1, FC)
    wih = p_ref[R_WIH:R_WIH + FC, :]                   # (FC, 2G)  [fwd | bwd]
    bih = p_ref[R_BIH:R_BIH + 1, :]                    # (1, 2G)
    whh = p_ref[R_WHH:R_WHH + 2 * H, :]                # (2H, 2G) block-diag
    bhh = p_ref[R_BHH:R_BHH + 1, :]                    # (1, 2G)
    wout = p_ref[R_WOUT:R_WOUT + 2 * H, 0:K]           # (2H, K)   [fwd; bwd]
    bout = p_ref[R_BOUT:R_BOUT + 1, 0:K]               # (1, K)
    start = p_ref[R_START:R_START + 1, 0:K]            # (1, K)
    end = p_ref[R_END:R_END + 1, 0:K]                  # (1, K)
    trans = p_ref[R_TRANS:R_TRANS + K, 0:K]            # (K, K)

    # ---- bottleneck: Linear + ReLU (dropout identity in eval mode) ----
    z = jnp.dot(x_ref[...], wfc, preferred_element_type=jnp.float32) + bfc
    z = jnp.maximum(z, 0.0)                            # (B*T, FC), f32

    # ---- hoisted GRU input projections: BOTH directions in one bf16 matmul ----
    gi = jnp.dot(z.astype(jnp.bfloat16), wih.astype(jnp.bfloat16),
                 preferred_element_type=jnp.float32) + bih        # (B*T, 2G)
    gi = gi.reshape(B, T, 2 * G)

    whh_bf = whh.astype(jnp.bfloat16)                  # hoisted cast of block-diag Whh

    def gru_gates(gi_t, gh_t, h):
        r = jax.nn.sigmoid(gi_t[:, :H] + gh_t[:, :H])
        u = jax.nn.sigmoid(gi_t[:, H:2 * H] + gh_t[:, H:2 * H])
        n = jnp.tanh(gi_t[:, 2 * H:] + r * gh_t[:, 2 * H:])
        return (1.0 - u) * n + u * h

    # ---- fwd + bwd recurrence interleaved; ONE MXU push per step (block-diag Whh) ----
    hf = jnp.zeros((B, H), jnp.float32)
    hb = jnp.zeros((B, H), jnp.float32)
    hs_f = [None] * T
    hs_b = [None] * T
    for s in range(T):
        tf, tb = s, T - 1 - s
        h_cat = jnp.concatenate([hf, hb], axis=1)                 # (B, 2H)
        gh = jnp.dot(h_cat.astype(jnp.bfloat16), whh_bf,
                     preferred_element_type=jnp.float32) + bhh    # (B, 2G)
        hf = gru_gates(gi[:, tf, 0:G], gh[:, 0:G], hf)
        hb = gru_gates(gi[:, tb, G:2 * G], gh[:, G:2 * G], hb)
        hs_f[tf] = hf
        hs_b[tb] = hb

    # ---- hoisted output projection: one matmul for all timesteps / both directions ----
    h_all = jnp.concatenate(
        [jnp.concatenate([hs_f[t], hs_b[t]], axis=1) for t in range(T)], axis=0)  # (T*B, 2H)
    em_all = jnp.dot(h_all, wout, preferred_element_type=jnp.float32) + bout      # (T*B, K)
    em = [em_all[t * B:(t + 1) * B, :] for t in range(T)]                         # T x (B, K)

    # ---- CRF Viterbi forward pass (all f32; mask=None semantics) ----
    score = start + em[0]                              # (B, K)
    iota3 = lax.broadcasted_iota(jnp.int32, (B, K, K), 1)
    hist = []                                          # backpointers, kept in vregs
    for t in range(1, T):
        # m[b, i, j] = score[b, i] + trans[i, j] + em_t[b, j]
        m = score[:, :, None] + trans[None, :, :] + em[t][:, None, :]   # (B, K, K)
        mx = jnp.max(m, axis=1)                                         # (B, K)
        idx = jnp.min(jnp.where(m == mx[:, None, :], iota3, jnp.int32(K)), axis=1)
        hist.append(idx)                                                # (B, K) int32
        score = mx

    score = score + end
    best = jnp.max(score, axis=1, keepdims=True)                        # (B, 1)
    lane = lax.broadcasted_iota(jnp.int32, (B, K), 1)
    cur = jnp.min(jnp.where(score == best, lane, jnp.int32(K)),
                  axis=1, keepdims=True)                                # (B, 1) int32

    # ---- in-kernel backtrace via one-hot selects (hist never leaves vregs) ----
    cols = [None] * T
    cols[T - 1] = cur
    for t in range(T - 2, -1, -1):
        cur = jnp.sum(jnp.where(lane == cur, hist[t], 0),
                      axis=1, keepdims=True)                            # (B, 1)
        cols[t] = cur

    path = jnp.concatenate(cols, axis=1)                                # (B, T)

    score_ref[...] = best
    path_ref[...] = path


# ---------------------------------------------------------------------------
# Parameter init + packing (all params -> ONE (PACK_ROWS, PACK_W) f32 array)
# ---------------------------------------------------------------------------
def init_params(key):
    ks = jax.random.split(key, 15)
    w = lambda k, s: jax.random.normal(k, s, jnp.float32) * 0.1
    H, FC, F, K = HIDDEN_DIM, FC_DIM, FEATURE_DIM, NUM_TAGS
    return dict(
        wfc=w(ks[0], (F, FC)), bfc=w(ks[1], (FC,)),
        wih_f=w(ks[2], (FC, G)), wih_b=w(ks[3], (FC, G)),
        whh_f=w(ks[4], (H, G)), whh_b=w(ks[5], (H, G)),
        bih_f=w(ks[6], (G,)), bhh_f=w(ks[7], (G,)),
        bih_b=w(ks[8], (G,)), bhh_b=w(ks[9], (G,)),
        wout=w(ks[10], (2 * H, K)), bout=w(ks[11], (K,)),
        trans=w(ks[12], (K, K)), start=w(ks[13], (K,)), end=w(ks[14], (K,)),
    )


def pack_params(p):
    """Pack all weights/biases into one f32 array (block-diag Whh built here)."""
    H, FC, F, K = HIDDEN_DIM, FC_DIM, FEATURE_DIM, NUM_TAGS
    buf = jnp.zeros((PACK_ROWS, PACK_W), jnp.float32)
    buf = buf.at[R_WFC:R_WFC + F, 0:FC].set(p['wfc'])
    buf = buf.at[R_WIH:R_WIH + FC, 0:G].set(p['wih_f'])
    buf = buf.at[R_WIH:R_WIH + FC, G:2 * G].set(p['wih_b'])
    buf = buf.at[R_WHH:R_WHH + H, 0:G].set(p['whh_f'])              # block-diagonal
    buf = buf.at[R_WHH + H:R_WHH + 2 * H, G:2 * G].set(p['whh_b'])
    buf = buf.at[R_WOUT:R_WOUT + 2 * H, 0:K].set(p['wout'])
    buf = buf.at[R_BFC, 0:FC].set(p['bfc'])
    buf = buf.at[R_BIH, 0:G].set(p['bih_f'])
    buf = buf.at[R_BIH, G:2 * G].set(p['bih_b'])
    buf = buf.at[R_BHH, 0:G].set(p['bhh_f'])
    buf = buf.at[R_BHH, G:2 * G].set(p['bhh_b'])
    buf = buf.at[R_BOUT, 0:K].set(p['bout'])
    buf = buf.at[R_START, 0:K].set(p['start'])
    buf = buf.at[R_END, 0:K].set(p['end'])
    buf = buf.at[R_TRANS:R_TRANS + K, 0:K].set(p['trans'])
    return buf


# ---------------------------------------------------------------------------
# Wrapper
# ---------------------------------------------------------------------------
@jax.jit
def prnn_crf_forward(x, packed):
    B, T, F = x.shape
    x2 = x.reshape(B * T, F)     # flatten in XLA (free layout plumbing, not in-kernel)
    best, path = pl.pallas_call(
        functools.partial(fused_kernel, seq_len=T),
        out_shape=(jax.ShapeDtypeStruct((B, 1), jnp.float32),
                   jax.ShapeDtypeStruct((B, T), jnp.int32)),
        in_specs=[_vmem(), _vmem()],
        out_specs=(_vmem(), _vmem()),
    )(x2, packed)
    return best[:, 0], path


if __name__ == "__main__":
    key = jax.random.PRNGKey(0)
    kx, kp = jax.random.split(key)
    x = jax.random.normal(kx, (BATCH, SEQ, FEATURE_DIM), jnp.float32)
    params = init_params(kp)
    packed = pack_params(params)

    score, path = prnn_crf_forward(x, packed)
    jax.block_until_ready((score, path))

    assert score.shape == (BATCH,)
    assert path.shape == (BATCH, SEQ)
    assert bool(jnp.all((path >= 0) & (path < NUM_TAGS)))
    print("KERNEL_OK")
</pallas_src>

<mosaic_0001>
module attributes {stable_mosaic.version = 11 : i64} {
  func.func @fused_kernel(%arg0: memref<16x32xf32, #tpu.memory_space<vmem>>, %arg1: memref<192x192xf32, #tpu.memory_space<vmem>>, %arg2: memref<2x1xf32, #tpu.memory_space<vmem>>, %arg3: memref<2x8xi32, #tpu.memory_space<vmem>>) attributes {dimension_semantics = [], scalar_prefetch = 0 : i64, scratch_operands = 0 : i64, tpu.core_type = #tpu.core_type<tc>} {
    %c0 = arith.constant 0 : index
    %c0_0 = arith.constant 0 : index
    %0 = vector.load %arg1[%c0, %c0_0] : memref<192x192xf32, #tpu.memory_space<vmem>>, vector<32x16xf32>
    %c176 = arith.constant 176 : index
    %c0_1 = arith.constant 0 : index
    %1 = vector.load %arg1[%c176, %c0_1] : memref<192x192xf32, #tpu.memory_space<vmem>>, vector<1x16xf32>
    %c32 = arith.constant 32 : index
    %c0_2 = arith.constant 0 : index
    %2 = vector.load %arg1[%c32, %c0_2] : memref<192x192xf32, #tpu.memory_space<vmem>>, vector<16x192xf32>
    %c177 = arith.constant 177 : index
    %c0_3 = arith.constant 0 : index
    %3 = vector.load %arg1[%c177, %c0_3] : memref<192x192xf32, #tpu.memory_space<vmem>>, vector<1x192xf32>
    %c48 = arith.constant 48 : index
    %c0_4 = arith.constant 0 : index
    %4 = vector.load %arg1[%c48, %c0_4] : memref<192x192xf32, #tpu.memory_space<vmem>>, vector<64x192xf32>
    %c178 = arith.constant 178 : index
    %c0_5 = arith.constant 0 : index
    %5 = vector.load %arg1[%c178, %c0_5] : memref<192x192xf32, #tpu.memory_space<vmem>>, vector<1x192xf32>
    %c112 = arith.constant 112 : index
    %c0_6 = arith.constant 0 : index
    %6 = vector.load %arg1[%c112, %c0_6] : memref<192x192xf32, #tpu.memory_space<vmem>>, vector<64x7xf32>
    %c179 = arith.constant 179 : index
    %c0_7 = arith.constant 0 : index
    %7 = vector.load %arg1[%c179, %c0_7] : memref<192x192xf32, #tpu.memory_space<vmem>>, vector<1x7xf32>
    %c180 = arith.constant 180 : index
    %c0_8 = arith.constant 0 : index
    %8 = vector.load %arg1[%c180, %c0_8] : memref<192x192xf32, #tpu.memory_space<vmem>>, vector<1x7xf32>
    %c181 = arith.constant 181 : index
    %c0_9 = arith.constant 0 : index
    %9 = vector.load %arg1[%c181, %c0_9] : memref<192x192xf32, #tpu.memory_space<vmem>>, vector<1x7xf32>
    %c182 = arith.constant 182 : index
    %c0_10 = arith.constant 0 : index
    %10 = vector.load %arg1[%c182, %c0_10] : memref<192x192xf32, #tpu.memory_space<vmem>>, vector<7x7xf32>
    %c0_11 = arith.constant 0 : index
    %c0_12 = arith.constant 0 : index
    %11 = vector.load %arg0[%c0_11, %c0_12] : memref<16x32xf32, #tpu.memory_space<vmem>>, vector<16x32xf32>
    %cst = arith.constant dense<0.000000e+00> : vector<16x16xf32>
    %12 = tpu.matmul %11, %0, %cst {dimension_numbers = #tpu.dot_dimension_numbers<[1], [0], [0], [1], [0, 0, 1, 1], [], []>} : vector<16x32xf32>, vector<32x16xf32>, vector<16x16xf32> -> vector<16x16xf32>
    %13 = vector.broadcast %1 : vector<1x16xf32> to vector<16x16xf32>
    %14 = arith.addf %12, %13 : vector<16x16xf32>
    %cst_13 = arith.constant 0.000000e+00 : f32
    %15 = vector.broadcast %cst_13 : f32 to vector<16x16xf32>
    %16 = arith.maximumf %14, %15 : vector<16x16xf32>
    %17 = arith.truncf %16 : vector<16x16xf32> to vector<16x16xbf16>
    %18 = arith.truncf %2 : vector<16x192xf32> to vector<16x192xbf16>
    %cst_14 = arith.constant dense<0.000000e+00> : vector<16x192xf32>
    %19 = tpu.matmul %17, %18, %cst_14 {dimension_numbers = #tpu.dot_dimension_numbers<[1], [0], [0], [1], [0, 0, 1, 1], [], []>} : vector<16x16xbf16>, vector<16x192xbf16>, vector<16x192xf32> -> vector<16x192xf32>
    %20 = vector.broadcast %3 : vector<1x192xf32> to vector<16x192xf32>
    %21 = arith.addf %19, %20 : vector<16x192xf32>
    %22 = vector.shape_cast %21 : vector<16x192xf32> to vector<2x8x192xf32>
    %23 = arith.truncf %4 : vector<64x192xf32> to vector<64x192xbf16>
    %cst_15 = arith.constant 0.000000e+00 : f32
    %24 = vector.broadcast %cst_15 : f32 to vector<2x32xf32>
    %cst_16 = arith.constant 0.000000e+00 : f32
    %25 = vector.broadcast %cst_16 : f32 to vector<2x32xf32>
    %26 = tpu.concatenate %24, %25 in 1 : vector<2x32xf32>, vector<2x32xf32> -> vector<2x64xf32>
    %27 = arith.truncf %26 : vector<2x64xf32> to vector<2x64xbf16>
    %cst_17 = arith.constant dense<0.000000e+00> : vector<2x192xf32>
    %28 = tpu.matmul %27, %23, %cst_17 {dimension_numbers = #tpu.dot_dimension_numbers<[1], [0], [0], [1], [0, 0, 1, 1], [], []>} : vector<2x64xbf16>, vector<64x192xbf16>, vector<2x192xf32> -> vector<2x192xf32>
    %29 = vector.broadcast %5 : vector<1x192xf32> to vector<2x192xf32>
    %30 = arith.addf %28, %29 : vector<2x192xf32>
    %31 = vector.extract_strided_slice %22 {offsets = [0, 0, 0], sizes = [2, 1, 96], strides = [1, 1, 1]} : vector<2x8x192xf32> to vector<2x1x96xf32>
    %32 = vector.shape_cast %31 : vector<2x1x96xf32> to vector<2x96xf32>
    %33 = vector.extract_strided_slice %30 {offsets = [0, 0], sizes = [2, 96], strides = [1, 1]} : vector<2x192xf32> to vector<2x96xf32>
    %34 = vector.extract_strided_slice %32 {offsets = [0, 0], sizes = [2, 32], strides = [1, 1]} : vector<2x96xf32> to vector<2x32xf32>
    %35 = vector.extract_strided_slice %33 {offsets = [0, 0], sizes = [2, 32], strides = [1, 1]} : vector<2x96xf32> to vector<2x32xf32>
    %36 = arith.addf %34, %35 : vector<2x32xf32>
    %37 = arith.negf %36 : vector<2x32xf32>
    %38 = math.exp %37 : vector<2x32xf32>
    %cst_18 = arith.constant 1.000000e+00 : f32
    %39 = vector.broadcast %cst_18 : f32 to vector<2x32xf32>
    %40 = arith.addf %39, %38 : vector<2x32xf32>
    %41 = arith.divf %39, %40 : vector<2x32xf32>
    %42 = vector.extract_strided_slice %32 {offsets = [0, 32], sizes = [2, 32], strides = [1, 1]} : vector<2x96xf32> to vector<2x32xf32>
    %43 = vector.extract_strided_slice %33 {offsets = [0, 32], sizes = [2, 32], strides = [1, 1]} : vector<2x96xf32> to vector<2x32xf32>
    %44 = arith.addf %42, %43 : vector<2x32xf32>
    %45 = arith.negf %44 : vector<2x32xf32>
    %46 = math.exp %45 : vector<2x32xf32>
    %cst_19 = arith.constant 1.000000e+00 : f32
    %47 = vector.broadcast %cst_19 : f32 to vector<2x32xf32>
    %48 = arith.addf %47, %46 : vector<2x32xf32>
    %49 = arith.divf %47, %48 : vector<2x32xf32>
    %50 = vector.extract_strided_slice %32 {offsets = [0, 64], sizes = [2, 32], strides = [1, 1]} : vector<2x96xf32> to vector<2x32xf32>
    %51 = vector.extract_strided_slice %33 {offsets = [0, 64], sizes = [2, 32], strides = [1, 1]} : vector<2x96xf32> to vector<2x32xf32>
    %52 = arith.mulf %41, %51 : vector<2x32xf32>
    %53 = arith.addf %50, %52 : vector<2x32xf32>
    %54 = math.tanh %53 : vector<2x32xf32>
    %cst_20 = arith.constant 1.000000e+00 : f32
    %55 = vector.broadcast %cst_20 : f32 to vector<2x32xf32>
    %56 = arith.subf %55, %49 : vector<2x32xf32>
    %57 = arith.mulf %56, %54 : vector<2x32xf32>
    %58 = arith.mulf %49, %24 : vector<2x32xf32>
    %59 = arith.addf %57, %58 : vector<2x32xf32>
    %60 = vector.extract_strided_slice %22 {offsets = [0, 7, 96], sizes = [2, 1, 96], strides = [1, 1, 1]} : vector<2x8x192xf32> to vector<2x1x96xf32>
    %61 = vector.shape_cast %60 : vector<2x1x96xf32> to vector<2x96xf32>
    %62 = vector.extract_strided_slice %30 {offsets = [0, 96], sizes = [2, 96], strides = [1, 1]} : vector<2x192xf32> to vector<2x96xf32>
    %63 = vector.extract_strided_slice %61 {offsets = [0, 0], sizes = [2, 32], strides = [1, 1]} : vector<2x96xf32> to vector<2x32xf32>
    %64 = vector.extract_strided_slice %62 {offsets = [0, 0], sizes = [2, 32], strides = [1, 1]} : vector<2x96xf32> to vector<2x32xf32>
    %65 = arith.addf %63, %64 : vector<2x32xf32>
    %66 = arith.negf %65 : vector<2x32xf32>
    %67 = math.exp %66 : vector<2x32xf32>
    %cst_21 = arith.constant 1.000000e+00 : f32
    %68 = vector.broadcast %cst_21 : f32 to vector<2x32xf32>
    %69 = arith.addf %68, %67 : vector<2x32xf32>
    %70 = arith.divf %68, %69 : vector<2x32xf32>
    %71 = vector.extract_strided_slice %61 {offsets = [0, 32], sizes = [2, 32], strides = [1, 1]} : vector<2x96xf32> to vector<2x32xf32>
    %72 = vector.extract_strided_slice %62 {offsets = [0, 32], sizes = [2, 32], strides = [1, 1]} : vector<2x96xf32> to vector<2x32xf32>
    %73 = arith.addf %71, %72 : vector<2x32xf32>
    %74 = arith.negf %73 : vector<2x32xf32>
    %75 = math.exp %74 : vector<2x32xf32>
    %cst_22 = arith.constant 1.000000e+00 : f32
    %76 = vector.broadcast %cst_22 : f32 to vector<2x32xf32>
    %77 = arith.addf %76, %75 : vector<2x32xf32>
    %78 = arith.divf %76, %77 : vector<2x32xf32>
    %79 = vector.extract_strided_slice %61 {offsets = [0, 64], sizes = [2, 32], strides = [1, 1]} : vector<2x96xf32> to vector<2x32xf32>
    %80 = vector.extract_strided_slice %62 {offsets = [0, 64], sizes = [2, 32], strides = [1, 1]} : vector<2x96xf32> to vector<2x32xf32>
    %81 = arith.mulf %70, %80 : vector<2x32xf32>
    %82 = arith.addf %79, %81 : vector<2x32xf32>
    %83 = math.tanh %82 : vector<2x32xf32>
    %cst_23 = arith.constant 1.000000e+00 : f32
    %84 = vector.broadcast %cst_23 : f32 to vector<2x32xf32>
    %85 = arith.subf %84, %78 : vector<2x32xf32>
    %86 = arith.mulf %85, %83 : vector<2x32xf32>
    %87 = arith.mulf %78, %25 : vector<2x32xf32>
    %88 = arith.addf %86, %87 : vector<2x32xf32>
    %89 = tpu.concatenate %59, %88 in 1 : vector<2x32xf32>, vector<2x32xf32> -> vector<2x64xf32>
    %90 = arith.truncf %89 : vector<2x64xf32> to vector<2x64xbf16>
    %cst_24 = arith.constant dense<0.000000e+00> : vector<2x192xf32>
    %91 = tpu.matmul %90, %23, %cst_24 {dimension_numbers = #tpu.dot_dimension_numbers<[1], [0], [0], [1], [0, 0, 1, 1], [], []>} : vector<2x64xbf16>, vector<64x192xbf16>, vector<2x192xf32> -> vector<2x192xf32>
    %92 = vector.broadcast %5 : vector<1x192xf32> to vector<2x192xf32>
    %93 = arith.addf %91, %92 : vector<2x192xf32>
    %94 = vector.extract_strided_slice %22 {offsets = [0, 1, 0], sizes = [2, 1, 96], strides = [1, 1, 1]} : vector<2x8x192xf32> to vector<2x1x96xf32>
    %95 = vector.shape_cast %94 : vector<2x1x96xf32> to vector<2x96xf32>
    %96 = vector.extract_strided_slice %93 {offsets = [0, 0], sizes = [2, 96], strides = [1, 1]} : vector<2x192xf32> to vector<2x96xf32>
    %97 = vector.extract_strided_slice %95 {offsets = [0, 0], sizes = [2, 32], strides = [1, 1]} : vector<2x96xf32> to vector<2x32xf32>
    %98 = vector.extract_strided_slice %96 {offsets = [0, 0], sizes = [2, 32], strides = [1, 1]} : vector<2x96xf32> to vector<2x32xf32>
    %99 = arith.addf %97, %98 : vector<2x32xf32>
    %100 = arith.negf %99 : vector<2x32xf32>
    %101 = math.exp %100 : vector<2x32xf32>
    %cst_25 = arith.constant 1.000000e+00 : f32
    %102 = vector.broadcast %cst_25 : f32 to vector<2x32xf32>
    %103 = arith.addf %102, %101 : vector<2x32xf32>
    %104 = arith.divf %102, %103 : vector<2x32xf32>
    %105 = vector.extract_strided_slice %95 {offsets = [0, 32], sizes = [2, 32], strides = [1, 1]} : vector<2x96xf32> to vector<2x32xf32>
    %106 = vector.extract_strided_slice %96 {offsets = [0, 32], sizes = [2, 32], strides = [1, 1]} : vector<2x96xf32> to vector<2x32xf32>
    %107 = arith.addf %105, %106 : vector<2x32xf32>
    %108 = arith.negf %107 : vector<2x32xf32>
    %109 = math.exp %108 : vector<2x32xf32>
    %cst_26 = arith.constant 1.000000e+00 : f32
    %110 = vector.broadcast %cst_26 : f32 to vector<2x32xf32>
    %111 = arith.addf %110, %109 : vector<2x32xf32>
    %112 = arith.divf %110, %111 : vector<2x32xf32>
    %113 = vector.extract_strided_slice %95 {offsets = [0, 64], sizes = [2, 32], strides = [1, 1]} : vector<2x96xf32> to vector<2x32xf32>
    %114 = vector.extract_strided_slice %96 {offsets = [0, 64], sizes = [2, 32], strides = [1, 1]} : vector<2x96xf32> to vector<2x32xf32>
    %115 = arith.mulf %104, %114 : vector<2x32xf32>
    %116 = arith.addf %113, %115 : vector<2x32xf32>
    %117 = math.tanh %116 : vector<2x32xf32>
    %cst_27 = arith.constant 1.000000e+00 : f32
    %118 = vector.broadcast %cst_27 : f32 to vector<2x32xf32>
    %119 = arith.subf %118, %112 : vector<2x32xf32>
    %120 = arith.mulf %119, %117 : vector<2x32xf32>
    %121 = arith.mulf %112, %59 : vector<2x32xf32>
    %122 = arith.addf %120, %121 : vector<2x32xf32>
    %123 = vector.extract_strided_slice %22 {offsets = [0, 6, 96], sizes = [2, 1, 96], strides = [1, 1, 1]} : vector<2x8x192xf32> to vector<2x1x96xf32>
    %124 = vector.shape_cast %123 : vector<2x1x96xf32> to vector<2x96xf32>
    %125 = vector.extract_strided_slice %93 {offsets = [0, 96], sizes = [2, 96], strides = [1, 1]} : vector<2x192xf32> to vector<2x96xf32>
    %126 = vector.extract_strided_slice %124 {offsets = [0, 0], sizes = [2, 32], strides = [1, 1]} : vector<2x96xf32> to vector<2x32xf32>
    %127 = vector.extract_strided_slice %125 {offsets = [0, 0], sizes = [2, 32], strides = [1, 1]} : vector<2x96xf32> to vector<2x32xf32>
    %128 = arith.addf %126, %127 : vector<2x32xf32>
    %129 = arith.negf %128 : vector<2x32xf32>
    %130 = math.exp %129 : vector<2x32xf32>
    %cst_28 = arith.constant 1.000000e+00 : f32
    %131 = vector.broadcast %cst_28 : f32 to vector<2x32xf32>
    %132 = arith.addf %131, %130 : vector<2x32xf32>
    %133 = arith.divf %131, %132 : vector<2x32xf32>
    %134 = vector.extract_strided_slice %124 {offsets = [0, 32], sizes = [2, 32], strides = [1, 1]} : vector<2x96xf32> to vector<2x32xf32>
    %135 = vector.extract_strided_slice %125 {offsets = [0, 32], sizes = [2, 32], strides = [1, 1]} : vector<2x96xf32> to vector<2x32xf32>
    %136 = arith.addf %134, %135 : vector<2x32xf32>
    %137 = arith.negf %136 : vector<2x32xf32>
    %138 = math.exp %137 : vector<2x32xf32>
    %cst_29 = arith.constant 1.000000e+00 : f32
    %139 = vector.broadcast %cst_29 : f32 to vector<2x32xf32>
    %140 = arith.addf %139, %138 : vector<2x32xf32>
    %141 = arith.divf %139, %140 : vector<2x32xf32>
    %142 = vector.extract_strided_slice %124 {offsets = [0, 64], sizes = [2, 32], strides = [1, 1]} : vector<2x96xf32> to vector<2x32xf32>
    %143 = vector.extract_strided_slice %125 {offsets = [0, 64], sizes = [2, 32], strides = [1, 1]} : vector<2x96xf32> to vector<2x32xf32>
    %144 = arith.mulf %133, %143 : vector<2x32xf32>
    %145 = arith.addf %142, %144 : vector<2x32xf32>
    %146 = math.tanh %145 : vector<2x32xf32>
    %cst_30 = arith.constant 1.000000e+00 : f32
    %147 = vector.broadcast %cst_30 : f32 to vector<2x32xf32>
    %148 = arith.subf %147, %141 : vector<2x32xf32>
    %149 = arith.mulf %148, %146 : vector<2x32xf32>
    %150 = arith.mulf %141, %88 : vector<2x32xf32>
    %151 = arith.addf %149, %150 : vector<2x32xf32>
    %152 = tpu.concatenate %122, %151 in 1 : vector<2x32xf32>, vector<2x32xf32> -> vector<2x64xf32>
    %153 = arith.truncf %152 : vector<2x64xf32> to vector<2x64xbf16>
    %cst_31 = arith.constant dense<0.000000e+00> : vector<2x192xf32>
    %154 = tpu.matmul %153, %23, %cst_31 {dimension_numbers = #tpu.dot_dimension_numbers<[1], [0], [0], [1], [0, 0, 1, 1], [], []>} : vector<2x64xbf16>, vector<64x192xbf16>, vector<2x192xf32> -> vector<2x192xf32>
    %155 = vector.broadcast %5 : vector<1x192xf32> to vector<2x192xf32>
    %156 = arith.addf %154, %155 : vector<2x192xf32>
    %157 = vector.extract_strided_slice %22 {offsets = [0, 2, 0], sizes = [2, 1, 96], strides = [1, 1, 1]} : vector<2x8x192xf32> to vector<2x1x96xf32>
    %158 = vector.shape_cast %157 : vector<2x1x96xf32> to vector<2x96xf32>
    %159 = vector.extract_strided_slice %156 {offsets = [0, 0], sizes = [2, 96], strides = [1, 1]} : vector<2x192xf32> to vector<2x96xf32>
    %160 = vector.extract_strided_slice %158 {offsets = [0, 0], sizes = [2, 32], strides = [1, 1]} : vector<2x96xf32> to vector<2x32xf32>
    %161 = vector.extract_strided_slice %159 {offsets = [0, 0], sizes = [2, 32], strides = [1, 1]} : vector<2x96xf32> to vector<2x32xf32>
    %162 = arith.addf %160, %161 : vector<2x32xf32>
    %163 = arith.negf %162 : vector<2x32xf32>
    %164 = math.exp %163 : vector<2x32xf32>
    %cst_32 = arith.constant 1.000000e+00 : f32
    %165 = vector.broadcast %cst_32 : f32 to vector<2x32xf32>
    %166 = arith.addf %165, %164 : vector<2x32xf32>
    %167 = arith.divf %165, %166 : vector<2x32xf32>
    %168 = vector.extract_strided_slice %158 {offsets = [0, 32], sizes = [2, 32], strides = [1, 1]} : vector<2x96xf32> to vector<2x32xf32>
    %169 = vector.extract_strided_slice %159 {offsets = [0, 32], sizes = [2, 32], strides = [1, 1]} : vector<2x96xf32> to vector<2x32xf32>
    %170 = arith.addf %168, %169 : vector<2x32xf32>
    %171 = arith.negf %170 : vector<2x32xf32>
    %172 = math.exp %171 : vector<2x32xf32>
    %cst_33 = arith.constant 1.000000e+00 : f32
    %173 = vector.broadcast %cst_33 : f32 to vector<2x32xf32>
    %174 = arith.addf %173, %172 : vector<2x32xf32>
    %175 = arith.divf %173, %174 : vector<2x32xf32>
    %176 = vector.extract_strided_slice %158 {offsets = [0, 64], sizes = [2, 32], strides = [1, 1]} : vector<2x96xf32> to vector<2x32xf32>
    %177 = vector.extract_strided_slice %159 {offsets = [0, 64], sizes = [2, 32], strides = [1, 1]} : vector<2x96xf32> to vector<2x32xf32>
    %178 = arith.mulf %167, %177 : vector<2x32xf32>
    %179 = arith.addf %176, %178 : vector<2x32xf32>
    %180 = math.tanh %179 : vector<2x32xf32>
    %cst_34 = arith.constant 1.000000e+00 : f32
    %181 = vector.broadcast %cst_34 : f32 to vector<2x32xf32>
    %182 = arith.subf %181, %175 : vector<2x32xf32>
    %183 = arith.mulf %182, %180 : vector<2x32xf32>
    %184 = arith.mulf %175, %122 : vector<2x32xf32>
    %185 = arith.addf %183, %184 : vector<2x32xf32>
    %186 = vector.extract_strided_slice %22 {offsets = [0, 5, 96], sizes = [2, 1, 96], strides = [1, 1, 1]} : vector<2x8x192xf32> to vector<2x1x96xf32>
    %187 = vector.shape_cast %186 : vector<2x1x96xf32> to vector<2x96xf32>
    %188 = vector.extract_strided_slice %156 {offsets = [0, 96], sizes = [2, 96], strides = [1, 1]} : vector<2x192xf32> to vector<2x96xf32>
    %189 = vector.extract_strided_slice %187 {offsets = [0, 0], sizes = [2, 32], strides = [1, 1]} : vector<2x96xf32> to vector<2x32xf32>
    %190 = vector.extract_strided_slice %188 {offsets = [0, 0], sizes = [2, 32], strides = [1, 1]} : vector<2x96xf32> to vector<2x32xf32>
    %191 = arith.addf %189, %190 : vector<2x32xf32>
    %192 = arith.negf %191 : vector<2x32xf32>
    %193 = math.exp %192 : vector<2x32xf32>
    %cst_35 = arith.constant 1.000000e+00 : f32
    %194 = vector.broadcast %cst_35 : f32 to vector<2x32xf32>
    %195 = arith.addf %194, %193 : vector<2x32xf32>
    %196 = arith.divf %194, %195 : vector<2x32xf32>
    %197 = vector.extract_strided_slice %187 {offsets = [0, 32], sizes = [2, 32], strides = [1, 1]} : vector<2x96xf32> to vector<2x32xf32>
    %198 = vector.extract_strided_slice %188 {offsets = [0, 32], sizes = [2, 32], strides = [1, 1]} : vector<2x96xf32> to vector<2x32xf32>
    %199 = arith.addf %197, %198 : vector<2x32xf32>
    %200 = arith.negf %199 : vector<2x32xf32>
    %201 = math.exp %200 : vector<2x32xf32>
    %cst_36 = arith.constant 1.000000e+00 : f32
    %202 = vector.broadcast %cst_36 : f32 to vector<2x32xf32>
    %203 = arith.addf %202, %201 : vector<2x32xf32>
    %204 = arith.divf %202, %203 : vector<2x32xf32>
    %205 = vector.extract_strided_slice %187 {offsets = [0, 64], sizes = [2, 32], strides = [1, 1]} : vector<2x96xf32> to vector<2x32xf32>
    %206 = vector.extract_strided_slice %188 {offsets = [0, 64], sizes = [2, 32], strides = [1, 1]} : vector<2x96xf32> to vector<2x32xf32>
    %207 = arith.mulf %196, %206 : vector<2x32xf32>
    %208 = arith.addf %205, %207 : vector<2x32xf32>
    %209 = math.tanh %208 : vector<2x32xf32>
    %cst_37 = arith.constant 1.000000e+00 : f32
    %210 = vector.broadcast %cst_37 : f32 to vector<2x32xf32>
    %211 = arith.subf %210, %204 : vector<2x32xf32>
    %212 = arith.mulf %211, %209 : vector<2x32xf32>
    %213 = arith.mulf %204, %151 : vector<2x32xf32>
    %214 = arith.addf %212, %213 : vector<2x32xf32>
    %215 = tpu.concatenate %185, %214 in 1 : vector<2x32xf32>, vector<2x32xf32> -> vector<2x64xf32>
    %216 = arith.truncf %215 : vector<2x64xf32> to vector<2x64xbf16>
    %cst_38 = arith.constant dense<0.000000e+00> : vector<2x192xf32>
    %217 = tpu.matmul %216, %23, %cst_38 {dimension_numbers = #tpu.dot_dimension_numbers<[1], [0], [0], [1], [0, 0, 1, 1], [], []>} : vector<2x64xbf16>, vector<64x192xbf16>, vector<2x192xf32> -> vector<2x192xf32>
    %218 = vector.broadcast %5 : vector<1x192xf32> to vector<2x192xf32>
    %219 = arith.addf %217, %218 : vector<2x192xf32>
    %220 = vector.extract_strided_slice %22 {offsets = [0, 3, 0], sizes = [2, 1, 96], strides = [1, 1, 1]} : vector<2x8x192xf32> to vector<2x1x96xf32>
    %221 = vector.shape_cast %220 : vector<2x1x96xf32> to vector<2x96xf32>
    %222 = vector.extract_strided_slice %219 {offsets = [0, 0], sizes = [2, 96], strides = [1, 1]} : vector<2x192xf32> to vector<2x96xf32>
    %223 = vector.extract_strided_slice %221 {offsets = [0, 0], sizes = [2, 32], strides = [1, 1]} : vector<2x96xf32> to vector<2x32xf32>
    %224 = vector.extract_strided_slice %222 {offsets = [0, 0], sizes = [2, 32], strides = [1, 1]} : vector<2x96xf32> to vector<2x32xf32>
    %225 = arith.addf %223, %224 : vector<2x32xf32>
    %226 = arith.negf %225 : vector<2x32xf32>
    %227 = math.exp %226 : vector<2x32xf32>
    %cst_39 = arith.constant 1.000000e+00 : f32
    %228 = vector.broadcast %cst_39 : f32 to vector<2x32xf32>
    %229 = arith.addf %228, %227 : vector<2x32xf32>
    %230 = arith.divf %228, %229 : vector<2x32xf32>
    %231 = vector.extract_strided_slice %221 {offsets = [0, 32], sizes = [2, 32], strides = [1, 1]} : vector<2x96xf32> to vector<2x32xf32>
    %232 = vector.extract_strided_slice %222 {offsets = [0, 32], sizes = [2, 32], strides = [1, 1]} : vector<2x96xf32> to vector<2x32xf32>
    %233 = arith.addf %231, %232 : vector<2x32xf32>
    %234 = arith.negf %233 : vector<2x32xf32>
    %235 = math.exp %234 : vector<2x32xf32>
    %cst_40 = arith.constant 1.000000e+00 : f32
    %236 = vector.broadcast %cst_40 : f32 to vector<2x32xf32>
    %237 = arith.addf %236, %235 : vector<2x32xf32>
    %238 = arith.divf %236, %237 : vector<2x32xf32>
    %239 = vector.extract_strided_slice %221 {offsets = [0, 64], sizes = [2, 32], strides = [1, 1]} : vector<2x96xf32> to vector<2x32xf32>
    %240 = vector.extract_strided_slice %222 {offsets = [0, 64], sizes = [2, 32], strides = [1, 1]} : vector<2x96xf32> to vector<2x32xf32>
    %241 = arith.mulf %230, %240 : vector<2x32xf32>
    %242 = arith.addf %239, %241 : vector<2x32xf32>
    %243 = math.tanh %242 : vector<2x32xf32>
    %cst_41 = arith.constant 1.000000e+00 : f32
    %244 = vector.broadcast %cst_41 : f32 to vector<2x32xf32>
    %245 = arith.subf %244, %238 : vector<2x32xf32>
    %246 = arith.mulf %245, %243 : vector<2x32xf32>
    %247 = arith.mulf %238, %185 : vector<2x32xf32>
    %248 = arith.addf %246, %247 : vector<2x32xf32>
    %249 = vector.extract_strided_slice %22 {offsets = [0, 4, 96], sizes = [2, 1, 96], strides = [1, 1, 1]} : vector<2x8x192xf32> to vector<2x1x96xf32>
    %250 = vector.shape_cast %249 : vector<2x1x96xf32> to vector<2x96xf32>
    %251 = vector.extract_strided_slice %219 {offsets = [0, 96], sizes = [2, 96], strides = [1, 1]} : vector<2x192xf32> to vector<2x96xf32>
    %252 = vector.extract_strided_slice %250 {offsets = [0, 0], sizes = [2, 32], strides = [1, 1]} : vector<2x96xf32> to vector<2x32xf32>
    %253 = vector.extract_strided_slice %251 {offsets = [0, 0], sizes = [2, 32], strides = [1, 1]} : vector<2x96xf32> to vector<2x32xf32>
    %254 = arith.addf %252, %253 : vector<2x32xf32>
    %255 = arith.negf %254 : vector<2x32xf32>
    %256 = math.exp %255 : vector<2x32xf32>
    %cst_42 = arith.constant 1.000000e+00 : f32
    %257 = vector.broadcast %cst_42 : f32 to vector<2x32xf32>
    %258 = arith.addf %257, %256 : vector<2x32xf32>
    %259 = arith.divf %257, %258 : vector<2x32xf32>
    %260 = vector.extract_strided_slice %250 {offsets = [0, 32], sizes = [2, 32], strides = [1, 1]} : vector<2x96xf32> to vector<2x32xf32>
    %261 = vector.extract_strided_slice %251 {offsets = [0, 32], sizes = [2, 32], strides = [1, 1]} : vector<2x96xf32> to vector<2x32xf32>
    %262 = arith.addf %260, %261 : vector<2x32xf32>
    %263 = arith.negf %262 : vector<2x32xf32>
    %264 = math.exp %263 : vector<2x32xf32>
    %cst_43 = arith.constant 1.000000e+00 : f32
    %265 = vector.broadcast %cst_43 : f32 to vector<2x32xf32>
    %266 = arith.addf %265, %264 : vector<2x32xf32>
    %267 = arith.divf %265, %266 : vector<2x32xf32>
    %268 = vector.extract_strided_slice %250 {offsets = [0, 64], sizes = [2, 32], strides = [1, 1]} : vector<2x96xf32> to vector<2x32xf32>
    %269 = vector.extract_strided_slice %251 {offsets = [0, 64], sizes = [2, 32], strides = [1, 1]} : vector<2x96xf32> to vector<2x32xf32>
    %270 = arith.mulf %259, %269 : vector<2x32xf32>
    %271 = arith.addf %268, %270 : vector<2x32xf32>
    %272 = math.tanh %271 : vector<2x32xf32>
    %cst_44 = arith.constant 1.000000e+00 : f32
    %273 = vector.broadcast %cst_44 : f32 to vector<2x32xf32>
    %274 = arith.subf %273, %267 : vector<2x32xf32>
    %275 = arith.mulf %274, %272 : vector<2x32xf32>
    %276 = arith.mulf %267, %214 : vector<2x32xf32>
    %277 = arith.addf %275, %276 : vector<2x32xf32>
    %278 = tpu.concatenate %248, %277 in 1 : vector<2x32xf32>, vector<2x32xf32> -> vector<2x64xf32>
    %279 = arith.truncf %278 : vector<2x64xf32> to vector<2x64xbf16>
    %cst_45 = arith.constant dense<0.000000e+00> : vector<2x192xf32>
    %280 = tpu.matmul %279, %23, %cst_45 {dimension_numbers = #tpu.dot_dimension_numbers<[1], [0], [0], [1], [0, 0, 1, 1], [], []>} : vector<2x64xbf16>, vector<64x192xbf16>, vector<2x192xf32> -> vector<2x192xf32>
    %281 = vector.broadcast %5 : vector<1x192xf32> to vector<2x192xf32>
    %282 = arith.addf %280, %281 : vector<2x192xf32>
    %283 = vector.extract_strided_slice %22 {offsets = [0, 4, 0], sizes = [2, 1, 96], strides = [1, 1, 1]} : vector<2x8x192xf32> to vector<2x1x96xf32>
    %284 = vector.shape_cast %283 : vector<2x1x96xf32> to vector<2x96xf32>
    %285 = vector.extract_strided_slice %282 {offsets = [0, 0], sizes = [2, 96], strides = [1, 1]} : vector<2x192xf32> to vector<2x96xf32>
    %286 = vector.extract_strided_slice %284 {offsets = [0, 0], sizes = [2, 32], strides = [1, 1]} : vector<2x96xf32> to vector<2x32xf32>
    %287 = vector.extract_strided_slice %285 {offsets = [0, 0], sizes = [2, 32], strides = [1, 1]} : vector<2x96xf32> to vector<2x32xf32>
    %288 = arith.addf %286, %287 : vector<2x32xf32>
    %289 = arith.negf %288 : vector<2x32xf32>
    %290 = math.exp %289 : vector<2x32xf32>
    %cst_46 = arith.constant 1.000000e+00 : f32
    %291 = vector.broadcast %cst_46 : f32 to vector<2x32xf32>
    %292 = arith.addf %291, %290 : vector<2x32xf32>
    %293 = arith.divf %291, %292 : vector<2x32xf32>
    %294 = vector.extract_strided_slice %284 {offsets = [0, 32], sizes = [2, 32], strides = [1, 1]} : vector<2x96xf32> to vector<2x32xf32>
    %295 = vector.extract_strided_slice %285 {offsets = [0, 32], sizes = [2, 32], strides = [1, 1]} : vector<2x96xf32> to vector<2x32xf32>
    %296 = arith.addf %294, %295 : vector<2x32xf32>
    %297 = arith.negf %296 : vector<2x32xf32>
    %298 = math.exp %297 : vector<2x32xf32>
    %cst_47 = arith.constant 1.000000e+00 : f32
    %299 = vector.broadcast %cst_47 : f32 to vector<2x32xf32>
    %300 = arith.addf %299, %298 : vector<2x32xf32>
    %301 = arith.divf %299, %300 : vector<2x32xf32>
    %302 = vector.extract_strided_slice %284 {offsets = [0, 64], sizes = [2, 32], strides = [1, 1]} : vector<2x96xf32> to vector<2x32xf32>
    %303 = vector.extract_strided_slice %285 {offsets = [0, 64], sizes = [2, 32], strides = [1, 1]} : vector<2x96xf32> to vector<2x32xf32>
    %304 = arith.mulf %293, %303 : vector<2x32xf32>
    %305 = arith.addf %302, %304 : vector<2x32xf32>
    %306 = math.tanh %305 : vector<2x32xf32>
    %cst_48 = arith.constant 1.000000e+00 : f32
    %307 = vector.broadcast %cst_48 : f32 to vector<2x32xf32>
    %308 = arith.subf %307, %301 : vector<2x32xf32>
    %309 = arith.mulf %308, %306 : vector<2x32xf32>
    %310 = arith.mulf %301, %248 : vector<2x32xf32>
    %311 = arith.addf %309, %310 : vector<2x32xf32>
    %312 = vector.extract_strided_slice %22 {offsets = [0, 3, 96], sizes = [2, 1, 96], strides = [1, 1, 1]} : vector<2x8x192xf32> to vector<2x1x96xf32>
    %313 = vector.shape_cast %312 : vector<2x1x96xf32> to vector<2x96xf32>
    %314 = vector.extract_strided_slice %282 {offsets = [0, 96], sizes = [2, 96], strides = [1, 1]} : vector<2x192xf32> to vector<2x96xf32>
    %315 = vector.extract_strided_slice %313 {offsets = [0, 0], sizes = [2, 32], strides = [1, 1]} : vector<2x96xf32> to vector<2x32xf32>
    %316 = vector.extract_strided_slice %314 {offsets = [0, 0], sizes = [2, 32], strides = [1, 1]} : vector<2x96xf32> to vector<2x32xf32>
    %317 = arith.addf %315, %316 : vector<2x32xf32>
    %318 = arith.negf %317 : vector<2x32xf32>
    %319 = math.exp %318 : vector<2x32xf32>
    %cst_49 = arith.constant 1.000000e+00 : f32
    %320 = vector.broadcast %cst_49 : f32 to vector<2x32xf32>
    %321 = arith.addf %320, %319 : vector<2x32xf32>
    %322 = arith.divf %320, %321 : vector<2x32xf32>
    %323 = vector.extract_strided_slice %313 {offsets = [0, 32], sizes = [2, 32], strides = [1, 1]} : vector<2x96xf32> to vector<2x32xf32>
    %324 = vector.extract_strided_slice %314 {offsets = [0, 32], sizes = [2, 32], strides = [1, 1]} : vector<2x96xf32> to vector<2x32xf32>
    %325 = arith.addf %323, %324 : vector<2x32xf32>
    %326 = arith.negf %325 : vector<2x32xf32>
    %327 = math.exp %326 : vector<2x32xf32>
    %cst_50 = arith.constant 1.000000e+00 : f32
    %328 = vector.broadcast %cst_50 : f32 to vector<2x32xf32>
    %329 = arith.addf %328, %327 : vector<2x32xf32>
    %330 = arith.divf %328, %329 : vector<2x32xf32>
    %331 = vector.extract_strided_slice %313 {offsets = [0, 64], sizes = [2, 32], strides = [1, 1]} : vector<2x96xf32> to vector<2x32xf32>
    %332 = vector.extract_strided_slice %314 {offsets = [0, 64], sizes = [2, 32], strides = [1, 1]} : vector<2x96xf32> to vector<2x32xf32>
    %333 = arith.mulf %322, %332 : vector<2x32xf32>
    %334 = arith.addf %331, %333 : vector<2x32xf32>
    %335 = math.tanh %334 : vector<2x32xf32>
    %cst_51 = arith.constant 1.000000e+00 : f32
    %336 = vector.broadcast %cst_51 : f32 to vector<2x32xf32>
    %337 = arith.subf %336, %330 : vector<2x32xf32>
    %338 = arith.mulf %337, %335 : vector<2x32xf32>
    %339 = arith.mulf %330, %277 : vector<2x32xf32>
    %340 = arith.addf %338, %339 : vector<2x32xf32>
    %341 = tpu.concatenate %311, %340 in 1 : vector<2x32xf32>, vector<2x32xf32> -> vector<2x64xf32>
    %342 = arith.truncf %341 : vector<2x64xf32> to vector<2x64xbf16>
    %cst_52 = arith.constant dense<0.000000e+00> : vector<2x192xf32>
    %343 = tpu.matmul %342, %23, %cst_52 {dimension_numbers = #tpu.dot_dimension_numbers<[1], [0], [0], [1], [0, 0, 1, 1], [], []>} : vector<2x64xbf16>, vector<64x192xbf16>, vector<2x192xf32> -> vector<2x192xf32>
    %344 = vector.broadcast %5 : vector<1x192xf32> to vector<2x192xf32>
    %345 = arith.addf %343, %344 : vector<2x192xf32>
    %346 = vector.extract_strided_slice %22 {offsets = [0, 5, 0], sizes = [2, 1, 96], strides = [1, 1, 1]} : vector<2x8x192xf32> to vector<2x1x96xf32>
    %347 = vector.shape_cast %346 : vector<2x1x96xf32> to vector<2x96xf32>
    %348 = vector.extract_strided_slice %345 {offsets = [0, 0], sizes = [2, 96], strides = [1, 1]} : vector<2x192xf32> to vector<2x96xf32>
    %349 = vector.extract_strided_slice %347 {offsets = [0, 0], sizes = [2, 32], strides = [1, 1]} : vector<2x96xf32> to vector<2x32xf32>
    %350 = vector.extract_strided_slice %348 {offsets = [0, 0], sizes = [2, 32], strides = [1, 1]} : vector<2x96xf32> to vector<2x32xf32>
    %351 = arith.addf %349, %350 : vector<2x32xf32>
    %352 = arith.negf %351 : vector<2x32xf32>
    %353 = math.exp %352 : vector<2x32xf32>
    %cst_53 = arith.constant 1.000000e+00 : f32
    %354 = vector.broadcast %cst_53 : f32 to vector<2x32xf32>
    %355 = arith.addf %354, %353 : vector<2x32xf32>
    %356 = arith.divf %354, %355 : vector<2x32xf32>
    %357 = vector.extract_strided_slice %347 {offsets = [0, 32], sizes = [2, 32], strides = [1, 1]} : vector<2x96xf32> to vector<2x32xf32>
    %358 = vector.extract_strided_slice %348 {offsets = [0, 32], sizes = [2, 32], strides = [1, 1]} : vector<2x96xf32> to vector<2x32xf32>
    %359 = arith.addf %357, %358 : vector<2x32xf32>
    %360 = arith.negf %359 : vector<2x32xf32>
    %361 = math.exp %360 : vector<2x32xf32>
    %cst_54 = arith.constant 1.000000e+00 : f32
    %362 = vector.broadcast %cst_54 : f32 to vector<2x32xf32>
    %363 = arith.addf %362, %361 : vector<2x32xf32>
    %364 = arith.divf %362, %363 : vector<2x32xf32>
    %365 = vector.extract_strided_slice %347 {offsets = [0, 64], sizes = [2, 32], strides = [1, 1]} : vector<2x96xf32> to vector<2x32xf32>
    %366 = vector.extract_strided_slice %348 {offsets = [0, 64], sizes = [2, 32], strides = [1, 1]} : vector<2x96xf32> to vector<2x32xf32>
    %367 = arith.mulf %356, %366 : vector<2x32xf32>
    %368 = arith.addf %365, %367 : vector<2x32xf32>
    %369 = math.tanh %368 : vector<2x32xf32>
    %cst_55 = arith.constant 1.000000e+00 : f32
    %370 = vector.broadcast %cst_55 : f32 to vector<2x32xf32>
    %371 = arith.subf %370, %364 : vector<2x32xf32>
    %372 = arith.mulf %371, %369 : vector<2x32xf32>
    %373 = arith.mulf %364, %311 : vector<2x32xf32>
    %374 = arith.addf %372, %373 : vector<2x32xf32>
    %375 = vector.extract_strided_slice %22 {offsets = [0, 2, 96], sizes = [2, 1, 96], strides = [1, 1, 1]} : vector<2x8x192xf32> to vector<2x1x96xf32>
    %376 = vector.shape_cast %375 : vector<2x1x96xf32> to vector<2x96xf32>
    %377 = vector.extract_strided_slice %345 {offsets = [0, 96], sizes = [2, 96], strides = [1, 1]} : vector<2x192xf32> to vector<2x96xf32>
    %378 = vector.extract_strided_slice %376 {offsets = [0, 0], sizes = [2, 32], strides = [1, 1]} : vector<2x96xf32> to vector<2x32xf32>
    %379 = vector.extract_strided_slice %377 {offsets = [0, 0], sizes = [2, 32], strides = [1, 1]} : vector<2x96xf32> to vector<2x32xf32>
    %380 = arith.addf %378, %379 : vector<2x32xf32>
    %381 = arith.negf %380 : vector<2x32xf32>
    %382 = math.exp %381 : vector<2x32xf32>
    %cst_56 = arith.constant 1.000000e+00 : f32
    %383 = vector.broadcast %cst_56 : f32 to vector<2x32xf32>
    %384 = arith.addf %383, %382 : vector<2x32xf32>
    %385 = arith.divf %383, %384 : vector<2x32xf32>
    %386 = vector.extract_strided_slice %376 {offsets = [0, 32], sizes = [2, 32], strides = [1, 1]} : vector<2x96xf32> to vector<2x32xf32>
    %387 = vector.extract_strided_slice %377 {offsets = [0, 32], sizes = [2, 32], strides = [1, 1]} : vector<2x96xf32> to vector<2x32xf32>
    %388 = arith.addf %386, %387 : vector<2x32xf32>
    %389 = arith.negf %388 : vector<2x32xf32>
    %390 = math.exp %389 : vector<2x32xf32>
    %cst_57 = arith.constant 1.000000e+00 : f32
    %391 = vector.broadcast %cst_57 : f32 to vector<2x32xf32>
    %392 = arith.addf %391, %390 : vector<2x32xf32>
    %393 = arith.divf %391, %392 : vector<2x32xf32>
    %394 = vector.extract_strided_slice %376 {offsets = [0, 64], sizes = [2, 32], strides = [1, 1]} : vector<2x96xf32> to vector<2x32xf32>
    %395 = vector.extract_strided_slice %377 {offsets = [0, 64], sizes = [2, 32], strides = [1, 1]} : vector<2x96xf32> to vector<2x32xf32>
    %396 = arith.mulf %385, %395 : vector<2x32xf32>
    %397 = arith.addf %394, %396 : vector<2x32xf32>
    %398 = math.tanh %397 : vector<2x32xf32>
    %cst_58 = arith.constant 1.000000e+00 : f32
    %399 = vector.broadcast %cst_58 : f32 to vector<2x32xf32>
    %400 = arith.subf %399, %393 : vector<2x32xf32>
    %401 = arith.mulf %400, %398 : vector<2x32xf32>
    %402 = arith.mulf %393, %340 : vector<2x32xf32>
    %403 = arith.addf %401, %402 : vector<2x32xf32>
    %404 = tpu.concatenate %374, %403 in 1 : vector<2x32xf32>, vector<2x32xf32> -> vector<2x64xf32>
    %405 = arith.truncf %404 : vector<2x64xf32> to vector<2x64xbf16>
    %cst_59 = arith.constant dense<0.000000e+00> : vector<2x192xf32>
    %406 = tpu.matmul %405, %23, %cst_59 {dimension_numbers = #tpu.dot_dimension_numbers<[1], [0], [0], [1], [0, 0, 1, 1], [], []>} : vector<2x64xbf16>, vector<64x192xbf16>, vector<2x192xf32> -> vector<2x192xf32>
    %407 = vector.broadcast %5 : vector<1x192xf32> to vector<2x192xf32>
    %408 = arith.addf %406, %407 : vector<2x192xf32>
    %409 = vector.extract_strided_slice %22 {offsets = [0, 6, 0], sizes = [2, 1, 96], strides = [1, 1, 1]} : vector<2x8x192xf32> to vector<2x1x96xf32>
    %410 = vector.shape_cast %409 : vector<2x1x96xf32> to vector<2x96xf32>
    %411 = vector.extract_strided_slice %408 {offsets = [0, 0], sizes = [2, 96], strides = [1, 1]} : vector<2x192xf32> to vector<2x96xf32>
    %412 = vector.extract_strided_slice %410 {offsets = [0, 0], sizes = [2, 32], strides = [1, 1]} : vector<2x96xf32> to vector<2x32xf32>
    %413 = vector.extract_strided_slice %411 {offsets = [0, 0], sizes = [2, 32], strides = [1, 1]} : vector<2x96xf32> to vector<2x32xf32>
    %414 = arith.addf %412, %413 : vector<2x32xf32>
    %415 = arith.negf %414 : vector<2x32xf32>
    %416 = math.exp %415 : vector<2x32xf32>
    %cst_60 = arith.constant 1.000000e+00 : f32
    %417 = vector.broadcast %cst_60 : f32 to vector<2x32xf32>
    %418 = arith.addf %417, %416 : vector<2x32xf32>
    %419 = arith.divf %417, %418 : vector<2x32xf32>
    %420 = vector.extract_strided_slice %410 {offsets = [0, 32], sizes = [2, 32], strides = [1, 1]} : vector<2x96xf32> to vector<2x32xf32>
    %421 = vector.extract_strided_slice %411 {offsets = [0, 32], sizes = [2, 32], strides = [1, 1]} : vector<2x96xf32> to vector<2x32xf32>
    %422 = arith.addf %420, %421 : vector<2x32xf32>
    %423 = arith.negf %422 : vector<2x32xf32>
    %424 = math.exp %423 : vector<2x32xf32>
    %cst_61 = arith.constant 1.000000e+00 : f32
    %425 = vector.broadcast %cst_61 : f32 to vector<2x32xf32>
    %426 = arith.addf %425, %424 : vector<2x32xf32>
    %427 = arith.divf %425, %426 : vector<2x32xf32>
    %428 = vector.extract_strided_slice %410 {offsets = [0, 64], sizes = [2, 32], strides = [1, 1]} : vector<2x96xf32> to vector<2x32xf32>
    %429 = vector.extract_strided_slice %411 {offsets = [0, 64], sizes = [2, 32], strides = [1, 1]} : vector<2x96xf32> to vector<2x32xf32>
    %430 = arith.mulf %419, %429 : vector<2x32xf32>
    %431 = arith.addf %428, %430 : vector<2x32xf32>
    %432 = math.tanh %431 : vector<2x32xf32>
    %cst_62 = arith.constant 1.000000e+00 : f32
    %433 = vector.broadcast %cst_62 : f32 to vector<2x32xf32>
    %434 = arith.subf %433, %427 : vector<2x32xf32>
    %435 = arith.mulf %434, %432 : vector<2x32xf32>
    %436 = arith.mulf %427, %374 : vector<2x32xf32>
    %437 = arith.addf %435, %436 : vector<2x32xf32>
    %438 = vector.extract_strided_slice %22 {offsets = [0, 1, 96], sizes = [2, 1, 96], strides = [1, 1, 1]} : vector<2x8x192xf32> to vector<2x1x96xf32>
    %439 = vector.shape_cast %438 : vector<2x1x96xf32> to vector<2x96xf32>
    %440 = vector.extract_strided_slice %408 {offsets = [0, 96], sizes = [2, 96], strides = [1, 1]} : vector<2x192xf32> to vector<2x96xf32>
    %441 = vector.extract_strided_slice %439 {offsets = [0, 0], sizes = [2, 32], strides = [1, 1]} : vector<2x96xf32> to vector<2x32xf32>
    %442 = vector.extract_strided_slice %440 {offsets = [0, 0], sizes = [2, 32], strides = [1, 1]} : vector<2x96xf32> to vector<2x32xf32>
    %443 = arith.addf %441, %442 : vector<2x32xf32>
    %444 = arith.negf %443 : vector<2x32xf32>
    %445 = math.exp %444 : vector<2x32xf32>
    %cst_63 = arith.constant 1.000000e+00 : f32
    %446 = vector.broadcast %cst_63 : f32 to vector<2x32xf32>
    %447 = arith.addf %446, %445 : vector<2x32xf32>
    %448 = arith.divf %446, %447 : vector<2x32xf32>
    %449 = vector.extract_strided_slice %439 {offsets = [0, 32], sizes = [2, 32], strides = [1, 1]} : vector<2x96xf32> to vector<2x32xf32>
    %450 = vector.extract_strided_slice %440 {offsets = [0, 32], sizes = [2, 32], strides = [1, 1]} : vector<2x96xf32> to vector<2x32xf32>
    %451 = arith.addf %449, %450 : vector<2x32xf32>
    %452 = arith.negf %451 : vector<2x32xf32>
    %453 = math.exp %452 : vector<2x32xf32>
    %cst_64 = arith.constant 1.000000e+00 : f32
    %454 = vector.broadcast %cst_64 : f32 to vector<2x32xf32>
    %455 = arith.addf %454, %453 : vector<2x32xf32>
    %456 = arith.divf %454, %455 : vector<2x32xf32>
    %457 = vector.extract_strided_slice %439 {offsets = [0, 64], sizes = [2, 32], strides = [1, 1]} : vector<2x96xf32> to vector<2x32xf32>
    %458 = vector.extract_strided_slice %440 {offsets = [0, 64], sizes = [2, 32], strides = [1, 1]} : vector<2x96xf32> to vector<2x32xf32>
    %459 = arith.mulf %448, %458 : vector<2x32xf32>
    %460 = arith.addf %457, %459 : vector<2x32xf32>
    %461 = math.tanh %460 : vector<2x32xf32>
    %cst_65 = arith.constant 1.000000e+00 : f32
    %462 = vector.broadcast %cst_65 : f32 to vector<2x32xf32>
    %463 = arith.subf %462, %456 : vector<2x32xf32>
    %464 = arith.mulf %463, %461 : vector<2x32xf32>
    %465 = arith.mulf %456, %403 : vector<2x32xf32>
    %466 = arith.addf %464, %465 : vector<2x32xf32>
    %467 = tpu.concatenate %437, %466 in 1 : vector<2x32xf32>, vector<2x32xf32> -> vector<2x64xf32>
    %468 = arith.truncf %467 : vector<2x64xf32> to vector<2x64xbf16>
    %cst_66 = arith.constant dense<0.000000e+00> : vector<2x192xf32>
    %469 = tpu.matmul %468, %23, %cst_66 {dimension_numbers = #tpu.dot_dimension_numbers<[1], [0], [0], [1], [0, 0, 1, 1], [], []>} : vector<2x64xbf16>, vector<64x192xbf16>, vector<2x192xf32> -> vector<2x192xf32>
    %470 = vector.broadcast %5 : vector<1x192xf32> to vector<2x192xf32>
    %471 = arith.addf %469, %470 : vector<2x192xf32>
    %472 = vector.extract_strided_slice %22 {offsets = [0, 7, 0], sizes = [2, 1, 96], strides = [1, 1, 1]} : vector<2x8x192xf32> to vector<2x1x96xf32>
    %473 = vector.shape_cast %472 : vector<2x1x96xf32> to vector<2x96xf32>
    %474 = vector.extract_strided_slice %471 {offsets = [0, 0], sizes = [2, 96], strides = [1, 1]} : vector<2x192xf32> to vector<2x96xf32>
    %475 = vector.extract_strided_slice %473 {offsets = [0, 0], sizes = [2, 32], strides = [1, 1]} : vector<2x96xf32> to vector<2x32xf32>
    %476 = vector.extract_strided_slice %474 {offsets = [0, 0], sizes = [2, 32], strides = [1, 1]} : vector<2x96xf32> to vector<2x32xf32>
    %477 = arith.addf %475, %476 : vector<2x32xf32>
    %478 = arith.negf %477 : vector<2x32xf32>
    %479 = math.exp %478 : vector<2x32xf32>
    %cst_67 = arith.constant 1.000000e+00 : f32
    %480 = vector.broadcast %cst_67 : f32 to vector<2x32xf32>
    %481 = arith.addf %480, %479 : vector<2x32xf32>
    %482 = arith.divf %480, %481 : vector<2x32xf32>
    %483 = vector.extract_strided_slice %473 {offsets = [0, 32], sizes = [2, 32], strides = [1, 1]} : vector<2x96xf32> to vector<2x32xf32>
    %484 = vector.extract_strided_slice %474 {offsets = [0, 32], sizes = [2, 32], strides = [1, 1]} : vector<2x96xf32> to vector<2x32xf32>
    %485 = arith.addf %483, %484 : vector<2x32xf32>
    %486 = arith.negf %485 : vector<2x32xf32>
    %487 = math.exp %486 : vector<2x32xf32>
    %cst_68 = arith.constant 1.000000e+00 : f32
    %488 = vector.broadcast %cst_68 : f32 to vector<2x32xf32>
    %489 = arith.addf %488, %487 : vector<2x32xf32>
    %490 = arith.divf %488, %489 : vector<2x32xf32>
    %491 = vector.extract_strided_slice %473 {offsets = [0, 64], sizes = [2, 32], strides = [1, 1]} : vector<2x96xf32> to vector<2x32xf32>
    %492 = vector.extract_strided_slice %474 {offsets = [0, 64], sizes = [2, 32], strides = [1, 1]} : vector<2x96xf32> to vector<2x32xf32>
    %493 = arith.mulf %482, %492 : vector<2x32xf32>
    %494 = arith.addf %491, %493 : vector<2x32xf32>
    %495 = math.tanh %494 : vector<2x32xf32>
    %cst_69 = arith.constant 1.000000e+00 : f32
    %496 = vector.broadcast %cst_69 : f32 to vector<2x32xf32>
    %497 = arith.subf %496, %490 : vector<2x32xf32>
    %498 = arith.mulf %497, %495 : vector<2x32xf32>
    %499 = arith.mulf %490, %437 : vector<2x32xf32>
    %500 = arith.addf %498, %499 : vector<2x32xf32>
    %501 = vector.extract_strided_slice %22 {offsets = [0, 0, 96], sizes = [2, 1, 96], strides = [1, 1, 1]} : vector<2x8x192xf32> to vector<2x1x96xf32>
    %502 = vector.shape_cast %501 : vector<2x1x96xf32> to vector<2x96xf32>
    %503 = vector.extract_strided_slice %471 {offsets = [0, 96], sizes = [2, 96], strides = [1, 1]} : vector<2x192xf32> to vector<2x96xf32>
    %504 = vector.extract_strided_slice %502 {offsets = [0, 0], sizes = [2, 32], strides = [1, 1]} : vector<2x96xf32> to vector<2x32xf32>
    %505 = vector.extract_strided_slice %503 {offsets = [0, 0], sizes = [2, 32], strides = [1, 1]} : vector<2x96xf32> to vector<2x32xf32>
    %506 = arith.addf %504, %505 : vector<2x32xf32>
    %507 = arith.negf %506 : vector<2x32xf32>
    %508 = math.exp %507 : vector<2x32xf32>
    %cst_70 = arith.constant 1.000000e+00 : f32
    %509 = vector.broadcast %cst_70 : f32 to vector<2x32xf32>
    %510 = arith.addf %509, %508 : vector<2x32xf32>
    %511 = arith.divf %509, %510 : vector<2x32xf32>
    %512 = vector.extract_strided_slice %502 {offsets = [0, 32], sizes = [2, 32], strides = [1, 1]} : vector<2x96xf32> to vector<2x32xf32>
    %513 = vector.extract_strided_slice %503 {offsets = [0, 32], sizes = [2, 32], strides = [1, 1]} : vector<2x96xf32> to vector<2x32xf32>
    %514 = arith.addf %512, %513 : vector<2x32xf32>
    %515 = arith.negf %514 : vector<2x32xf32>
    %516 = math.exp %515 : vector<2x32xf32>
    %cst_71 = arith.constant 1.000000e+00 : f32
    %517 = vector.broadcast %cst_71 : f32 to vector<2x32xf32>
    %518 = arith.addf %517, %516 : vector<2x32xf32>
    %519 = arith.divf %517, %518 : vector<2x32xf32>
    %520 = vector.extract_strided_slice %502 {offsets = [0, 64], sizes = [2, 32], strides = [1, 1]} : vector<2x96xf32> to vector<2x32xf32>
    %521 = vector.extract_strided_slice %503 {offsets = [0, 64], sizes = [2, 32], strides = [1, 1]} : vector<2x96xf32> to vector<2x32xf32>
    %522 = arith.mulf %511, %521 : vector<2x32xf32>
    %523 = arith.addf %520, %522 : vector<2x32xf32>
    %524 = math.tanh %523 : vector<2x32xf32>
    %cst_72 = arith.constant 1.000000e+00 : f32
    %525 = vector.broadcast %cst_72 : f32 to vector<2x32xf32>
    %526 = arith.subf %525, %519 : vector<2x32xf32>
    %527 = arith.mulf %526, %524 : vector<2x32xf32>
    %528 = arith.mulf %519, %466 : vector<2x32xf32>
    %529 = arith.addf %527, %528 : vector<2x32xf32>
    %530 = tpu.concatenate %59, %529 in 1 : vector<2x32xf32>, vector<2x32xf32> -> vector<2x64xf32>
    %531 = tpu.concatenate %122, %466 in 1 : vector<2x32xf32>, vector<2x32xf32> -> vector<2x64xf32>
    %532 = tpu.concatenate %185, %403 in 1 : vector<2x32xf32>, vector<2x32xf32> -> vector<2x64xf32>
    %533 = tpu.concatenate %248, %340 in 1 : vector<2x32xf32>, vector<2x32xf32> -> vector<2x64xf32>
    %534 = tpu.concatenate %311, %277 in 1 : vector<2x32xf32>, vector<2x32xf32> -> vector<2x64xf32>
    %535 = tpu.concatenate %374, %214 in 1 : vector<2x32xf32>, vector<2x32xf32> -> vector<2x64xf32>
    %536 = tpu.concatenate %437, %151 in 1 : vector<2x32xf32>, vector<2x32xf32> -> vector<2x64xf32>
    %537 = tpu.concatenate %500, %88 in 1 : vector<2x32xf32>, vector<2x32xf32> -> vector<2x64xf32>
    %538 = tpu.concatenate %530, %531, %532, %533, %534, %535, %536, %537 in 0 : vector<2x64xf32>, vector<2x64xf32>, vector<2x64xf32>, vector<2x64xf32>, vector<2x64xf32>, vector<2x64xf32>, vector<2x64xf32>, vector<2x64xf32> -> vector<16x64xf32>
    %cst_73 = arith.constant dense<0.000000e+00> : vector<16x7xf32>
    %539 = tpu.matmul %538, %6, %cst_73 {dimension_numbers = #tpu.dot_dimension_numbers<[1], [0], [0], [1], [0, 0, 1, 1], [], []>} : vector<16x64xf32>, vector<64x7xf32>, vector<16x7xf32> -> vector<16x7xf32>
    %540 = vector.broadcast %7 : vector<1x7xf32> to vector<16x7xf32>
    %541 = arith.addf %539, %540 : vector<16x7xf32>
    %542 = vector.extract_strided_slice %541 {offsets = [0, 0], sizes = [2, 7], strides = [1, 1]} : vector<16x7xf32> to vector<2x7xf32>
    %543 = vector.extract_strided_slice %541 {offsets = [2, 0], sizes = [2, 7], strides = [1, 1]} : vector<16x7xf32> to vector<2x7xf32>
    %544 = vector.extract_strided_slice %541 {offsets = [4, 0], sizes = [2, 7], strides = [1, 1]} : vector<16x7xf32> to vector<2x7xf32>
    %545 = vector.extract_strided_slice %541 {offsets = [6, 0], sizes = [2, 7], strides = [1, 1]} : vector<16x7xf32> to vector<2x7xf32>
    %546 = vector.extract_strided_slice %541 {offsets = [8, 0], sizes = [2, 7], strides = [1, 1]} : vector<16x7xf32> to vector<2x7xf32>
    %547 = vector.extract_strided_slice %541 {offsets = [10, 0], sizes = [2, 7], strides = [1, 1]} : vector<16x7xf32> to vector<2x7xf32>
    %548 = vector.extract_strided_slice %541 {offsets = [12, 0], sizes = [2, 7], strides = [1, 1]} : vector<16x7xf32> to vector<2x7xf32>
    %549 = vector.extract_strided_slice %541 {offsets = [14, 0], sizes = [2, 7], strides = [1, 1]} : vector<16x7xf32> to vector<2x7xf32>
    %550 = vector.broadcast %8 : vector<1x7xf32> to vector<2x7xf32>
    %551 = arith.addf %550, %542 : vector<2x7xf32>
    %552 = tpu.iota {dimensions = array<i32: 1>} : vector<2x7x7xi32>
    %553 = vector.shape_cast %551 : vector<2x7xf32> to vector<2x7x1xf32>
    %554 = vector.shape_cast %10 : vector<7x7xf32> to vector<1x7x7xf32>
    %555 = vector.broadcast %553 : vector<2x7x1xf32> to vector<2x7x7xf32>
    %556 = vector.broadcast %554 : vector<1x7x7xf32> to vector<2x7x7xf32>
    %557 = arith.addf %555, %556 : vector<2x7x7xf32>
    %558 = vector.shape_cast %543 : vector<2x7xf32> to vector<2x1x7xf32>
    %559 = vector.broadcast %558 : vector<2x1x7xf32> to vector<2x7x7xf32>
    %560 = arith.addf %557, %559 : vector<2x7x7xf32>
    %cst_74 = arith.constant dense<0xFF800000> : vector<2x7xf32>
    %561 = vector.multi_reduction <maximumf>, %560, %cst_74 [1] : vector<2x7x7xf32> to vector<2x7xf32>
    %562 = vector.shape_cast %561 : vector<2x7xf32> to vector<2x1x7xf32>
    %563 = vector.broadcast %562 : vector<2x1x7xf32> to vector<2x7x7xf32>
    %564 = arith.cmpf oeq, %560, %563 : vector<2x7x7xf32>
    %c7_i32 = arith.constant 7 : i32
    %565 = vector.broadcast %c7_i32 : i32 to vector<2x7x7xi32>
    %566 = arith.select %564, %552, %565 : vector<2x7x7xi1>, vector<2x7x7xi32>
    %cst_75 = arith.constant dense<2147483647> : vector<2x7xi32>
    %567 = vector.multi_reduction <minsi>, %566, %cst_75 [1] : vector<2x7x7xi32> to vector<2x7xi32>
    %568 = vector.shape_cast %561 : vector<2x7xf32> to vector<2x7x1xf32>
    %569 = vector.shape_cast %10 : vector<7x7xf32> to vector<1x7x7xf32>
    %570 = vector.broadcast %568 : vector<2x7x1xf32> to vector<2x7x7xf32>
    %571 = vector.broadcast %569 : vector<1x7x7xf32> to vector<2x7x7xf32>
    %572 = arith.addf %570, %571 : vector<2x7x7xf32>
    %573 = vector.shape_cast %544 : vector<2x7xf32> to vector<2x1x7xf32>
    %574 = vector.broadcast %573 : vector<2x1x7xf32> to vector<2x7x7xf32>
    %575 = arith.addf %572, %574 : vector<2x7x7xf32>
    %cst_76 = arith.constant dense<0xFF800000> : vector<2x7xf32>
    %576 = vector.multi_reduction <maximumf>, %575, %cst_76 [1] : vector<2x7x7xf32> to vector<2x7xf32>
    %577 = vector.shape_cast %576 : vector<2x7xf32> to vector<2x1x7xf32>
    %578 = vector.broadcast %577 : vector<2x1x7xf32> to vector<2x7x7xf32>
    %579 = arith.cmpf oeq, %575, %578 : vector<2x7x7xf32>
    %c7_i32_77 = arith.constant 7 : i32
    %580 = vector.broadcast %c7_i32_77 : i32 to vector<2x7x7xi32>
    %581 = arith.select %579, %552, %580 : vector<2x7x7xi1>, vector<2x7x7xi32>
    %cst_78 = arith.constant dense<2147483647> : vector<2x7xi32>
    %582 = vector.multi_reduction <minsi>, %581, %cst_78 [1] : vector<2x7x7xi32> to vector<2x7xi32>
    %583 = vector.shape_cast %576 : vector<2x7xf32> to vector<2x7x1xf32>
    %584 = vector.shape_cast %10 : vector<7x7xf32> to vector<1x7x7xf32>
    %585 = vector.broadcast %583 : vector<2x7x1xf32> to vector<2x7x7xf32>
    %586 = vector.broadcast %584 : vector<1x7x7xf32> to vector<2x7x7xf32>
    %587 = arith.addf %585, %586 : vector<2x7x7xf32>
    %588 = vector.shape_cast %545 : vector<2x7xf32> to vector<2x1x7xf32>
    %589 = vector.broadcast %588 : vector<2x1x7xf32> to vector<2x7x7xf32>
    %590 = arith.addf %587, %589 : vector<2x7x7xf32>
    %cst_79 = arith.constant dense<0xFF800000> : vector<2x7xf32>
    %591 = vector.multi_reduction <maximumf>, %590, %cst_79 [1] : vector<2x7x7xf32> to vector<2x7xf32>
    %592 = vector.shape_cast %591 : vector<2x7xf32> to vector<2x1x7xf32>
    %593 = vector.broadcast %592 : vector<2x1x7xf32> to vector<2x7x7xf32>
    %594 = arith.cmpf oeq, %590, %593 : vector<2x7x7xf32>
    %c7_i32_80 = arith.constant 7 : i32
    %595 = vector.broadcast %c7_i32_80 : i32 to vector<2x7x7xi32>
    %596 = arith.select %594, %552, %595 : vector<2x7x7xi1>, vector<2x7x7xi32>
    %cst_81 = arith.constant dense<2147483647> : vector<2x7xi32>
    %597 = vector.multi_reduction <minsi>, %596, %cst_81 [1] : vector<2x7x7xi32> to vector<2x7xi32>
    %598 = vector.shape_cast %591 : vector<2x7xf32> to vector<2x7x1xf32>
    %599 = vector.shape_cast %10 : vector<7x7xf32> to vector<1x7x7xf32>
    %600 = vector.broadcast %598 : vector<2x7x1xf32> to vector<2x7x7xf32>
    %601 = vector.broadcast %599 : vector<1x7x7xf32> to vector<2x7x7xf32>
    %602 = arith.addf %600, %601 : vector<2x7x7xf32>
    %603 = vector.shape_cast %546 : vector<2x7xf32> to vector<2x1x7xf32>
    %604 = vector.broadcast %603 : vector<2x1x7xf32> to vector<2x7x7xf32>
    %605 = arith.addf %602, %604 : vector<2x7x7xf32>
    %cst_82 = arith.constant dense<0xFF800000> : vector<2x7xf32>
    %606 = vector.multi_reduction <maximumf>, %605, %cst_82 [1] : vector<2x7x7xf32> to vector<2x7xf32>
    %607 = vector.shape_cast %606 : vector<2x7xf32> to vector<2x1x7xf32>
    %608 = vector.broadcast %607 : vector<2x1x7xf32> to vector<2x7x7xf32>
    %609 = arith.cmpf oeq, %605, %608 : vector<2x7x7xf32>
    %c7_i32_83 = arith.constant 7 : i32
    %610 = vector.broadcast %c7_i32_83 : i32 to vector<2x7x7xi32>
    %611 = arith.select %609, %552, %610 : vector<2x7x7xi1>, vector<2x7x7xi32>
    %cst_84 = arith.constant dense<2147483647> : vector<2x7xi32>
    %612 = vector.multi_reduction <minsi>, %611, %cst_84 [1] : vector<2x7x7xi32> to vector<2x7xi32>
    %613 = vector.shape_cast %606 : vector<2x7xf32> to vector<2x7x1xf32>
    %614 = vector.shape_cast %10 : vector<7x7xf32> to vector<1x7x7xf32>
    %615 = vector.broadcast %613 : vector<2x7x1xf32> to vector<2x7x7xf32>
    %616 = vector.broadcast %614 : vector<1x7x7xf32> to vector<2x7x7xf32>
    %617 = arith.addf %615, %616 : vector<2x7x7xf32>
    %618 = vector.shape_cast %547 : vector<2x7xf32> to vector<2x1x7xf32>
    %619 = vector.broadcast %618 : vector<2x1x7xf32> to vector<2x7x7xf32>
    %620 = arith.addf %617, %619 : vector<2x7x7xf32>
    %cst_85 = arith.constant dense<0xFF800000> : vector<2x7xf32>
    %621 = vector.multi_reduction <maximumf>, %620, %cst_85 [1] : vector<2x7x7xf32> to vector<2x7xf32>
    %622 = vector.shape_cast %621 : vector<2x7xf32> to vector<2x1x7xf32>
    %623 = vector.broadcast %622 : vector<2x1x7xf32> to vector<2x7x7xf32>
    %624 = arith.cmpf oeq, %620, %623 : vector<2x7x7xf32>
    %c7_i32_86 = arith.constant 7 : i32
    %625 = vector.broadcast %c7_i32_86 : i32 to vector<2x7x7xi32>
    %626 = arith.select %624, %552, %625 : vector<2x7x7xi1>, vector<2x7x7xi32>
    %cst_87 = arith.constant dense<2147483647> : vector<2x7xi32>
    %627 = vector.multi_reduction <minsi>, %626, %cst_87 [1] : vector<2x7x7xi32> to vector<2x7xi32>
    %628 = vector.shape_cast %621 : vector<2x7xf32> to vector<2x7x1xf32>
    %629 = vector.shape_cast %10 : vector<7x7xf32> to vector<1x7x7xf32>
    %630 = vector.broadcast %628 : vector<2x7x1xf32> to vector<2x7x7xf32>
    %631 = vector.broadcast %629 : vector<1x7x7xf32> to vector<2x7x7xf32>
    %632 = arith.addf %630, %631 : vector<2x7x7xf32>
    %633 = vector.shape_cast %548 : vector<2x7xf32> to vector<2x1x7xf32>
    %634 = vector.broadcast %633 : vector<2x1x7xf32> to vector<2x7x7xf32>
    %635 = arith.addf %632, %634 : vector<2x7x7xf32>
    %cst_88 = arith.constant dense<0xFF800000> : vector<2x7xf32>
    %636 = vector.multi_reduction <maximumf>, %635, %cst_88 [1] : vector<2x7x7xf32> to vector<2x7xf32>
    %637 = vector.shape_cast %636 : vector<2x7xf32> to vector<2x1x7xf32>
    %638 = vector.broadcast %637 : vector<2x1x7xf32> to vector<2x7x7xf32>
    %639 = arith.cmpf oeq, %635, %638 : vector<2x7x7xf32>
    %c7_i32_89 = arith.constant 7 : i32
    %640 = vector.broadcast %c7_i32_89 : i32 to vector<2x7x7xi32>
    %641 = arith.select %639, %552, %640 : vector<2x7x7xi1>, vector<2x7x7xi32>
    %cst_90 = arith.constant dense<2147483647> : vector<2x7xi32>
    %642 = vector.multi_reduction <minsi>, %641, %cst_90 [1] : vector<2x7x7xi32> to vector<2x7xi32>
    %643 = vector.shape_cast %636 : vector<2x7xf32> to vector<2x7x1xf32>
    %644 = vector.shape_cast %10 : vector<7x7xf32> to vector<1x7x7xf32>
    %645 = vector.broadcast %643 : vector<2x7x1xf32> to vector<2x7x7xf32>
    %646 = vector.broadcast %644 : vector<1x7x7xf32> to vector<2x7x7xf32>
    %647 = arith.addf %645, %646 : vector<2x7x7xf32>
    %648 = vector.shape_cast %549 : vector<2x7xf32> to vector<2x1x7xf32>
    %649 = vector.broadcast %648 : vector<2x1x7xf32> to vector<2x7x7xf32>
    %650 = arith.addf %647, %649 : vector<2x7x7xf32>
    %cst_91 = arith.constant dense<0xFF800000> : vector<2x7xf32>
    %651 = vector.multi_reduction <maximumf>, %650, %cst_91 [1] : vector<2x7x7xf32> to vector<2x7xf32>
    %652 = vector.shape_cast %651 : vector<2x7xf32> to vector<2x1x7xf32>
    %653 = vector.broadcast %652 : vector<2x1x7xf32> to vector<2x7x7xf32>
    %654 = arith.cmpf oeq, %650, %653 : vector<2x7x7xf32>
    %c7_i32_92 = arith.constant 7 : i32
    %655 = vector.broadcast %c7_i32_92 : i32 to vector<2x7x7xi32>
    %656 = arith.select %654, %552, %655 : vector<2x7x7xi1>, vector<2x7x7xi32>
    %cst_93 = arith.constant dense<2147483647> : vector<2x7xi32>
    %657 = vector.multi_reduction <minsi>, %656, %cst_93 [1] : vector<2x7x7xi32> to vector<2x7xi32>
    %658 = vector.broadcast %9 : vector<1x7xf32> to vector<2x7xf32>
    %659 = arith.addf %651, %658 : vector<2x7xf32>
    %cst_94 = arith.constant dense<0xFF800000> : vector<2xf32>
    %660 = vector.multi_reduction <maximumf>, %659, %cst_94 [1] : vector<2x7xf32> to vector<2xf32>
    %661 = vector.shape_cast %660 : vector<2xf32> to vector<2x1xf32>
    %662 = tpu.iota {dimensions = array<i32: 1>} : vector<2x7xi32>
    %663 = vector.broadcast %661 : vector<2x1xf32> to vector<2x7xf32>
    %664 = arith.cmpf oeq, %659, %663 : vector<2x7xf32>
    %c7_i32_95 = arith.constant 7 : i32
    %665 = vector.broadcast %c7_i32_95 : i32 to vector<2x7xi32>
    %666 = arith.select %664, %662, %665 : vector<2x7xi1>, vector<2x7xi32>
    %cst_96 = arith.constant dense<2147483647> : vector<2xi32>
    %667 = vector.multi_reduction <minsi>, %666, %cst_96 [1] : vector<2x7xi32> to vector<2xi32>
    %668 = vector.shape_cast %667 : vector<2xi32> to vector<2x1xi32>
    %669 = vector.broadcast %668 : vector<2x1xi32> to vector<2x7xi32>
    %670 = arith.cmpi eq, %662, %669 : vector<2x7xi32>
    %c0_i32 = arith.constant 0 : i32
    %671 = vector.broadcast %c0_i32 : i32 to vector<2x7xi32>
    %672 = arith.select %670, %657, %671 : vector<2x7xi1>, vector<2x7xi32>
    %cst_97 = arith.constant dense<0> : vector<2xi32>
    %673 = vector.multi_reduction <add>, %672, %cst_97 [1] : vector<2x7xi32> to vector<2xi32>
    %674 = vector.shape_cast %673 : vector<2xi32> to vector<2x1xi32>
    %675 = vector.broadcast %674 : vector<2x1xi32> to vector<2x7xi32>
    %676 = arith.cmpi eq, %662, %675 : vector<2x7xi32>
    %c0_i32_98 = arith.constant 0 : i32
    %677 = vector.broadcast %c0_i32_98 : i32 to vector<2x7xi32>
    %678 = arith.select %676, %642, %677 : vector<2x7xi1>, vector<2x7xi32>
    %cst_99 = arith.constant dense<0> : vector<2xi32>
    %679 = vector.multi_reduction <add>, %678, %cst_99 [1] : vector<2x7xi32> to vector<2xi32>
    %680 = vector.shape_cast %679 : vector<2xi32> to vector<2x1xi32>
    %681 = vector.broadcast %680 : vector<2x1xi32> to vector<2x7xi32>
    %682 = arith.cmpi eq, %662, %681 : vector<2x7xi32>
    %c0_i32_100 = arith.constant 0 : i32
    %683 = vector.broadcast %c0_i32_100 : i32 to vector<2x7xi32>
    %684 = arith.select %682, %627, %683 : vector<2x7xi1>, vector<2x7xi32>
    %cst_101 = arith.constant dense<0> : vector<2xi32>
    %685 = vector.multi_reduction <add>, %684, %cst_101 [1] : vector<2x7xi32> to vector<2xi32>
    %686 = vector.shape_cast %685 : vector<2xi32> to vector<2x1xi32>
    %687 = vector.broadcast %686 : vector<2x1xi32> to vector<2x7xi32>
    %688 = arith.cmpi eq, %662, %687 : vector<2x7xi32>
    %c0_i32_102 = arith.constant 0 : i32
    %689 = vector.broadcast %c0_i32_102 : i32 to vector<2x7xi32>
    %690 = arith.select %688, %612, %689 : vector<2x7xi1>, vector<2x7xi32>
    %cst_103 = arith.constant dense<0> : vector<2xi32>
    %691 = vector.multi_reduction <add>, %690, %cst_103 [1] : vector<2x7xi32> to vector<2xi32>
    %692 = vector.shape_cast %691 : vector<2xi32> to vector<2x1xi32>
    %693 = vector.broadcast %692 : vector<2x1xi32> to vector<2x7xi32>
    %694 = arith.cmpi eq, %662, %693 : vector<2x7xi32>
    %c0_i32_104 = arith.constant 0 : i32
    %695 = vector.broadcast %c0_i32_104 : i32 to vector<2x7xi32>
    %696 = arith.select %694, %597, %695 : vector<2x7xi1>, vector<2x7xi32>
    %cst_105 = arith.constant dense<0> : vector<2xi32>
    %697 = vector.multi_reduction <add>, %696, %cst_105 [1] : vector<2x7xi32> to vector<2xi32>
    %698 = vector.shape_cast %697 : vector<2xi32> to vector<2x1xi32>
    %699 = vector.broadcast %698 : vector<2x1xi32> to vector<2x7xi32>
    %700 = arith.cmpi eq, %662, %699 : vector<2x7xi32>
    %c0_i32_106 = arith.constant 0 : i32
    %701 = vector.broadcast %c0_i32_106 : i32 to vector<2x7xi32>
    %702 = arith.select %700, %582, %701 : vector<2x7xi1>, vector<2x7xi32>
    %cst_107 = arith.constant dense<0> : vector<2xi32>
    %703 = vector.multi_reduction <add>, %702, %cst_107 [1] : vector<2x7xi32> to vector<2xi32>
    %704 = vector.shape_cast %703 : vector<2xi32> to vector<2x1xi32>
    %705 = vector.broadcast %704 : vector<2x1xi32> to vector<2x7xi32>
    %706 = arith.cmpi eq, %662, %705 : vector<2x7xi32>
    %c0_i32_108 = arith.constant 0 : i32
    %707 = vector.broadcast %c0_i32_108 : i32 to vector<2x7xi32>
    %708 = arith.select %706, %567, %707 : vector<2x7xi1>, vector<2x7xi32>
    %cst_109 = arith.constant dense<0> : vector<2xi32>
    %709 = vector.multi_reduction <add>, %708, %cst_109 [1] : vector<2x7xi32> to vector<2xi32>
    %710 = vector.shape_cast %709 : vector<2xi32> to vector<2x1xi32>
    %711 = tpu.concatenate %710, %704, %698, %692, %686, %680, %674, %668 in 1 : vector<2x1xi32>, vector<2x1xi32>, vector<2x1xi32>, vector<2x1xi32>, vector<2x1xi32>, vector<2x1xi32>, vector<2x1xi32>, vector<2x1xi32> -> vector<2x8xi32>
    %c0_110 = arith.constant 0 : index
    %c0_111 = arith.constant 0 : index
    %712 = vector.load %arg2[%c0_110, %c0_111] : memref<2x1xf32, #tpu.memory_space<vmem>>, vector<2x1xf32>
    tpu.vector_store %arg2[%c0_110, %c0_111], %661 {strides = array<i32>} : memref<2x1xf32, #tpu.memory_space<vmem>>, vector<2x1xf32>,
    %c0_112 = arith.constant 0 : index
    %c0_113 = arith.constant 0 : index
    %713 = vector.load %arg3[%c0_112, %c0_113] : memref<2x8xi32, #tpu.memory_space<vmem>>, vector<2x8xi32>
    tpu.vector_store %arg3[%c0_112, %c0_113], %711 {strides = array<i32>} : memref<2x8xi32, #tpu.memory_space<vmem>>, vector<2x8xi32>,
    return
  }
}

</mosaic_0001>

<llo_original>
// kernel: prnn_crf_forward.1
$region0: #{prnn_crf_forward.1}
  #allocation0 [shape = 'u32[]', space=smem, size = 0x4, offset = 0x4, fixed_abs, tag = 'smem constant byte address 0x4 - core index']
  #allocation1 [shape = 'u32[144,128]{1,0:T(1,128)}', space=vmem, size = 0x12000, scoped, tag = 'internal scratch']
  %s0 = inlined_call_operand.hbm [shape: f32[16,32], index: 0, kind: input, shape index: {}]
  %s1 = inlined_call_operand.hbm [shape: f32[192,192], index: 1, kind: input, shape index: {}]
  %s2 = inlined_call_operand.vmem [shape: f32[2,1], index: 2, kind: output, shape index: {0}]
  %s3 = inlined_call_operand.hbm [shape: s32[2,8], index: 3, kind: output, shape index: {1}]
  %4 = xla_tuple %s2, %s3
  %s5 = sld [smem:[#allocation0]]
  $region34: #{prnn_crf_forward.1} parent=0
    _
  %s7 = ssub.s32 1, %s5
  %s8 = scalar_select 0, %s7, %s5
  $region1: #{prnn_crf_forward.1} parent=0
    #allocation2 [shape = 'u8[8192]{0}', space=vmem, size = 0x2000, scoped, tag = 'input window, operand 0, single buffered']
    #allocation3 [shape = 's32[1]{0}', space=sflag, size = 0x4, scoped, tag = 'scoped memory for prnn_crf_forward.1']
    #allocation4 [shape = 's32[1]{0}', space=sflag, size = 0x4, scoped, tag = 'scoped memory for prnn_crf_forward.1']
    #allocation5 [shape = 'u8[196608]{0}', space=vmem, size = 0x30000, scoped, tag = 'input window, operand 1, single buffered']
    #allocation6 [shape = 's32[1]{0}', space=sflag, size = 0x4, scoped, tag = 'scoped memory for prnn_crf_forward.1']
    #allocation7 [shape = 'u8[1024]{0}', space=vmem, size = 0x400, scoped, tag = 'output window, operand 1, single buffered']
    %9 = vsyncpa [#allocation3], 0
    %10 = vsyncpa [#allocation6], 0
    %11 = vsyncpa [#allocation4], 0
    // Predicated region
    $region2: #{prnn_crf_forward.1} parent=1 // pred_check
      _
    $region3: #{prnn_crf_forward.1} parent=1 // pred_check_branch
      %13 = sbr.rel (0) target = $region5
    $region4: #{prnn_crf_forward.1} parent=1 // pred_region
      %s15 = ssub.s32 256, 256
      %16 = vsyncadd [#allocation3], %s15
      %s17 = sshll.u32 [#allocation2], 4
      %s18 = int_to_ptr.vmem [resolvable:$true] %s17
      %23 = dma.hbm_to_vmem [thread:$0]  %s0, 256, %s18, [#allocation3], 128, 128, 8
    $region5: #{prnn_crf_forward.1} parent=1 // pred_fallthru
      _
    // Predicated region
    $region6: #{prnn_crf_forward.1} parent=1 // pred_check
      _
    $region7: #{prnn_crf_forward.1} parent=1 // pred_check_branch
      %25 = sbr.rel (0) target = $region9
    $region8: #{prnn_crf_forward.1} parent=1 // pred_region
      %s27 = ssub.s32 6144, 6144
      %28 = vsyncadd [#allocation6], %s27
      %s29 = sshll.u32 [#allocation5], 4
      %s30 = int_to_ptr.vmem [resolvable:$true] %s29
      %35 = dma.hbm_to_vmem [thread:$0]  %s1, 6144, %s30, [#allocation6], 256, 256, 16
    $region9: #{prnn_crf_forward.1} parent=1 // pred_fallthru
      _
    // Predicated region
    $region10: #{prnn_crf_forward.1} parent=1 // pred_check
      _
    $region11: #{prnn_crf_forward.1} parent=1 // pred_check_branch
      %37 = sbr.rel (0) target = $region13
    $region12: #{prnn_crf_forward.1} parent=1 // pred_region
      %38 = dma.done [#allocation3], 256
    $region13: #{prnn_crf_forward.1} parent=1 // pred_fallthru
      _
    // Predicated region
    $region14: #{prnn_crf_forward.1} parent=1 // pred_check
      _
    $region15: #{prnn_crf_forward.1} parent=1 // pred_check_branch
      %40 = sbr.rel (0) target = $region17
    $region16: #{prnn_crf_forward.1} parent=1 // pred_region
      %41 = dma.done [#allocation6], 6144
    $region17: #{prnn_crf_forward.1} parent=1 // pred_fallthru
      _
    %v43 = vld [vmem:[#allocation5] sm:$0xff]
    %v44 = vld [vmem:[#allocation5 + $0x10] sm:$0xff]
    %v45 = vld [vmem:[#allocation5 + $0x20] sm:$0xff]
    %v46 = vld [vmem:[#allocation5 + $0x30] sm:$0xff]
    %v47 = vld [vmem:[#allocation5 + $0x160] ss:$0 sm:$0xff]
    %v48 = vld [vmem:[#allocation5 + $0x40] sm:$0xff]
    %v49 = vld [vmem:[#allocation5 + $0x48] sm:$0xff]
    %v50 = vld [vmem:[#allocation5 + $0x50] sm:$0xff]
    %v51 = vld [vmem:[#allocation5 + $0x58] sm:$0xff]
    %s52 = scalar_lea.vmem [#allocation5], 353
    %v53 = vld [vmem:[%s52] ss:$8 sm:$0x3]
    %v54 = vld [vmem:[#allocation5 + $0x60] sm:$0xff]
    %v55 = vld [vmem:[#allocation5 + $0x68] sm:$0xff]
    %v56 = vld [vmem:[#allocation5 + $0x70] sm:$0xff]
    %v57 = vld [vmem:[#allocation5 + $0x78] sm:$0xff]
    %v58 = vld [vmem:[#allocation5 + $0x80] sm:$0xff]
    %v59 = vld [vmem:[#allocation5 + $0x88] sm:$0xff]
    %v60 = vld [vmem:[#allocation5 + $0x90] sm:$0xff]
    %v61 = vld [vmem:[#allocation5 + $0x98] sm:$0xff]
    %v62 = vld [vmem:[#allocation5 + $0xa0] sm:$0xff]
    %v63 = vld [vmem:[#allocation5 + $0xa8] sm:$0xff]
    %v64 = vld [vmem:[#allocation5 + $0xb0] sm:$0xff]
    %v65 = vld [vmem:[#allocation5 + $0xb8] sm:$0xff]
    %v66 = vld [vmem:[#allocation5 + $0xc0] sm:$0xff]
    %v67 = vld [vmem:[#allocation5 + $0xc8] sm:$0xff]
    %v68 = vld [vmem:[#allocation5 + $0xd0] sm:$0xff]
    %v69 = vld [vmem:[#allocation5 + $0xd8] sm:$0xff]
    %s70 = scalar_lea.vmem [#allocation5], 354
    %v71 = vld [vmem:[%s70] ss:$8 sm:$0x3]
    %v72 = vld [vmem:[#allocation5 + $0xe0] sm:$0xff]
    %v73 = vld [vmem:[#allocation5 + $0xf0] sm:$0xff]
    %v74 = vld [vmem:[#allocation5 + $0x100] sm:$0xff]
    %v75 = vld [vmem:[#allocation5 + $0x110] sm:$0xff]
    %v76 = vld [vmem:[#allocation5 + $0x120] sm:$0xff]
    %v77 = vld [vmem:[#allocation5 + $0x130] sm:$0xff]
    %v78 = vld [vmem:[#allocation5 + $0x140] sm:$0xff]
    %v79 = vld [vmem:[#allocation5 + $0x150] sm:$0xff]
    %v80 = vld [vmem:[#allocation5 + $0x163] ss:$0 sm:$0xff]
    %v81 = vld [vmem:[#allocation5 + $0x164] ss:$0 sm:$0xff]
    %v82 = vld [vmem:[#allocation5 + $0x165] ss:$0 sm:$0xff]
    %v83 = vld [vmem:[#allocation5 + $0x160] sm:$0xc0]
    %v84 = vld [vmem:[#allocation5 + $0x170] sm:$0x1f]
    %v85 = vld [vmem:[#allocation2] sm:$0xff]
    %v86 = vld [vmem:[#allocation2 + $0x8] sm:$0xff]
    %vm87 = vcmask 261120
    %v89 = vsel %vm87, %v85, 0
    %v92 = vsel %vm87, %v86, 0
    %94 = vmatprep.subr.mxu0 0.0
    %95 = vmatpush1.msra.mxu0 %v43
    %96 = vmatprep.subr.mxu0 0.0
    %97 = vmatpush1.msra.mxu0 %v44
    %98 = vmatprep.subr.mxu0 0.0
    %99 = vmatpush1.msra.mxu0 %v45
    %100 = vmatprep.subr.mxu0 0.0
    %101 = vmatpush1.msra.mxu0 %v46
    %102 = vmatprep.subr.mxu0 0.0
    %103 = vmatpush1.msra.mxu0 0.0
    %104 = vmatprep.subr.mxu0 0.0
    %105 = vmatpush1.msra.mxu0 0.0
    %106 = vmatprep.subr.mxu0 0.0
    %107 = vmatpush1.msra.mxu0 0.0
    %108 = vmatprep.subr.mxu0 0.0
    %109 = vmatpush1.msra.mxu0 0.0
    %110 = vmatprep.subr.mxu0 0.0
    %111 = vmatpush1.msra.mxu0 0.0
    %112 = vmatprep.subr.mxu0 0.0
    %113 = vmatpush1.msra.mxu0 0.0
    %114 = vmatprep.subr.mxu0 0.0
    %115 = vmatpush1.msra.mxu0 0.0
    %116 = vmatprep.subr.mxu0 0.0
    %117 = vmatpush1.msra.mxu0 0.0
    %118 = vmatprep.subr.mxu0 0.0
    %119 = vmatpush1.msra.mxu0 0.0
    %120 = vmatprep.subr.mxu0 0.0
    %121 = vmatpush1.msra.mxu0 0.0
    %122 = vmatprep.subr.mxu0 0.0
    %123 = vmatpush1.msra.mxu0 0.0
    %124 = vmatprep.subr.mxu0 0.0
    %125 = vmatpush1.msra.mxu0 0.0
    %126 = vmatprep.subr.mxu0 0.0
    %127 = vmatpush1.msra.mxu0 0.0
    %128 = vmatprep.subr.mxu0 0.0
    %129 = vmatpush1.msra.mxu0 0.0
    %130 = vmatprep.subr.mxu0 0.0
    %131 = vmatpush1.msra.mxu0 0.0
    %132 = vmatprep.subr.mxu0 0.0
    %133 = vmatpush1.msra.mxu0 0.0
    %134 = vmatprep.subr.mxu0 0.0
    %135 = vmatpush1.msra.mxu0 0.0
    %136 = vmatprep.subr.mxu0 0.0
    %137 = vmatpush1.msra.mxu0 0.0
    %138 = vmatprep.subr.mxu0 0.0
    %139 = vmatpush1.msra.mxu0 0.0
    %140 = vmatprep.subr.mxu0 0.0
    %141 = vmatpush1.msra.mxu0 0.0
    %142 = vmatprep.subr.mxu0 0.0
    %143 = vmatpush1.msra.mxu0 0.0
    %144 = vmatprep.subr.mxu0 0.0
    %145 = vmatpush1.msra.mxu0 0.0
    %146 = vmatprep.subr.mxu0 0.0
    %147 = vmatpush1.msra.mxu0 0.0
    %148 = vmatprep.subr.mxu0 0.0
    %149 = vmatpush1.msra.mxu0 0.0
    %150 = vmatprep.subr.mxu0 0.0
    %151 = vmatpush1.msra.mxu0 0.0
    %152 = vmatprep.subr.mxu0 0.0
    %153 = vmatpush1.msra.mxu0 0.0
    %154 = vmatprep.subr.mxu0 0.0
    %155 = vmatpush1.msra.mxu0 0.0
    %156 = vmatprep.subr.mxu0 0.0
    %157 = vmatpush1.msra.mxu0 0.0
    %158 = vmatprep.mubr.f32.mxu0 0.0
    %159 = vmatmul.mubr.f32.gmra.mrb[0].mxu0 %v89
    %v160 = vpop.f32.mrb[0].mxu0
    %v161 = vadd.f32 %v47, %v160
    %v162 = vpop.f32.mrb[0].mxu0
    %163 = vmatprep.mubr.f32.mxu0 0.0
    %164 = vmatmul.mubr.f32.gmra.mrb[0].mxu0 %v92
    %v165 = vpop.f32.mrb[0].mxu0
    %v166 = vadd.f32 %v47, %v165
    %v167 = vpop.f32.mrb[0].mxu0
    %168 = vdwg.mxu0
    %v169 = vmax.f32 %v161, 0.0
    %v170 = vmax.f32 %v166, 0.0
    %v171 = vpack.c.bf16 %v170, %v169
    %v172 = vpack.c.bf16 %v50, %v48
    %v173 = vpack.c.bf16 %v51, %v49
    %v175 = vlaneseq
    %v176 = vshrl.u32 %v175, 7
    %v177 = vsub.s32 0, %v176
    %v178 = vrot.slane %v53, %v177
    %v179 = vlaneseq
    %v180 = vshrl.u32 %v179, 7
    %v181 = vsub.s32 1, %v180
    %v182 = vrot.slane %v53, %v181
    %vm185 = vcmask 130048
    %v187 = vsel %vm185, %v171, 0
    %189 = vmatprep.subr.bf16.mxu0 %v173
    %190 = vmatpush1.bf16.msra.mxu0 %v172
    %191 = vmatprep.subr.bf16.mxu0 0
    %192 = vmatpush1.bf16.msra.mxu0 0
    %193 = vmatprep.subr.bf16.mxu0 0
    %194 = vmatpush1.bf16.msra.mxu0 0
    %195 = vmatprep.subr.bf16.mxu0 0
    %196 = vmatpush1.bf16.msra.mxu0 0
    %197 = vmatprep.subr.bf16.mxu0 0
    %198 = vmatpush1.bf16.msra.mxu0 0
    %199 = vmatprep.subr.bf16.mxu0 0
    %200 = vmatpush1.bf16.msra.mxu0 0
    %201 = vmatprep.subr.bf16.mxu0 0
    %202 = vmatpush1.bf16.msra.mxu0 0
    %203 = vmatprep.subr.bf16.mxu0 0
    %204 = vmatpush1.bf16.msra.mxu0 0
    %205 = vmatprep.subr.bf16.mxu0 0
    %206 = vmatpush1.bf16.msra.mxu0 0
    %207 = vmatprep.subr.bf16.mxu0 0
    %208 = vmatpush1.bf16.msra.mxu0 0
    %209 = vmatprep.subr.bf16.mxu0 0
    %210 = vmatpush1.bf16.msra.mxu0 0
    %211 = vmatprep.subr.bf16.mxu0 0
    %212 = vmatpush1.bf16.msra.mxu0 0
    %213 = vmatprep.subr.bf16.mxu0 0
    %214 = vmatpush1.bf16.msra.mxu0 0
    %215 = vmatprep.subr.bf16.mxu0 0
    %216 = vmatpush1.bf16.msra.mxu0 0
    %217 = vmatprep.subr.bf16.mxu0 0
    %218 = vmatpush1.bf16.msra.mxu0 0
    %219 = vmatprep.subr.bf16.mxu0 0
    %220 = vmatpush1.bf16.msra.mxu0 0
    %221 = vmatprep.mubr.bf16.mxu0 0
    %222 = vmatmul.mubr.bf16.gmra.mrb[0].mxu0 %v187
    %v223 = vpop.f32.mrb[0].mxu0
    %v224 = vadd.f32 %v178, %v223
    %v225 = vpop.f32.mrb[0].mxu0
    %v226 = vadd.f32 %v182, %v225
    %v227 = vpop.f32.mrb[0].mxu0
    %v228 = vadd.f32 %v178, %v227
    %v229 = vpop.f32.mrb[0].mxu0
    %v230 = vadd.f32 %v182, %v229
    %231 = vdwg.mxu0
    %v232 = vpack.c.bf16 %v56, %v54
    %v233 = vpack.c.bf16 %v57, %v55
    %v234 = vpack.c.bf16 %v60, %v58
    %v235 = vpack.c.bf16 %v61, %v59
    %v236 = vpack.c.bf16 %v64, %v62
    %v237 = vpack.c.bf16 %v65, %v63
    %v238 = vpack.c.bf16 %v68, %v66
    %v239 = vpack.c.bf16 %v69, %v67
    %v240 = vpack.c.bf16 0.0, 0.0
    %v242 = vlaneseq
    %v243 = vshrl.u32 %v242, 7
    %v244 = vsub.s32 0, %v243
    %v245 = vrot.slane %v71, %v244
    %v246 = vlaneseq
    %v247 = vshrl.u32 %v246, 7
    %v248 = vsub.s32 1, %v247
    %v249 = vrot.slane %v71, %v248
    %vm252 = vcmask 523264
    %v254 = vsel %vm252, %v240, 0
    %256 = vmatprep.subr.bf16.mxu0 %v233
    %257 = vmatpush1.bf16.msra.mxu0 %v232
    %258 = vmatprep.subr.bf16.mxu0 %v235
    %259 = vmatpush1.bf16.msra.mxu0 %v234
    %260 = vmatprep.subr.bf16.mxu0 %v237
    %261 = vmatpush1.bf16.msra.mxu0 %v236
    %262 = vmatprep.subr.bf16.mxu0 %v239
    %263 = vmatpush1.bf16.msra.mxu0 %v238
    %264 = vmatprep.subr.bf16.mxu0 0
    %265 = vmatpush1.bf16.msra.mxu0 0
    %266 = vmatprep.subr.bf16.mxu0 0
    %267 = vmatpush1.bf16.msra.mxu0 0
    %268 = vmatprep.subr.bf16.mxu0 0
    %269 = vmatpush1.bf16.msra.mxu0 0
    %270 = vmatprep.subr.bf16.mxu0 0
    %271 = vmatpush1.bf16.msra.mxu0 0
    %272 = vmatprep.subr.bf16.mxu0 0
    %273 = vmatpush1.bf16.msra.mxu0 0
    %274 = vmatprep.subr.bf16.mxu0 0
    %275 = vmatpush1.bf16.msra.mxu0 0
    %276 = vmatprep.subr.bf16.mxu0 0
    %277 = vmatpush1.bf16.msra.mxu0 0
    %278 = vmatprep.subr.bf16.mxu0 0
    %279 = vmatpush1.bf16.msra.mxu0 0
    %280 = vmatprep.subr.bf16.mxu0 0
    %281 = vmatpush1.bf16.msra.mxu0 0
    %282 = vmatprep.subr.bf16.mxu0 0
    %283 = vmatpush1.bf16.msra.mxu0 0
    %284 = vmatprep.subr.bf16.mxu0 0
    %285 = vmatpush1.bf16.msra.mxu0 0
    %286 = vmatprep.subr.bf16.mxu0 0
    %287 = vmatpush1.bf16.msra.mxu0 0
    %288 = vmatprep.mubr.bf16.mxu0 0
    %289 = vmatmul.mubr.bf16.gmra.mrb[0].mxu0 %v254
    %v290 = vpop.f32.mrb[0].mxu0
    %v291 = vadd.f32 %v245, %v290
    %v292 = vpop.f32.mrb[0].mxu0
    %v293 = vadd.f32 %v249, %v292
    %v294 = vpop.f32.mrb[0].mxu0
    %v295 = vpop.f32.mrb[0].mxu0
    %296 = vdwg.mxu0
    %v298 = vrot.slane %v291, 1
    %v301 = vadd.f32 %v224, %v291
    %v302 = vadd.f32 %v228, %v298
    %v303 = vxor.u32 %v301, 2147483648
    %v304 = vxor.u32 %v302, 2147483648
    %v305 = vmul.f32 %v303, 1.442695
    %v306 = vpow.pop %v305
    %v307 = vmul.f32 %v304, 1.442695
    %v308 = vpow.pop %v307
    %v309 = vadd.f32 %v306, 1.0
    %v310 = vadd.f32 %v308, 1.0
    %v311 = vrcp.pop %v309
    %v312 = vmul.f32 1.0, %v311
    %v313 = vrcp.pop %v310
    %v314 = vmul.f32 1.0, %v313
    %315 = vrot.lane.b32.xlu0 %v291, 64
    %v316 = vpop.permute.xlu0 %315
    %317 = vrot.lane.b32.xlu0 %v298, 64
    %v318 = vpop.permute.xlu0 %317
    %v321 = vmul.f32 %v312, %v316
    %v322 = vmul.f32 %v314, %v318
    %325 = vrot.lane.b32.xlu0 %v321, 64
    %v326 = vpop.permute.xlu0 %325
    %327 = vrot.lane.b32.xlu0 %v322, 64
    %v328 = vpop.permute.xlu0 %327
    %v331 = vadd.f32 %v224, %v326
    %v332 = vadd.f32 %v228, %v328
    %v333 = vtanh.pop %v331
    %v334 = vtanh.pop %v332
    %v335 = vsub.f32 1.0, %v312
    %v336 = vsub.f32 1.0, %v314
    %339 = vrot.lane.b32.xlu0 %v333, 96
    %v340 = vpop.permute.xlu0 %339
    %341 = vrot.lane.b32.xlu0 %v334, 96
    %v342 = vpop.permute.xlu0 %341
    %v345 = vmul.f32 %v335, %v340
    %v346 = vmul.f32 %v336, %v342
    %v347 = vmul.f32 %v312, 0.0
    %v348 = vmul.f32 %v314, 0.0
    %v349 = vadd.f32 %v345, %v347
    %v350 = vadd.f32 %v346, %v348
    %v351 = vrot.slane %v291, 2
    %v353 = vadd.f32 %v224, %v298
    %v354 = vadd.f32 %v228, %v351
    %v355 = vxor.u32 %v353, 2147483648
    %v356 = vxor.u32 %v354, 2147483648
    %v357 = vmul.f32 %v355, 1.442695
    %v358 = vpow.pop %v357
    %v359 = vmul.f32 %v356, 1.442695
    %v360 = vpow.pop %v359
    %v361 = vadd.f32 %v358, 1.0
    %v362 = vadd.f32 %v360, 1.0
    %v363 = vrcp.pop %v361
    %v364 = vmul.f32 1.0, %v363
    %v365 = vrcp.pop %v362
    %v366 = vmul.f32 1.0, %v365
    %v368 = vrot.slane %v293, 1
    %v369 = vrot.slane %v293, 2
    %v372 = vadd.f32 %v226, %v368
    %v373 = vadd.f32 %v230, %v369
    %v374 = vxor.u32 %v372, 2147483648
    %v375 = vxor.u32 %v373, 2147483648
    %v376 = vmul.f32 %v374, 1.442695
    %v377 = vpow.pop %v376
    %v378 = vmul.f32 %v375, 1.442695
    %v379 = vpow.pop %v378
    %v380 = vadd.f32 %v377, 1.0
    %v381 = vadd.f32 %v379, 1.0
    %v382 = vrcp.pop %v380
    %v383 = vmul.f32 1.0, %v382
    %v384 = vrcp.pop %v381
    %v385 = vmul.f32 1.0, %v384
    %386 = vrot.lane.b32.xlu0 %v368, 64
    %v387 = vpop.permute.xlu0 %386
    %388 = vrot.lane.b32.xlu0 %v369, 64
    %v389 = vpop.permute.xlu0 %388
    %v392 = vmul.f32 %v364, %v387
    %v393 = vmul.f32 %v366, %v389
    %396 = vrot.lane.b32.xlu0 %v392, 64
    %v397 = vpop.permute.xlu0 %396
    %398 = vrot.lane.b32.xlu0 %v393, 64
    %v399 = vpop.permute.xlu0 %398
    %v402 = vadd.f32 %v226, %v397
    %v403 = vadd.f32 %v230, %v399
    %v404 = vtanh.pop %v402
    %v405 = vtanh.pop %v403
    %v406 = vsub.f32 1.0, %v383
    %v407 = vsub.f32 1.0, %v385
    %410 = vrot.lane.b32.xlu0 %v404, 96
    %v411 = vpop.permute.xlu0 %410
    %412 = vrot.lane.b32.xlu0 %v405, 96
    %v413 = vpop.permute.xlu0 %412
    %v416 = vmul.f32 %v406, %v411
    %v417 = vmul.f32 %v407, %v413
    %v418 = vmul.f32 %v383, 0.0
    %v419 = vmul.f32 %v385, 0.0
    %v420 = vadd.f32 %v416, %v418
    %v421 = vadd.f32 %v417, %v419
    %v424 = vrot.slane %v350, 7
    %vm425 = vcmask 1041409
    %v426 = vsel %vm425, %v424, %v349
    %427 = vrot.lane.b32.xlu0 %v426, 96
    %v428 = vpop.permute.xlu0 %427
    %v432 = vrot.slane %v420, 7
    %v433 = vrot.slane %v421, 6
    %v434 = vsel %vm425, %v433, %v432
    %435 = vrot.lane.b32.xlu0 %v434, 32
    %v436 = vpop.permute.xlu0 %435
    %v438 = vsel %vm87, %v428, %v436
    %v439 = vpack.c.bf16 %v438, %v438
    %v441 = vsel %vm252, %v439, 0
    %443 = vmatprep.subr.bf16.mxu0 %v233
    %444 = vmatpush1.bf16.msra.mxu0 %v232
    %445 = vmatprep.subr.bf16.mxu0 %v235
    %446 = vmatpush1.bf16.msra.mxu0 %v234
    %447 = vmatprep.subr.bf16.mxu0 %v237
    %448 = vmatpush1.bf16.msra.mxu0 %v236
    %449 = vmatprep.subr.bf16.mxu0 %v239
    %450 = vmatpush1.bf16.msra.mxu0 %v238
    %451 = vmatprep.subr.bf16.mxu0 0
    %452 = vmatpush1.bf16.msra.mxu0 0
    %453 = vmatprep.subr.bf16.mxu0 0
    %454 = vmatpush1.bf16.msra.mxu0 0
    %455 = vmatprep.subr.bf16.mxu0 0
    %456 = vmatpush1.bf16.msra.mxu0 0
    %457 = vmatprep.subr.bf16.mxu0 0
    %458 = vmatpush1.bf16.msra.mxu0 0
    %459 = vmatprep.subr.bf16.mxu0 0
    %460 = vmatpush1.bf16.msra.mxu0 0
    %461 = vmatprep.subr.bf16.mxu0 0
    %462 = vmatpush1.bf16.msra.mxu0 0
    %463 = vmatprep.subr.bf16.mxu0 0
    %464 = vmatpush1.bf16.msra.mxu0 0
    %465 = vmatprep.subr.bf16.mxu0 0
    %466 = vmatpush1.bf16.msra.mxu0 0
    %467 = vmatprep.subr.bf16.mxu0 0
    %468 = vmatpush1.bf16.msra.mxu0 0
    %469 = vmatprep.subr.bf16.mxu0 0
    %470 = vmatpush1.bf16.msra.mxu0 0
    %471 = vmatprep.subr.bf16.mxu0 0
    %472 = vmatpush1.bf16.msra.mxu0 0
    %473 = vmatprep.subr.bf16.mxu0 0
    %474 = vmatpush1.bf16.msra.mxu0 0
    %475 = vmatprep.mubr.bf16.mxu0 0
    %476 = vmatmul.mubr.bf16.gmra.mrb[0].mxu0 %v441
    %v477 = vpop.f32.mrb[0].mxu0
    %v478 = vadd.f32 %v245, %v477
    %v479 = vpop.f32.mrb[0].mxu0
    %v480 = vadd.f32 %v249, %v479
    %v481 = vpop.f32.mrb[0].mxu0
    %v482 = vpop.f32.mrb[0].mxu0
    %483 = vdwg.mxu0
    %v485 = vrot.slane %v478, 7
    %v488 = vadd.f32 %v224, %v485
    %v489 = vadd.f32 %v228, %v478
    %v490 = vxor.u32 %v488, 2147483648
    %v491 = vxor.u32 %v489, 2147483648
    %v492 = vmul.f32 %v490, 1.442695
    %v493 = vpow.pop %v492
    %v494 = vmul.f32 %v491, 1.442695
    %v495 = vpow.pop %v494
    %v496 = vadd.f32 %v493, 1.0
    %v497 = vadd.f32 %v495, 1.0
    %v498 = vrcp.pop %v496
    %v499 = vmul.f32 1.0, %v498
    %v500 = vrcp.pop %v497
    %v501 = vmul.f32 1.0, %v500
    %502 = vrot.lane.b32.xlu0 %v485, 64
    %v503 = vpop.permute.xlu0 %502
    %504 = vrot.lane.b32.xlu0 %v478, 64
    %v505 = vpop.permute.xlu0 %504
    %v508 = vmul.f32 %v499, %v503
    %v509 = vmul.f32 %v501, %v505
    %512 = vrot.lane.b32.xlu0 %v508, 64
    %v513 = vpop.permute.xlu0 %512
    %514 = vrot.lane.b32.xlu0 %v509, 64
    %v515 = vpop.permute.xlu0 %514
    %v518 = vadd.f32 %v224, %v513
    %v519 = vadd.f32 %v228, %v515
    %v520 = vtanh.pop %v518
    %v521 = vtanh.pop %v519
    %v522 = vsub.f32 1.0, %v499
    %v523 = vsub.f32 1.0, %v501
    %526 = vrot.lane.b32.xlu0 %v520, 96
    %v527 = vpop.permute.xlu0 %526
    %528 = vrot.lane.b32.xlu0 %v521, 96
    %v529 = vpop.permute.xlu0 %528
    %v532 = vmul.f32 %v522, %v527
    %v533 = vmul.f32 %v523, %v529
    %v534 = vrot.slane %v349, 7
    %v537 = vmul.f32 %v499, %v534
    %v538 = vmul.f32 %v501, %v424
    %v539 = vadd.f32 %v532, %v537
    %v540 = vadd.f32 %v533, %v538
    %v541 = vrot.slane %v478, 2
    %v542 = vrot.slane %v478, 3
    %v545 = vadd.f32 %v224, %v541
    %v546 = vadd.f32 %v228, %v542
    %v547 = vxor.u32 %v545, 2147483648
    %v548 = vxor.u32 %v546, 2147483648
    %v549 = vmul.f32 %v547, 1.442695
    %v550 = vpow.pop %v549
    %v551 = vmul.f32 %v548, 1.442695
    %v552 = vpow.pop %v551
    %v553 = vadd.f32 %v550, 1.0
    %v554 = vadd.f32 %v552, 1.0
    %v555 = vrcp.pop %v553
    %v556 = vmul.f32 1.0, %v555
    %v557 = vrcp.pop %v554
    %v558 = vmul.f32 1.0, %v557
    %v560 = vrot.slane %v480, 2
    %v561 = vrot.slane %v480, 3
    %v564 = vadd.f32 %v226, %v560
    %v565 = vadd.f32 %v230, %v561
    %v566 = vxor.u32 %v564, 2147483648
    %v567 = vxor.u32 %v565, 2147483648
    %v568 = vmul.f32 %v566, 1.442695
    %v569 = vpow.pop %v568
    %v570 = vmul.f32 %v567, 1.442695
    %v571 = vpow.pop %v570
    %v572 = vadd.f32 %v569, 1.0
    %v573 = vadd.f32 %v571, 1.0
    %v574 = vrcp.pop %v572
    %v575 = vmul.f32 1.0, %v574
    %v576 = vrcp.pop %v573
    %v577 = vmul.f32 1.0, %v576
    %578 = vrot.lane.b32.xlu0 %v560, 64
    %v579 = vpop.permute.xlu0 %578
    %580 = vrot.lane.b32.xlu0 %v561, 64
    %v581 = vpop.permute.xlu0 %580
    %v584 = vmul.f32 %v556, %v579
    %v585 = vmul.f32 %v558, %v581
    %588 = vrot.lane.b32.xlu0 %v584, 64
    %v589 = vpop.permute.xlu0 %588
    %590 = vrot.lane.b32.xlu0 %v585, 64
    %v591 = vpop.permute.xlu0 %590
    %v594 = vadd.f32 %v226, %v589
    %v595 = vadd.f32 %v230, %v591
    %v596 = vtanh.pop %v594
    %v597 = vtanh.pop %v595
    %v598 = vsub.f32 1.0, %v575
    %v599 = vsub.f32 1.0, %v577
    %602 = vrot.lane.b32.xlu0 %v596, 96
    %v603 = vpop.permute.xlu0 %602
    %604 = vrot.lane.b32.xlu0 %v597, 96
    %v605 = vpop.permute.xlu0 %604
    %v608 = vmul.f32 %v598, %v603
    %v609 = vmul.f32 %v599, %v605
    %v610 = vrot.slane %v420, 1
    %v611 = vrot.slane %v421, 1
    %v614 = vmul.f32 %v575, %v610
    %v615 = vmul.f32 %v577, %v611
    %v616 = vadd.f32 %v608, %v614
    %v617 = vadd.f32 %v609, %v615
    %v620 = vrot.slane %v540, 7
    %vm621 = vcmask 1042434
    %v622 = vsel %vm621, %v620, %v539
    %623 = vrot.lane.b32.xlu0 %v622, 96
    %v624 = vpop.permute.xlu0 %623
    %v628 = vrot.slane %v616, 5
    %v629 = vrot.slane %v617, 4
    %v630 = vsel %vm621, %v629, %v628
    %631 = vrot.lane.b32.xlu0 %v630, 32
    %v632 = vpop.permute.xlu0 %631
    %v634 = vsel %vm87, %v624, %v632
    %v635 = vpack.c.bf16 %v634, %v634
    %v637 = vshrl.u32 %v635, 16
    %v639 = vshll.u32 %v635, 16
    %v641 = vrot.slane %v639, 1
    %v642 = vor.u32 %v637, %v641
    %v644 = vsel %vm252, %v642, 0
    %646 = vmatprep.subr.bf16.mxu0 %v233
    %647 = vmatpush1.bf16.msra.mxu0 %v232
    %648 = vmatprep.subr.bf16.mxu0 %v235
    %649 = vmatpush1.bf16.msra.mxu0 %v234
    %650 = vmatprep.subr.bf16.mxu0 %v237
    %651 = vmatpush1.bf16.msra.mxu0 %v236
    %652 = vmatprep.subr.bf16.mxu0 %v239
    %653 = vmatpush1.bf16.msra.mxu0 %v238
    %654 = vmatprep.subr.bf16.mxu0 0
    %655 = vmatpush1.bf16.msra.mxu0 0
    %656 = vmatprep.subr.bf16.mxu0 0
    %657 = vmatpush1.bf16.msra.mxu0 0
    %658 = vmatprep.subr.bf16.mxu0 0
    %659 = vmatpush1.bf16.msra.mxu0 0
    %660 = vmatprep.subr.bf16.mxu0 0
    %661 = vmatpush1.bf16.msra.mxu0 0
    %662 = vmatprep.subr.bf16.mxu0 0
    %663 = vmatpush1.bf16.msra.mxu0 0
    %664 = vmatprep.subr.bf16.mxu0 0
    %665 = vmatpush1.bf16.msra.mxu0 0
    %666 = vmatprep.subr.bf16.mxu0 0
    %667 = vmatpush1.bf16.msra.mxu0 0
    %668 = vmatprep.subr.bf16.mxu0 0
    %669 = vmatpush1.bf16.msra.mxu0 0
    %670 = vmatprep.subr.bf16.mxu0 0
    %671 = vmatpush1.bf16.msra.mxu0 0
    %672 = vmatprep.subr.bf16.mxu0 0
    %673 = vmatpush1.bf16.msra.mxu0 0
    %674 = vmatprep.subr.bf16.mxu0 0
    %675 = vmatpush1.bf16.msra.mxu0 0
    %676 = vmatprep.subr.bf16.mxu0 0
    %677 = vmatpush1.bf16.msra.mxu0 0
    %678 = vmatprep.mubr.bf16.mxu0 0
    %679 = vmatmul.mubr.bf16.gmra.mrb[0].mxu0 %v644
    %v680 = vpop.f32.mrb[0].mxu0
    %v681 = vadd.f32 %v245, %v680
    %v682 = vpop.f32.mrb[0].mxu0
    %v683 = vadd.f32 %v249, %v682
    %v684 = vpop.f32.mrb[0].mxu0
    %v685 = vpop.f32.mrb[0].mxu0
    %686 = vdwg.mxu0
    %v688 = vrot.slane %v681, 6
    %v689 = vrot.slane %v681, 7
    %v692 = vadd.f32 %v224, %v688
    %v693 = vadd.f32 %v228, %v689
    %v694 = vxor.u32 %v692, 2147483648
    %v695 = vxor.u32 %v693, 2147483648
    %v696 = vmul.f32 %v694, 1.442695
    %v697 = vpow.pop %v696
    %v698 = vmul.f32 %v695, 1.442695
    %v699 = vpow.pop %v698
    %v700 = vadd.f32 %v697, 1.0
    %v701 = vadd.f32 %v699, 1.0
    %v702 = vrcp.pop %v700
    %v703 = vmul.f32 1.0, %v702
    %v704 = vrcp.pop %v701
    %v705 = vmul.f32 1.0, %v704
    %706 = vrot.lane.b32.xlu0 %v688, 64
    %v707 = vpop.permute.xlu0 %706
    %708 = vrot.lane.b32.xlu0 %v689, 64
    %v709 = vpop.permute.xlu0 %708
    %v712 = vmul.f32 %v703, %v707
    %v713 = vmul.f32 %v705, %v709
    %716 = vrot.lane.b32.xlu0 %v712, 64
    %v717 = vpop.permute.xlu0 %716
    %718 = vrot.lane.b32.xlu0 %v713, 64
    %v719 = vpop.permute.xlu0 %718
    %v722 = vadd.f32 %v224, %v717
    %v723 = vadd.f32 %v228, %v719
    %v724 = vtanh.pop %v722
    %v725 = vtanh.pop %v723
    %v726 = vsub.f32 1.0, %v703
    %v727 = vsub.f32 1.0, %v705
    %730 = vrot.lane.b32.xlu0 %v724, 96
    %v731 = vpop.permute.xlu0 %730
    %732 = vrot.lane.b32.xlu0 %v725, 96
    %v733 = vpop.permute.xlu0 %732
    %v736 = vmul.f32 %v726, %v731
    %v737 = vmul.f32 %v727, %v733
    %v738 = vrot.slane %v539, 7
    %v741 = vmul.f32 %v703, %v738
    %v742 = vmul.f32 %v705, %v620
    %v743 = vadd.f32 %v736, %v741
    %v744 = vadd.f32 %v737, %v742
    %v745 = vrot.slane %v681, 3
    %v746 = vrot.slane %v681, 4
    %v749 = vadd.f32 %v224, %v745
    %v750 = vadd.f32 %v228, %v746
    %v751 = vxor.u32 %v749, 2147483648
    %v752 = vxor.u32 %v750, 2147483648
    %v753 = vmul.f32 %v751, 1.442695
    %v754 = vpow.pop %v753
    %v755 = vmul.f32 %v752, 1.442695
    %v756 = vpow.pop %v755
    %v757 = vadd.f32 %v754, 1.0
    %v758 = vadd.f32 %v756, 1.0
    %v759 = vrcp.pop %v757
    %v760 = vmul.f32 1.0, %v759
    %v761 = vrcp.pop %v758
    %v762 = vmul.f32 1.0, %v761
    %v764 = vrot.slane %v683, 3
    %v765 = vrot.slane %v683, 4
    %v768 = vadd.f32 %v226, %v764
    %v769 = vadd.f32 %v230, %v765
    %v770 = vxor.u32 %v768, 2147483648
    %v771 = vxor.u32 %v769, 2147483648
    %v772 = vmul.f32 %v770, 1.442695
    %v773 = vpow.pop %v772
    %v774 = vmul.f32 %v771, 1.442695
    %v775 = vpow.pop %v774
    %v776 = vadd.f32 %v773, 1.0
    %v777 = vadd.f32 %v775, 1.0
    %v778 = vrcp.pop %v776
    %v779 = vmul.f32 1.0, %v778
    %v780 = vrcp.pop %v777
    %v781 = vmul.f32 1.0, %v780
    %782 = vrot.lane.b32.xlu0 %v764, 64
    %v783 = vpop.permute.xlu0 %782
    %784 = vrot.lane.b32.xlu0 %v765, 64
    %v785 = vpop.permute.xlu0 %784
    %v788 = vmul.f32 %v760, %v783
    %v789 = vmul.f32 %v762, %v785
    %792 = vrot.lane.b32.xlu0 %v788, 64
    %v793 = vpop.permute.xlu0 %792
    %794 = vrot.lane.b32.xlu0 %v789, 64
    %v795 = vpop.permute.xlu0 %794
    %v798 = vadd.f32 %v226, %v793
    %v799 = vadd.f32 %v230, %v795
    %v800 = vtanh.pop %v798
    %v801 = vtanh.pop %v799
    %v802 = vsub.f32 1.0, %v779
    %v803 = vsub.f32 1.0, %v781
    %806 = vrot.lane.b32.xlu0 %v800, 96
    %v807 = vpop.permute.xlu0 %806
    %808 = vrot.lane.b32.xlu0 %v801, 96
    %v809 = vpop.permute.xlu0 %808
    %v812 = vmul.f32 %v802, %v807
    %v813 = vmul.f32 %v803, %v809
    %v814 = vrot.slane %v616, 1
    %v815 = vrot.slane %v617, 1
    %v818 = vmul.f32 %v779, %v814
    %v819 = vmul.f32 %v781, %v815
    %v820 = vadd.f32 %v812, %v818
    %v821 = vadd.f32 %v813, %v819
    %v824 = vrot.slane %v744, 7
    %vm825 = vcmask 1043459
    %v826 = vsel %vm825, %v824, %v743
    %827 = vrot.lane.b32.xlu0 %v826, 96
    %v828 = vpop.permute.xlu0 %827
    %v832 = vrot.slane %v820, 3
    %v833 = vrot.slane %v821, 2
    %v834 = vsel %vm825, %v833, %v832
    %835 = vrot.lane.b32.xlu0 %v834, 32
    %v836 = vpop.permute.xlu0 %835
    %v838 = vsel %vm87, %v828, %v836
    %v839 = vpack.c.bf16 %v838, %v838
    %v841 = vrot.slane %v839, 1
    %v843 = vsel %vm252, %v841, 0
    %845 = vmatprep.subr.bf16.mxu0 %v233
    %846 = vmatpush1.bf16.msra.mxu0 %v232
    %847 = vmatprep.subr.bf16.mxu0 %v235
    %848 = vmatpush1.bf16.msra.mxu0 %v234
    %849 = vmatprep.subr.bf16.mxu0 %v237
    %850 = vmatpush1.bf16.msra.mxu0 %v236
    %851 = vmatprep.subr.bf16.mxu0 %v239
    %852 = vmatpush1.bf16.msra.mxu0 %v238
    %853 = vmatprep.subr.bf16.mxu0 0
    %854 = vmatpush1.bf16.msra.mxu0 0
    %855 = vmatprep.subr.bf16.mxu0 0
    %856 = vmatpush1.bf16.msra.mxu0 0
    %857 = vmatprep.subr.bf16.mxu0 0
    %858 = vmatpush1.bf16.msra.mxu0 0
    %859 = vmatprep.subr.bf16.mxu0 0
    %860 = vmatpush1.bf16.msra.mxu0 0
    %861 = vmatprep.subr.bf16.mxu0 0
    %862 = vmatpush1.bf16.msra.mxu0 0
    %863 = vmatprep.subr.bf16.mxu0 0
    %864 = vmatpush1.bf16.msra.mxu0 0
    %865 = vmatprep.subr.bf16.mxu0 0
    %866 = vmatpush1.bf16.msra.mxu0 0
    %867 = vmatprep.subr.bf16.mxu0 0
    %868 = vmatpush1.bf16.msra.mxu0 0
    %869 = vmatprep.subr.bf16.mxu0 0
    %870 = vmatpush1.bf16.msra.mxu0 0
    %871 = vmatprep.subr.bf16.mxu0 0
    %872 = vmatpush1.bf16.msra.mxu0 0
    %873 = vmatprep.subr.bf16.mxu0 0
    %874 = vmatpush1.bf16.msra.mxu0 0
    %875 = vmatprep.subr.bf16.mxu0 0
    %876 = vmatpush1.bf16.msra.mxu0 0
    %877 = vmatprep.mubr.bf16.mxu0 0
    %878 = vmatmul.mubr.bf16.gmra.mrb[0].mxu0 %v843
    %v879 = vpop.f32.mrb[0].mxu0
    %v880 = vadd.f32 %v245, %v879
    %v881 = vpop.f32.mrb[0].mxu0
    %v882 = vadd.f32 %v249, %v881
    %v883 = vpop.f32.mrb[0].mxu0
    %v884 = vpop.f32.mrb[0].mxu0
    %885 = vdwg.mxu0
    %v887 = vrot.slane %v880, 5
    %v888 = vrot.slane %v880, 6
    %v891 = vadd.f32 %v224, %v887
    %v892 = vadd.f32 %v228, %v888
    %v893 = vxor.u32 %v891, 2147483648
    %v894 = vxor.u32 %v892, 2147483648
    %v895 = vmul.f32 %v893, 1.442695
    %v896 = vpow.pop %v895
    %v897 = vmul.f32 %v894, 1.442695
    %v898 = vpow.pop %v897
    %v899 = vadd.f32 %v896, 1.0
    %v900 = vadd.f32 %v898, 1.0
    %v901 = vrcp.pop %v899
    %v902 = vmul.f32 1.0, %v901
    %v903 = vrcp.pop %v900
    %v904 = vmul.f32 1.0, %v903
    %905 = vrot.lane.b32.xlu0 %v887, 64
    %v906 = vpop.permute.xlu0 %905
    %907 = vrot.lane.b32.xlu0 %v888, 64
    %v908 = vpop.permute.xlu0 %907
    %v911 = vmul.f32 %v902, %v906
    %v912 = vmul.f32 %v904, %v908
    %915 = vrot.lane.b32.xlu0 %v911, 64
    %v916 = vpop.permute.xlu0 %915
    %917 = vrot.lane.b32.xlu0 %v912, 64
    %v918 = vpop.permute.xlu0 %917
    %v921 = vadd.f32 %v224, %v916
    %v922 = vadd.f32 %v228, %v918
    %v923 = vtanh.pop %v921
    %v924 = vtanh.pop %v922
    %v925 = vsub.f32 1.0, %v902
    %v926 = vsub.f32 1.0, %v904
    %929 = vrot.lane.b32.xlu0 %v923, 96
    %v930 = vpop.permute.xlu0 %929
    %931 = vrot.lane.b32.xlu0 %v924, 96
    %v932 = vpop.permute.xlu0 %931
    %v935 = vmul.f32 %v925, %v930
    %v936 = vmul.f32 %v926, %v932
    %v937 = vrot.slane %v743, 7
    %v940 = vmul.f32 %v902, %v937
    %v941 = vmul.f32 %v904, %v824
    %v942 = vadd.f32 %v935, %v940
    %v943 = vadd.f32 %v936, %v941
    %v944 = vrot.slane %v880, 4
    %v946 = vadd.f32 %v224, %v944
    %v947 = vadd.f32 %v228, %v887
    %v948 = vxor.u32 %v946, 2147483648
    %v949 = vxor.u32 %v947, 2147483648
    %v950 = vmul.f32 %v948, 1.442695
    %v951 = vpow.pop %v950
    %v952 = vmul.f32 %v949, 1.442695
    %v953 = vpow.pop %v952
    %v954 = vadd.f32 %v951, 1.0
    %v955 = vadd.f32 %v953, 1.0
    %v956 = vrcp.pop %v954
    %v957 = vmul.f32 1.0, %v956
    %v958 = vrcp.pop %v955
    %v959 = vmul.f32 1.0, %v958
    %v961 = vrot.slane %v882, 4
    %v962 = vrot.slane %v882, 5
    %v965 = vadd.f32 %v226, %v961
    %v966 = vadd.f32 %v230, %v962
    %v967 = vxor.u32 %v965, 2147483648
    %v968 = vxor.u32 %v966, 2147483648
    %v969 = vmul.f32 %v967, 1.442695
    %v970 = vpow.pop %v969
    %v971 = vmul.f32 %v968, 1.442695
    %v972 = vpow.pop %v971
    %v973 = vadd.f32 %v970, 1.0
    %v974 = vadd.f32 %v972, 1.0
    %v975 = vrcp.pop %v973
    %v976 = vmul.f32 1.0, %v975
    %v977 = vrcp.pop %v974
    %v978 = vmul.f32 1.0, %v977
    %979 = vrot.lane.b32.xlu0 %v961, 64
    %v980 = vpop.permute.xlu0 %979
    %981 = vrot.lane.b32.xlu0 %v962, 64
    %v982 = vpop.permute.xlu0 %981
    %v985 = vmul.f32 %v957, %v980
    %v986 = vmul.f32 %v959, %v982
    %989 = vrot.lane.b32.xlu0 %v985, 64
    %v990 = vpop.permute.xlu0 %989
    %991 = vrot.lane.b32.xlu0 %v986, 64
    %v992 = vpop.permute.xlu0 %991
    %v995 = vadd.f32 %v226, %v990
    %v996 = vadd.f32 %v230, %v992
    %v997 = vtanh.pop %v995
    %v998 = vtanh.pop %v996
    %v999 = vsub.f32 1.0, %v976
    %v1000 = vsub.f32 1.0, %v978
    %1003 = vrot.lane.b32.xlu0 %v997, 96
    %v1004 = vpop.permute.xlu0 %1003
    %1005 = vrot.lane.b32.xlu0 %v998, 96
    %v1006 = vpop.permute.xlu0 %1005
    %v1009 = vmul.f32 %v999, %v1004
    %v1010 = vmul.f32 %v1000, %v1006
    %v1011 = vrot.slane %v820, 1
    %v1012 = vrot.slane %v821, 1
    %v1015 = vmul.f32 %v976, %v1011
    %v1016 = vmul.f32 %v978, %v1012
    %v1017 = vadd.f32 %v1009, %v1015
    %v1018 = vadd.f32 %v1010, %v1016
    %v1021 = vrot.slane %v943, 7
    %vm1022 = vcmask 1044484
    %v1023 = vsel %vm1022, %v1021, %v942
    %1024 = vrot.lane.b32.xlu0 %v1023, 96
    %v1025 = vpop.permute.xlu0 %1024
    %v1029 = vrot.slane %v1017, 1
    %v1030 = vsel %vm1022, %v1018, %v1029
    %1031 = vrot.lane.b32.xlu0 %v1030, 32
    %v1032 = vpop.permute.xlu0 %1031
    %v1034 = vsel %vm87, %v1025, %v1032
    %v1035 = vpack.c.bf16 %v1034, %v1034
    %v1037 = vshrl.u32 %v1035, 16
    %v1039 = vrot.slane %v1037, 1
    %v1040 = vshll.u32 %v1035, 16
    %v1042 = vrot.slane %v1040, 2
    %v1043 = vor.u32 %v1039, %v1042
    %v1045 = vsel %vm252, %v1043, 0
    %1047 = vmatprep.subr.bf16.mxu0 %v233
    %1048 = vmatpush1.bf16.msra.mxu0 %v232
    %1049 = vmatprep.subr.bf16.mxu0 %v235
    %1050 = vmatpush1.bf16.msra.mxu0 %v234
    %1051 = vmatprep.subr.bf16.mxu0 %v237
    %1052 = vmatpush1.bf16.msra.mxu0 %v236
    %1053 = vmatprep.subr.bf16.mxu0 %v239
    %1054 = vmatpush1.bf16.msra.mxu0 %v238
    %1055 = vmatprep.subr.bf16.mxu0 0
    %1056 = vmatpush1.bf16.msra.mxu0 0
    %1057 = vmatprep.subr.bf16.mxu0 0
    %1058 = vmatpush1.bf16.msra.mxu0 0
    %1059 = vmatprep.subr.bf16.mxu0 0
    %1060 = vmatpush1.bf16.msra.mxu0 0
    %1061 = vmatprep.subr.bf16.mxu0 0
    %1062 = vmatpush1.bf16.msra.mxu0 0
    %1063 = vmatprep.subr.bf16.mxu0 0
    %1064 = vmatpush1.bf16.msra.mxu0 0
    %1065 = vmatprep.subr.bf16.mxu0 0
    %1066 = vmatpush1.bf16.msra.mxu0 0
    %1067 = vmatprep.subr.bf16.mxu0 0
    %1068 = vmatpush1.bf16.msra.mxu0 0
    %1069 = vmatprep.subr.bf16.mxu0 0
    %1070 = vmatpush1.bf16.msra.mxu0 0
    %1071 = vmatprep.subr.bf16.mxu0 0
    %1072 = vmatpush1.bf16.msra.mxu0 0
    %1073 = vmatprep.subr.bf16.mxu0 0
    %1074 = vmatpush1.bf16.msra.mxu0 0
    %1075 = vmatprep.subr.bf16.mxu0 0
    %1076 = vmatpush1.bf16.msra.mxu0 0
    %1077 = vmatprep.subr.bf16.mxu0 0
    %1078 = vmatpush1.bf16.msra.mxu0 0
    %1079 = vmatprep.mubr.bf16.mxu0 0
    %1080 = vmatmul.mubr.bf16.gmra.mrb[0].mxu0 %v1045
    %v1081 = vpop.f32.mrb[0].mxu0
    %v1082 = vadd.f32 %v245, %v1081
    %v1083 = vpop.f32.mrb[0].mxu0
    %v1084 = vadd.f32 %v249, %v1083
    %v1085 = vpop.f32.mrb[0].mxu0
    %v1086 = vpop.f32.mrb[0].mxu0
    %1087 = vdwg.mxu0
    %v1089 = vrot.slane %v1082, 4
    %v1090 = vrot.slane %v1082, 5
    %v1093 = vadd.f32 %v224, %v1089
    %v1094 = vadd.f32 %v228, %v1090
    %v1095 = vxor.u32 %v1093, 2147483648
    %v1096 = vxor.u32 %v1094, 2147483648
    %v1097 = vmul.f32 %v1095, 1.442695
    %v1098 = vpow.pop %v1097
    %v1099 = vmul.f32 %v1096, 1.442695
    %v1100 = vpow.pop %v1099
    %v1101 = vadd.f32 %v1098, 1.0
    %v1102 = vadd.f32 %v1100, 1.0
    %v1103 = vrcp.pop %v1101
    %v1104 = vmul.f32 1.0, %v1103
    %v1105 = vrcp.pop %v1102
    %v1106 = vmul.f32 1.0, %v1105
    %1107 = vrot.lane.b32.xlu0 %v1089, 64
    %v1108 = vpop.permute.xlu0 %1107
    %1109 = vrot.lane.b32.xlu0 %v1090, 64
    %v1110 = vpop.permute.xlu0 %1109
    %v1113 = vmul.f32 %v1104, %v1108
    %v1114 = vmul.f32 %v1106, %v1110
    %1117 = vrot.lane.b32.xlu0 %v1113, 64
    %v1118 = vpop.permute.xlu0 %1117
    %1119 = vrot.lane.b32.xlu0 %v1114, 64
    %v1120 = vpop.permute.xlu0 %1119
    %v1123 = vadd.f32 %v224, %v1118
    %v1124 = vadd.f32 %v228, %v1120
    %v1125 = vtanh.pop %v1123
    %v1126 = vtanh.pop %v1124
    %v1127 = vsub.f32 1.0, %v1104
    %v1128 = vsub.f32 1.0, %v1106
    %1131 = vrot.lane.b32.xlu0 %v1125, 96
    %v1132 = vpop.permute.xlu0 %1131
    %1133 = vrot.lane.b32.xlu0 %v1126, 96
    %v1134 = vpop.permute.xlu0 %1133
    %v1137 = vmul.f32 %v1127, %v1132
    %v1138 = vmul.f32 %v1128, %v1134
    %v1139 = vrot.slane %v942, 7
    %v1142 = vmul.f32 %v1104, %v1139
    %v1143 = vmul.f32 %v1106, %v1021
    %v1144 = vadd.f32 %v1137, %v1142
    %v1145 = vadd.f32 %v1138, %v1143
    %v1146 = vrot.slane %v1082, 6
    %v1148 = vadd.f32 %v224, %v1090
    %v1149 = vadd.f32 %v228, %v1146
    %v1150 = vxor.u32 %v1148, 2147483648
    %v1151 = vxor.u32 %v1149, 2147483648
    %v1152 = vmul.f32 %v1150, 1.442695
    %v1153 = vpow.pop %v1152
    %v1154 = vmul.f32 %v1151, 1.442695
    %v1155 = vpow.pop %v1154
    %v1156 = vadd.f32 %v1153, 1.0
    %v1157 = vadd.f32 %v1155, 1.0
    %v1158 = vrcp.pop %v1156
    %v1159 = vmul.f32 1.0, %v1158
    %v1160 = vrcp.pop %v1157
    %v1161 = vmul.f32 1.0, %v1160
    %v1163 = vrot.slane %v1084, 5
    %v1164 = vrot.slane %v1084, 6
    %v1167 = vadd.f32 %v226, %v1163
    %v1168 = vadd.f32 %v230, %v1164
    %v1169 = vxor.u32 %v1167, 2147483648
    %v1170 = vxor.u32 %v1168, 2147483648
    %v1171 = vmul.f32 %v1169, 1.442695
    %v1172 = vpow.pop %v1171
    %v1173 = vmul.f32 %v1170, 1.442695
    %v1174 = vpow.pop %v1173
    %v1175 = vadd.f32 %v1172, 1.0
    %v1176 = vadd.f32 %v1174, 1.0
    %v1177 = vrcp.pop %v1175
    %v1178 = vmul.f32 1.0, %v1177
    %v1179 = vrcp.pop %v1176
    %v1180 = vmul.f32 1.0, %v1179
    %1181 = vrot.lane.b32.xlu0 %v1163, 64
    %v1182 = vpop.permute.xlu0 %1181
    %1183 = vrot.lane.b32.xlu0 %v1164, 64
    %v1184 = vpop.permute.xlu0 %1183
    %v1187 = vmul.f32 %v1159, %v1182
    %v1188 = vmul.f32 %v1161, %v1184
    %1191 = vrot.lane.b32.xlu0 %v1187, 64
    %v1192 = vpop.permute.xlu0 %1191
    %1193 = vrot.lane.b32.xlu0 %v1188, 64
    %v1194 = vpop.permute.xlu0 %1193
    %v1197 = vadd.f32 %v226, %v1192
    %v1198 = vadd.f32 %v230, %v1194
    %v1199 = vtanh.pop %v1197
    %v1200 = vtanh.pop %v1198
    %v1201 = vsub.f32 1.0, %v1178
    %v1202 = vsub.f32 1.0, %v1180
    %1205 = vrot.lane.b32.xlu0 %v1199, 96
    %v1206 = vpop.permute.xlu0 %1205
    %1207 = vrot.lane.b32.xlu0 %v1200, 96
    %v1208 = vpop.permute.xlu0 %1207
    %v1211 = vmul.f32 %v1201, %v1206
    %v1212 = vmul.f32 %v1202, %v1208
    %v1213 = vrot.slane %v1018, 1
    %v1216 = vmul.f32 %v1178, %v1029
    %v1217 = vmul.f32 %v1180, %v1213
    %v1218 = vadd.f32 %v1211, %v1216
    %v1219 = vadd.f32 %v1212, %v1217
    %v1222 = vrot.slane %v1145, 7
    %vm1223 = vcmask 1045509
    %v1224 = vsel %vm1223, %v1222, %v1144
    %1225 = vrot.lane.b32.xlu0 %v1224, 96
    %v1226 = vpop.permute.xlu0 %1225
    %v1230 = vrot.slane %v1218, 7
    %v1231 = vrot.slane %v1219, 6
    %v1232 = vsel %vm1223, %v1231, %v1230
    %1233 = vrot.lane.b32.xlu0 %v1232, 32
    %v1234 = vpop.permute.xlu0 %1233
    %v1236 = vsel %vm87, %v1226, %v1234
    %v1237 = vpack.c.bf16 %v1236, %v1236
    %v1239 = vrot.slane %v1237, 2
    %v1241 = vsel %vm252, %v1239, 0
    %1243 = vmatprep.subr.bf16.mxu0 %v233
    %1244 = vmatpush1.bf16.msra.mxu0 %v232
    %1245 = vmatprep.subr.bf16.mxu0 %v235
    %1246 = vmatpush1.bf16.msra.mxu0 %v234
    %1247 = vmatprep.subr.bf16.mxu0 %v237
    %1248 = vmatpush1.bf16.msra.mxu0 %v236
    %1249 = vmatprep.subr.bf16.mxu0 %v239
    %1250 = vmatpush1.bf16.msra.mxu0 %v238
    %1251 = vmatprep.subr.bf16.mxu0 0
    %1252 = vmatpush1.bf16.msra.mxu0 0
    %1253 = vmatprep.subr.bf16.mxu0 0
    %1254 = vmatpush1.bf16.msra.mxu0 0
    %1255 = vmatprep.subr.bf16.mxu0 0
    %1256 = vmatpush1.bf16.msra.mxu0 0
    %1257 = vmatprep.subr.bf16.mxu0 0
    %1258 = vmatpush1.bf16.msra.mxu0 0
    %1259 = vmatprep.subr.bf16.mxu0 0
    %1260 = vmatpush1.bf16.msra.mxu0 0
    %1261 = vmatprep.subr.bf16.mxu0 0
    %1262 = vmatpush1.bf16.msra.mxu0 0
    %1263 = vmatprep.subr.bf16.mxu0 0
    %1264 = vmatpush1.bf16.msra.mxu0 0
    %1265 = vmatprep.subr.bf16.mxu0 0
    %1266 = vmatpush1.bf16.msra.mxu0 0
    %1267 = vmatprep.subr.bf16.mxu0 0
    %1268 = vmatpush1.bf16.msra.mxu0 0
    %1269 = vmatprep.subr.bf16.mxu0 0
    %1270 = vmatpush1.bf16.msra.mxu0 0
    %1271 = vmatprep.subr.bf16.mxu0 0
    %1272 = vmatpush1.bf16.msra.mxu0 0
    %1273 = vmatprep.subr.bf16.mxu0 0
    %1274 = vmatpush1.bf16.msra.mxu0 0
    %1275 = vmatprep.mubr.bf16.mxu0 0
    %1276 = vmatmul.mubr.bf16.gmra.mrb[0].mxu0 %v1241
    %v1277 = vpop.f32.mrb[0].mxu0
    %v1278 = vadd.f32 %v245, %v1277
    %v1279 = vpop.f32.mrb[0].mxu0
    %v1280 = vadd.f32 %v249, %v1279
    %v1281 = vpop.f32.mrb[0].mxu0
    %v1282 = vpop.f32.mrb[0].mxu0
    %1283 = vdwg.mxu0
    %v1285 = vrot.slane %v1278, 3
    %v1286 = vrot.slane %v1278, 4
    %v1289 = vadd.f32 %v224, %v1285
    %v1290 = vadd.f32 %v228, %v1286
    %v1291 = vxor.u32 %v1289, 2147483648
    %v1292 = vxor.u32 %v1290, 2147483648
    %v1293 = vmul.f32 %v1291, 1.442695
    %v1294 = vpow.pop %v1293
    %v1295 = vmul.f32 %v1292, 1.442695
    %v1296 = vpow.pop %v1295
    %v1297 = vadd.f32 %v1294, 1.0
    %v1298 = vadd.f32 %v1296, 1.0
    %v1299 = vrcp.pop %v1297
    %v1300 = vmul.f32 1.0, %v1299
    %v1301 = vrcp.pop %v1298
    %v1302 = vmul.f32 1.0, %v1301
    %1303 = vrot.lane.b32.xlu0 %v1285, 64
    %v1304 = vpop.permute.xlu0 %1303
    %1305 = vrot.lane.b32.xlu0 %v1286, 64
    %v1306 = vpop.permute.xlu0 %1305
    %v1309 = vmul.f32 %v1300, %v1304
    %v1310 = vmul.f32 %v1302, %v1306
    %1313 = vrot.lane.b32.xlu0 %v1309, 64
    %v1314 = vpop.permute.xlu0 %1313
    %1315 = vrot.lane.b32.xlu0 %v1310, 64
    %v1316 = vpop.permute.xlu0 %1315
    %v1319 = vadd.f32 %v224, %v1314
    %v1320 = vadd.f32 %v228, %v1316
    %v1321 = vtanh.pop %v1319
    %v1322 = vtanh.pop %v1320
    %v1323 = vsub.f32 1.0, %v1300
    %v1324 = vsub.f32 1.0, %v1302
    %1327 = vrot.lane.b32.xlu0 %v1321, 96
    %v1328 = vpop.permute.xlu0 %1327
    %1329 = vrot.lane.b32.xlu0 %v1322, 96
    %v1330 = vpop.permute.xlu0 %1329
    %v1333 = vmul.f32 %v1323, %v1328
    %v1334 = vmul.f32 %v1324, %v1330
    %v1335 = vrot.slane %v1144, 7
    %v1338 = vmul.f32 %v1300, %v1335
    %v1339 = vmul.f32 %v1302, %v1222
    %v1340 = vadd.f32 %v1333, %v1338
    %v1341 = vadd.f32 %v1334, %v1339
    %v1342 = vrot.slane %v1278, 6
    %v1343 = vrot.slane %v1278, 7
    %v1346 = vadd.f32 %v224, %v1342
    %v1347 = vadd.f32 %v228, %v1343
    %v1348 = vxor.u32 %v1346, 2147483648
    %v1349 = vxor.u32 %v1347, 2147483648
    %v1350 = vmul.f32 %v1348, 1.442695
    %v1351 = vpow.pop %v1350
    %v1352 = vmul.f32 %v1349, 1.442695
    %v1353 = vpow.pop %v1352
    %v1354 = vadd.f32 %v1351, 1.0
    %v1355 = vadd.f32 %v1353, 1.0
    %v1356 = vrcp.pop %v1354
    %v1357 = vmul.f32 1.0, %v1356
    %v1358 = vrcp.pop %v1355
    %v1359 = vmul.f32 1.0, %v1358
    %v1361 = vrot.slane %v1280, 6
    %v1362 = vrot.slane %v1280, 7
    %v1365 = vadd.f32 %v226, %v1361
    %v1366 = vadd.f32 %v230, %v1362
    %v1367 = vxor.u32 %v1365, 2147483648
    %v1368 = vxor.u32 %v1366, 2147483648
    %v1369 = vmul.f32 %v1367, 1.442695
    %v1370 = vpow.pop %v1369
    %v1371 = vmul.f32 %v1368, 1.442695
    %v1372 = vpow.pop %v1371
    %v1373 = vadd.f32 %v1370, 1.0
    %v1374 = vadd.f32 %v1372, 1.0
    %v1375 = vrcp.pop %v1373
    %v1376 = vmul.f32 1.0, %v1375
    %v1377 = vrcp.pop %v1374
    %v1378 = vmul.f32 1.0, %v1377
    %1379 = vrot.lane.b32.xlu0 %v1361, 64
    %v1380 = vpop.permute.xlu0 %1379
    %1381 = vrot.lane.b32.xlu0 %v1362, 64
    %v1382 = vpop.permute.xlu0 %1381
    %v1385 = vmul.f32 %v1357, %v1380
    %v1386 = vmul.f32 %v1359, %v1382
    %1389 = vrot.lane.b32.xlu0 %v1385, 64
    %v1390 = vpop.permute.xlu0 %1389
    %1391 = vrot.lane.b32.xlu0 %v1386, 64
    %v1392 = vpop.permute.xlu0 %1391
    %v1395 = vadd.f32 %v226, %v1390
    %v1396 = vadd.f32 %v230, %v1392
    %v1397 = vtanh.pop %v1395
    %v1398 = vtanh.pop %v1396
    %v1399 = vsub.f32 1.0, %v1376
    %v1400 = vsub.f32 1.0, %v1378
    %1403 = vrot.lane.b32.xlu0 %v1397, 96
    %v1404 = vpop.permute.xlu0 %1403
    %1405 = vrot.lane.b32.xlu0 %v1398, 96
    %v1406 = vpop.permute.xlu0 %1405
    %v1409 = vmul.f32 %v1399, %v1404
    %v1410 = vmul.f32 %v1400, %v1406
    %v1411 = vrot.slane %v1218, 1
    %v1412 = vrot.slane %v1219, 1
    %v1415 = vmul.f32 %v1376, %v1411
    %v1416 = vmul.f32 %v1378, %v1412
    %v1417 = vadd.f32 %v1409, %v1415
    %v1418 = vadd.f32 %v1410, %v1416
    %v1421 = vrot.slane %v1341, 7
    %vm1422 = vcmask 1046534
    %v1423 = vsel %vm1422, %v1421, %v1340
    %1424 = vrot.lane.b32.xlu0 %v1423, 96
    %v1425 = vpop.permute.xlu0 %1424
    %v1429 = vrot.slane %v1417, 5
    %v1430 = vrot.slane %v1418, 4
    %v1431 = vsel %vm1422, %v1430, %v1429
    %1432 = vrot.lane.b32.xlu0 %v1431, 32
    %v1433 = vpop.permute.xlu0 %1432
    %v1435 = vsel %vm87, %v1425, %v1433
    %v1436 = vpack.c.bf16 %v1435, %v1435
    %v1438 = vshrl.u32 %v1436, 16
    %v1440 = vrot.slane %v1438, 2
    %v1441 = vshll.u32 %v1436, 16
    %v1443 = vrot.slane %v1441, 3
    %v1444 = vor.u32 %v1440, %v1443
    %v1446 = vsel %vm252, %v1444, 0
    %1448 = vmatprep.subr.bf16.mxu0 %v233
    %1449 = vmatpush1.bf16.msra.mxu0 %v232
    %1450 = vmatprep.subr.bf16.mxu0 %v235
    %1451 = vmatpush1.bf16.msra.mxu0 %v234
    %1452 = vmatprep.subr.bf16.mxu0 %v237
    %1453 = vmatpush1.bf16.msra.mxu0 %v236
    %1454 = vmatprep.subr.bf16.mxu0 %v239
    %1455 = vmatpush1.bf16.msra.mxu0 %v238
    %1456 = vmatprep.subr.bf16.mxu0 0
    %1457 = vmatpush1.bf16.msra.mxu0 0
    %1458 = vmatprep.subr.bf16.mxu0 0
    %1459 = vmatpush1.bf16.msra.mxu0 0
    %1460 = vmatprep.subr.bf16.mxu0 0
    %1461 = vmatpush1.bf16.msra.mxu0 0
    %1462 = vmatprep.subr.bf16.mxu0 0
    %1463 = vmatpush1.bf16.msra.mxu0 0
    %1464 = vmatprep.subr.bf16.mxu0 0
    %1465 = vmatpush1.bf16.msra.mxu0 0
    %1466 = vmatprep.subr.bf16.mxu0 0
    %1467 = vmatpush1.bf16.msra.mxu0 0
    %1468 = vmatprep.subr.bf16.mxu0 0
    %1469 = vmatpush1.bf16.msra.mxu0 0
    %1470 = vmatprep.subr.bf16.mxu0 0
    %1471 = vmatpush1.bf16.msra.mxu0 0
    %1472 = vmatprep.subr.bf16.mxu0 0
    %1473 = vmatpush1.bf16.msra.mxu0 0
    %1474 = vmatprep.subr.bf16.mxu0 0
    %1475 = vmatpush1.bf16.msra.mxu0 0
    %1476 = vmatprep.subr.bf16.mxu0 0
    %1477 = vmatpush1.bf16.msra.mxu0 0
    %1478 = vmatprep.subr.bf16.mxu0 0
    %1479 = vmatpush1.bf16.msra.mxu0 0
    %1480 = vmatprep.mubr.bf16.mxu0 0
    %1481 = vmatmul.mubr.bf16.gmra.mrb[0].mxu0 %v1446
    %v1482 = vpop.f32.mrb[0].mxu0
    %v1483 = vadd.f32 %v245, %v1482
    %v1484 = vpop.f32.mrb[0].mxu0
    %v1485 = vadd.f32 %v249, %v1484
    %v1486 = vpop.f32.mrb[0].mxu0
    %v1487 = vpop.f32.mrb[0].mxu0
    %1488 = vdwg.mxu0
    %v1490 = vrot.slane %v1483, 2
    %v1491 = vrot.slane %v1483, 3
    %v1494 = vadd.f32 %v224, %v1490
    %v1495 = vadd.f32 %v228, %v1491
    %v1496 = vxor.u32 %v1494, 2147483648
    %v1497 = vxor.u32 %v1495, 2147483648
    %v1498 = vmul.f32 %v1496, 1.442695
    %v1499 = vpow.pop %v1498
    %v1500 = vmul.f32 %v1497, 1.442695
    %v1501 = vpow.pop %v1500
    %v1502 = vadd.f32 %v1499, 1.0
    %v1503 = vadd.f32 %v1501, 1.0
    %v1504 = vrcp.pop %v1502
    %v1505 = vmul.f32 1.0, %v1504
    %v1506 = vrcp.pop %v1503
    %v1507 = vmul.f32 1.0, %v1506
    %1508 = vrot.lane.b32.xlu0 %v1490, 64
    %v1509 = vpop.permute.xlu0 %1508
    %1510 = vrot.lane.b32.xlu0 %v1491, 64
    %v1511 = vpop.permute.xlu0 %1510
    %v1514 = vmul.f32 %v1505, %v1509
    %v1515 = vmul.f32 %v1507, %v1511
    %1518 = vrot.lane.b32.xlu0 %v1514, 64
    %v1519 = vpop.permute.xlu0 %1518
    %1520 = vrot.lane.b32.xlu0 %v1515, 64
    %v1521 = vpop.permute.xlu0 %1520
    %v1524 = vadd.f32 %v224, %v1519
    %v1525 = vadd.f32 %v228, %v1521
    %v1526 = vtanh.pop %v1524
    %v1527 = vtanh.pop %v1525
    %v1528 = vsub.f32 1.0, %v1505
    %v1529 = vsub.f32 1.0, %v1507
    %1532 = vrot.lane.b32.xlu0 %v1526, 96
    %v1533 = vpop.permute.xlu0 %1532
    %1534 = vrot.lane.b32.xlu0 %v1527, 96
    %v1535 = vpop.permute.xlu0 %1534
    %v1538 = vmul.f32 %v1528, %v1533
    %v1539 = vmul.f32 %v1529, %v1535
    %v1540 = vrot.slane %v1340, 7
    %v1543 = vmul.f32 %v1505, %v1540
    %v1544 = vmul.f32 %v1507, %v1421
    %v1545 = vadd.f32 %v1538, %v1543
    %v1546 = vadd.f32 %v1539, %v1544
    %v1547 = vrot.slane %v1483, 7
    %v1550 = vadd.f32 %v224, %v1547
    %v1551 = vadd.f32 %v228, %v1483
    %v1552 = vxor.u32 %v1550, 2147483648
    %v1553 = vxor.u32 %v1551, 2147483648
    %v1554 = vmul.f32 %v1552, 1.442695
    %v1555 = vpow.pop %v1554
    %v1556 = vmul.f32 %v1553, 1.442695
    %v1557 = vpow.pop %v1556
    %v1558 = vadd.f32 %v1555, 1.0
    %v1559 = vadd.f32 %v1557, 1.0
    %v1560 = vrcp.pop %v1558
    %v1561 = vmul.f32 1.0, %v1560
    %v1562 = vrcp.pop %v1559
    %v1563 = vmul.f32 1.0, %v1562
    %v1565 = vrot.slane %v1485, 7
    %v1568 = vadd.f32 %v226, %v1565
    %v1569 = vadd.f32 %v230, %v1485
    %v1570 = vxor.u32 %v1568, 2147483648
    %v1571 = vxor.u32 %v1569, 2147483648
    %v1572 = vmul.f32 %v1570, 1.442695
    %v1573 = vpow.pop %v1572
    %v1574 = vmul.f32 %v1571, 1.442695
    %v1575 = vpow.pop %v1574
    %v1576 = vadd.f32 %v1573, 1.0
    %v1577 = vadd.f32 %v1575, 1.0
    %v1578 = vrcp.pop %v1576
    %v1579 = vmul.f32 1.0, %v1578
    %v1580 = vrcp.pop %v1577
    %v1581 = vmul.f32 1.0, %v1580
    %1582 = vrot.lane.b32.xlu0 %v1565, 64
    %v1583 = vpop.permute.xlu0 %1582
    %1584 = vrot.lane.b32.xlu0 %v1485, 64
    %v1585 = vpop.permute.xlu0 %1584
    %v1588 = vmul.f32 %v1561, %v1583
    %v1589 = vmul.f32 %v1563, %v1585
    %1592 = vrot.lane.b32.xlu0 %v1588, 64
    %v1593 = vpop.permute.xlu0 %1592
    %1594 = vrot.lane.b32.xlu0 %v1589, 64
    %v1595 = vpop.permute.xlu0 %1594
    %v1598 = vadd.f32 %v226, %v1593
    %v1599 = vadd.f32 %v230, %v1595
    %v1600 = vtanh.pop %v1598
    %v1601 = vtanh.pop %v1599
    %v1602 = vsub.f32 1.0, %v1579
    %v1603 = vsub.f32 1.0, %v1581
    %1606 = vrot.lane.b32.xlu0 %v1600, 96
    %v1607 = vpop.permute.xlu0 %1606
    %1608 = vrot.lane.b32.xlu0 %v1601, 96
    %v1609 = vpop.permute.xlu0 %1608
    %v1612 = vmul.f32 %v1602, %v1607
    %v1613 = vmul.f32 %v1603, %v1609
    %v1614 = vrot.slane %v1417, 1
    %v1615 = vrot.slane %v1418, 1
    %v1618 = vmul.f32 %v1579, %v1614
    %v1619 = vmul.f32 %v1581, %v1615
    %v1620 = vadd.f32 %v1612, %v1618
    %v1621 = vadd.f32 %v1613, %v1619
    %v1624 = vrot.slane %v1546, 7
    %vm1625 = vcmask 1047559
    %v1626 = vsel %vm1625, %v1624, %v1545
    %1627 = vrot.lane.b32.xlu0 %v1626, 96
    %v1628 = vpop.permute.xlu0 %1627
    %v1632 = vrot.slane %v1620, 3
    %v1633 = vrot.slane %v1621, 2
    %v1634 = vsel %vm1625, %v1633, %v1632
    %1635 = vrot.lane.b32.xlu0 %v1634, 32
    %v1636 = vpop.permute.xlu0 %1635
    %v1638 = vsel %vm87, %v1628, %v1636
    %v1639 = vpack.c.bf16 %v1638, %v1638
    %v1641 = vrot.slane %v1639, 3
    %v1643 = vsel %vm252, %v1641, 0
    %1645 = vmatprep.subr.bf16.mxu0 %v233
    %1646 = vmatpush1.bf16.msra.mxu0 %v232
    %1647 = vmatprep.subr.bf16.mxu0 %v235
    %1648 = vmatpush1.bf16.msra.mxu0 %v234
    %1649 = vmatprep.subr.bf16.mxu0 %v237
    %1650 = vmatpush1.bf16.msra.mxu0 %v236
    %1651 = vmatprep.subr.bf16.mxu0 %v239
    %1652 = vmatpush1.bf16.msra.mxu0 %v238
    %1653 = vmatprep.subr.bf16.mxu0 0
    %1654 = vmatpush1.bf16.msra.mxu0 0
    %1655 = vmatprep.subr.bf16.mxu0 0
    %1656 = vmatpush1.bf16.msra.mxu0 0
    %1657 = vmatprep.subr.bf16.mxu0 0
    %1658 = vmatpush1.bf16.msra.mxu0 0
    %1659 = vmatprep.subr.bf16.mxu0 0
    %1660 = vmatpush1.bf16.msra.mxu0 0
    %1661 = vmatprep.subr.bf16.mxu0 0
    %1662 = vmatpush1.bf16.msra.mxu0 0
    %1663 = vmatprep.subr.bf16.mxu0 0
    %1664 = vmatpush1.bf16.msra.mxu0 0
    %1665 = vmatprep.subr.bf16.mxu0 0
    %1666 = vmatpush1.bf16.msra.mxu0 0
    %1667 = vmatprep.subr.bf16.mxu0 0
    %1668 = vmatpush1.bf16.msra.mxu0 0
    %1669 = vmatprep.subr.bf16.mxu0 0
    %1670 = vmatpush1.bf16.msra.mxu0 0
    %1671 = vmatprep.subr.bf16.mxu0 0
    %1672 = vmatpush1.bf16.msra.mxu0 0
    %1673 = vmatprep.subr.bf16.mxu0 0
    %1674 = vmatpush1.bf16.msra.mxu0 0
    %1675 = vmatprep.subr.bf16.mxu0 0
    %1676 = vmatpush1.bf16.msra.mxu0 0
    %1677 = vmatprep.mubr.bf16.mxu0 0
    %1678 = vmatmul.mubr.bf16.gmra.mrb[0].mxu0 %v1643
    %v1679 = vpop.f32.mrb[0].mxu0
    %v1680 = vadd.f32 %v245, %v1679
    %v1681 = vpop.f32.mrb[0].mxu0
    %v1682 = vadd.f32 %v249, %v1681
    %v1683 = vpop.f32.mrb[0].mxu0
    %v1684 = vpop.f32.mrb[0].mxu0
    %1685 = vdwg.mxu0
    %v1687 = vrot.slane %v1680, 1
    %v1688 = vrot.slane %v1680, 2
    %v1691 = vadd.f32 %v224, %v1687
    %v1692 = vadd.f32 %v228, %v1688
    %v1693 = vxor.u32 %v1691, 2147483648
    %v1694 = vxor.u32 %v1692, 2147483648
    %v1695 = vmul.f32 %v1693, 1.442695
    %v1696 = vpow.pop %v1695
    %v1697 = vmul.f32 %v1694, 1.442695
    %v1698 = vpow.pop %v1697
    %v1699 = vadd.f32 %v1696, 1.0
    %v1700 = vadd.f32 %v1698, 1.0
    %v1701 = vrcp.pop %v1699
    %v1702 = vmul.f32 1.0, %v1701
    %v1703 = vrcp.pop %v1700
    %v1704 = vmul.f32 1.0, %v1703
    %1705 = vrot.lane.b32.xlu0 %v1687, 64
    %v1706 = vpop.permute.xlu0 %1705
    %1707 = vrot.lane.b32.xlu0 %v1688, 64
    %v1708 = vpop.permute.xlu0 %1707
    %v1711 = vmul.f32 %v1702, %v1706
    %v1712 = vmul.f32 %v1704, %v1708
    %1715 = vrot.lane.b32.xlu0 %v1711, 64
    %v1716 = vpop.permute.xlu0 %1715
    %1717 = vrot.lane.b32.xlu0 %v1712, 64
    %v1718 = vpop.permute.xlu0 %1717
    %v1721 = vadd.f32 %v224, %v1716
    %v1722 = vadd.f32 %v228, %v1718
    %v1723 = vtanh.pop %v1721
    %v1724 = vtanh.pop %v1722
    %v1725 = vsub.f32 1.0, %v1702
    %v1726 = vsub.f32 1.0, %v1704
    %1729 = vrot.lane.b32.xlu0 %v1723, 96
    %v1730 = vpop.permute.xlu0 %1729
    %1731 = vrot.lane.b32.xlu0 %v1724, 96
    %v1732 = vpop.permute.xlu0 %1731
    %v1735 = vmul.f32 %v1725, %v1730
    %v1736 = vmul.f32 %v1726, %v1732
    %v1737 = vrot.slane %v1545, 7
    %v1740 = vmul.f32 %v1702, %v1737
    %v1741 = vmul.f32 %v1704, %v1624
    %v1742 = vadd.f32 %v1735, %v1740
    %v1743 = vadd.f32 %v1736, %v1741
    %v1745 = vadd.f32 %v224, %v1680
    %v1746 = vadd.f32 %v228, %v1687
    %v1747 = vxor.u32 %v1745, 2147483648
    %v1748 = vxor.u32 %v1746, 2147483648
    %v1749 = vmul.f32 %v1747, 1.442695
    %v1750 = vpow.pop %v1749
    %v1751 = vmul.f32 %v1748, 1.442695
    %v1752 = vpow.pop %v1751
    %v1753 = vadd.f32 %v1750, 1.0
    %v1754 = vadd.f32 %v1752, 1.0
    %v1755 = vrcp.pop %v1753
    %v1756 = vmul.f32 1.0, %v1755
    %v1757 = vrcp.pop %v1754
    %v1758 = vmul.f32 1.0, %v1757
    %v1760 = vrot.slane %v1682, 1
    %v1763 = vadd.f32 %v226, %v1682
    %v1764 = vadd.f32 %v230, %v1760
    %v1765 = vxor.u32 %v1763, 2147483648
    %v1766 = vxor.u32 %v1764, 2147483648
    %v1767 = vmul.f32 %v1765, 1.442695
    %v1768 = vpow.pop %v1767
    %v1769 = vmul.f32 %v1766, 1.442695
    %v1770 = vpow.pop %v1769
    %v1771 = vadd.f32 %v1768, 1.0
    %v1772 = vadd.f32 %v1770, 1.0
    %v1773 = vrcp.pop %v1771
    %v1774 = vmul.f32 1.0, %v1773
    %v1775 = vrcp.pop %v1772
    %v1776 = vmul.f32 1.0, %v1775
    %1777 = vrot.lane.b32.xlu0 %v1682, 64
    %v1778 = vpop.permute.xlu0 %1777
    %1779 = vrot.lane.b32.xlu0 %v1760, 64
    %v1780 = vpop.permute.xlu0 %1779
    %v1783 = vmul.f32 %v1756, %v1778
    %v1784 = vmul.f32 %v1758, %v1780
    %1787 = vrot.lane.b32.xlu0 %v1783, 64
    %v1788 = vpop.permute.xlu0 %1787
    %1789 = vrot.lane.b32.xlu0 %v1784, 64
    %v1790 = vpop.permute.xlu0 %1789
    %v1793 = vadd.f32 %v226, %v1788
    %v1794 = vadd.f32 %v230, %v1790
    %v1795 = vtanh.pop %v1793
    %v1796 = vtanh.pop %v1794
    %v1797 = vsub.f32 1.0, %v1774
    %v1798 = vsub.f32 1.0, %v1776
    %1801 = vrot.lane.b32.xlu0 %v1795, 96
    %v1802 = vpop.permute.xlu0 %1801
    %1803 = vrot.lane.b32.xlu0 %v1796, 96
    %v1804 = vpop.permute.xlu0 %1803
    %v1807 = vmul.f32 %v1797, %v1802
    %v1808 = vmul.f32 %v1798, %v1804
    %v1809 = vrot.slane %v1620, 1
    %v1810 = vrot.slane %v1621, 1
    %v1813 = vmul.f32 %v1774, %v1809
    %v1814 = vmul.f32 %v1776, %v1810
    %v1815 = vadd.f32 %v1807, %v1813
    %v1816 = vadd.f32 %v1808, %v1814
    %v1819 = vrot.slane %v1816, 7
    %v1820 = vsel %vm425, %v1819, %v1815
    %1821 = vrot.lane.b32.xlu0 %v1820, 32
    %v1822 = vpop.permute.xlu0 %1821
    %v1824 = vsel %vm87, %v428, %v1822
    %v1825 = vrot.slane %v1621, 7
    %v1826 = vsel %vm621, %v1825, %v1620
    %1827 = vrot.lane.b32.xlu0 %v1826, 32
    %v1828 = vpop.permute.xlu0 %1827
    %v1830 = vsel %vm87, %v624, %v1828
    %v1831 = vrot.slane %v1418, 7
    %v1832 = vsel %vm825, %v1831, %v1417
    %1833 = vrot.lane.b32.xlu0 %v1832, 32
    %v1834 = vpop.permute.xlu0 %1833
    %v1836 = vsel %vm87, %v828, %v1834
    %v1837 = vrot.slane %v1219, 7
    %v1838 = vsel %vm1022, %v1837, %v1218
    %1839 = vrot.lane.b32.xlu0 %v1838, 32
    %v1840 = vpop.permute.xlu0 %1839
    %v1842 = vsel %vm87, %v1025, %v1840
    %v1843 = vrot.slane %v1018, 7
    %v1844 = vsel %vm1223, %v1843, %v1017
    %1845 = vrot.lane.b32.xlu0 %v1844, 32
    %v1846 = vpop.permute.xlu0 %1845
    %v1848 = vsel %vm87, %v1226, %v1846
    %v1849 = vrot.slane %v821, 7
    %v1850 = vsel %vm1422, %v1849, %v820
    %1851 = vrot.lane.b32.xlu0 %v1850, 32
    %v1852 = vpop.permute.xlu0 %1851
    %v1854 = vsel %vm87, %v1425, %v1852
    %v1855 = vrot.slane %v617, 7
    %v1856 = vsel %vm1625, %v1855, %v616
    %1857 = vrot.lane.b32.xlu0 %v1856, 32
    %v1858 = vpop.permute.xlu0 %1857
    %v1860 = vsel %vm87, %v1628, %v1858
    %v1863 = vrot.slane %v1743, 7
    %1864 = vrot.lane.b32.xlu0 %v1742, 96
    %v1865 = vpop.permute.xlu0 %1864
    %1866 = vrot.lane.b32.xlu0 %v1863, 96
    %v1867 = vpop.permute.xlu0 %1866
    %v1870 = vrot.slane %v421, 7
    %1871 = vrot.lane.b32.xlu0 %v420, 32
    %v1872 = vpop.permute.xlu0 %1871
    %1873 = vrot.lane.b32.xlu0 %v1870, 32
    %v1874 = vpop.permute.xlu0 %1873
    %v1877 = vsel %vm87, %v1865, %v1872
    %v1878 = vsel %vm87, %v1867, %v1874
    %v1880 = vrot.slane %v1830, 7
    %v1883 = vrot.slane %v1836, 6
    %v1886 = vrot.slane %v1842, 5
    %v1889 = vrot.slane %v1848, 4
    %v1892 = vrot.slane %v1854, 3
    %v1895 = vrot.slane %v1860, 2
    %vm1899 = vcmask 1046528
    %v1900 = vrot.slane %v1877, 1
    %v1901 = vrot.slane %v1878, 1
    %v1902 = vsel %vm1899, %v1900, %v1901
    %vm1904 = vcmask 1041408
    %v1905 = vsel %vm1904, %v1824, %v1880
    %vm1906 = vcmask 1043456
    %v1907 = vsel %vm1906, %v1905, %v1883
    %vm1908 = vcmask 1045504
    %v1909 = vsel %vm1908, %v1907, %v1886
    %v1910 = vsel %vm1904, %v1889, %v1892
    %v1911 = vsel %vm1906, %v1910, %v1895
    %v1912 = vsel %vm1908, %v1911, %v1902
    %v1914 = vsel %vm252, %v1909, 0
    %v1917 = vsel %vm252, %v1912, 0
    %1919 = vmatprep.subr.mxu0 0.0
    %1920 = vmatpush1.msra.mxu0 %v72
    %1921 = vmatprep.subr.mxu0 0.0
    %1922 = vmatpush1.msra.mxu0 %v73
    %1923 = vmatprep.subr.mxu0 0.0
    %1924 = vmatpush1.msra.mxu0 %v74
    %1925 = vmatprep.subr.mxu0 0.0
    %1926 = vmatpush1.msra.mxu0 %v75
    %1927 = vmatprep.subr.mxu0 0.0
    %1928 = vmatpush1.msra.mxu0 %v76
    %1929 = vmatprep.subr.mxu0 0.0
    %1930 = vmatpush1.msra.mxu0 %v77
    %1931 = vmatprep.subr.mxu0 0.0
    %1932 = vmatpush1.msra.mxu0 %v78
    %1933 = vmatprep.subr.mxu0 0.0
    %1934 = vmatpush1.msra.mxu0 %v79
    %1935 = vmatprep.subr.mxu0 0.0
    %1936 = vmatpush1.msra.mxu0 0.0
    %1937 = vmatprep.subr.mxu0 0.0
    %1938 = vmatpush1.msra.mxu0 0.0
    %1939 = vmatprep.subr.mxu0 0.0
    %1940 = vmatpush1.msra.mxu0 0.0
    %1941 = vmatprep.subr.mxu0 0.0
    %1942 = vmatpush1.msra.mxu0 0.0
    %1943 = vmatprep.subr.mxu0 0.0
    %1944 = vmatpush1.msra.mxu0 0.0
    %1945 = vmatprep.subr.mxu0 0.0
    %1946 = vmatpush1.msra.mxu0 0.0
    %1947 = vmatprep.subr.mxu0 0.0
    %1948 = vmatpush1.msra.mxu0 0.0
    %1949 = vmatprep.subr.mxu0 0.0
    %1950 = vmatpush1.msra.mxu0 0.0
    %1951 = vmatprep.subr.mxu0 0.0
    %1952 = vmatpush1.msra.mxu0 0.0
    %1953 = vmatprep.subr.mxu0 0.0
    %1954 = vmatpush1.msra.mxu0 0.0
    %1955 = vmatprep.subr.mxu0 0.0
    %1956 = vmatpush1.msra.mxu0 0.0
    %1957 = vmatprep.subr.mxu0 0.0
    %1958 = vmatpush1.msra.mxu0 0.0
    %1959 = vmatprep.subr.mxu0 0.0
    %1960 = vmatpush1.msra.mxu0 0.0
    %1961 = vmatprep.subr.mxu0 0.0
    %1962 = vmatpush1.msra.mxu0 0.0
    %1963 = vmatprep.subr.mxu0 0.0
    %1964 = vmatpush1.msra.mxu0 0.0
    %1965 = vmatprep.subr.mxu0 0.0
    %1966 = vmatpush1.msra.mxu0 0.0
    %1967 = vmatprep.subr.mxu0 0.0
    %1968 = vmatpush1.msra.mxu0 0.0
    %1969 = vmatprep.subr.mxu0 0.0
    %1970 = vmatpush1.msra.mxu0 0.0
    %1971 = vmatprep.subr.mxu0 0.0
    %1972 = vmatpush1.msra.mxu0 0.0
    %1973 = vmatprep.subr.mxu0 0.0
    %1974 = vmatpush1.msra.mxu0 0.0
    %1975 = vmatprep.subr.mxu0 0.0
    %1976 = vmatpush1.msra.mxu0 0.0
    %1977 = vmatprep.subr.mxu0 0.0
    %1978 = vmatpush1.msra.mxu0 0.0
    %1979 = vmatprep.subr.mxu0 0.0
    %1980 = vmatpush1.msra.mxu0 0.0
    %1981 = vmatprep.subr.mxu0 0.0
    %1982 = vmatpush1.msra.mxu0 0.0
    %1983 = vmatprep.mubr.f32.mxu0 0.0
    %1984 = vmatmul.mubr.f32.gmra.mrb[0].mxu0 %v1914
    %v1985 = vpop.f32.mrb[0].mxu0
    %v1986 = vadd.f32 %v80, %v1985
    %v1987 = vpop.f32.mrb[0].mxu0
    %1988 = vmatprep.mubr.f32.mxu0 0.0
    %1989 = vmatmul.mubr.f32.gmra.mrb[0].mxu0 %v1917
    %v1990 = vpop.f32.mrb[0].mxu0
    %v1991 = vadd.f32 %v80, %v1990
    %v1992 = vpop.f32.mrb[0].mxu0
    %1993 = vdwg.mxu0
    %v1994 = vadd.f32 %v81, %v1986
    %v1995 = vlaneseq
    %v1996 = vshrl.u32 %v1995, 7
    %v1997 = vlaneseq
    %v1998 = vshrl.u32 %v1997, 7
    %v1999 = vsub.s32 0, %v1998
    %v2000 = vrot.slane %v1994, %v1999
    %2002 = vbcast.lane.b32.xlu0 %v2000, 256
    %v2003 = vpop.permute.xlu0 %2002
    %v2004 = vlaneseq
    %v2005 = vshrl.u32 %v2004, 7
    %v2006 = vsub.s32 1, %v2005
    %v2007 = vrot.slane %v1994, %v2006
    %2009 = vbcast.lane.b32.xlu0 %v2007, 256
    %v2010 = vpop.permute.xlu0 %2009
    %v2013 = vrot.slane %v83, 6
    %v2014 = vrot.slane %v84, 6
    %v2015 = vsel %vm1904, %v2013, %v2014
    %v2017 = vadd.f32 %v2003, %v2015
    %v2018 = vadd.f32 %v2010, %v2015
    %v2021 = vunpack.c.l.s4 1966171168
    %v2022 = vunpack.c.0.s8 %v2021
    %v2023 = vlaneseq
    %v2024 = vshrl.u32 %v2023, 7
    %v2025 = vsub.s32 %v2022, %v2024
    %v2026 = vrot.slane %v1986, %v2025
    %v2027 = vcombine.high %v2026, %v2026
    %v2029 = vunpack.c.l.s4 1966171168
    %v2030 = vunpack.c.0.s8 %v2029
    %v2031 = vlaneseq
    %v2032 = vshrl.u32 %v2031, 7
    %v2033 = vsub.s32 %v2030, %v2032
    %v2034 = vrot.slane %v2026, %v2033
    %v2036 = vunpack.c.l.s4 1966171168
    %v2037 = vunpack.c.0.s8 %v2036
    %v2038 = vlaneseq
    %v2039 = vshrl.u32 %v2038, 7
    %v2040 = vsub.s32 %v2037, %v2039
    %v2041 = vrot.slane %v2027, %v2040
    %v2042 = vcombine.high %v2034, %v2034
    %v2043 = vcombine.high %v2041, %v2041
    %v2044 = vlaneseq
    %v2045 = vshrl.u32 %v2044, 7
    %v2046 = vsub.s32 0, %v2045
    %v2047 = vrot.slane %v2042, %v2046
    %v2048 = vlaneseq
    %v2049 = vshrl.u32 %v2048, 7
    %v2050 = vsub.s32 0, %v2049
    %v2051 = vrot.slane %v2043, %v2050
    %v2054 = vadd.f32 %v2017, %v2047
    %v2055 = vadd.f32 %v2018, %v2051
    %vm2056 = vcmask 55296
    %v2057 = vsel %vm2056, %v2054, -inf
    %v2058 = vrot.slane %v2057, 4
    %v2059 = vmax.f32 %v2057, %v2058
    %v2060 = vrot.slane %v2059, 2
    %v2061 = vmax.f32 %v2059, %v2060
    %v2062 = vrot.slane %v2061, 1
    %v2063 = vmax.f32 %v2061, %v2062
    %v2064 = vsel %vm2056, %v2055, -inf
    %v2065 = vrot.slane %v2064, 4
    %v2066 = vmax.f32 %v2064, %v2065
    %v2067 = vrot.slane %v2066, 2
    %v2068 = vmax.f32 %v2066, %v2067
    %v2069 = vrot.slane %v2068, 1
    %v2070 = vmax.f32 %v2068, %v2069
    %vm2071 = vcmp.eq.f32.partialorder %v2054, %v2063
    %vm2072 = vcmp.eq.f32.partialorder %v2055, %v2070
    %v2073 = vsel %vm2071, %v1996, 7
    %v2074 = vsel %vm2072, %v1996, 7
    %v2075 = vsel %vm2056, %v2073, 2147483647
    %v2076 = vrot.slane %v2075, 4
    %vm2077 = vcmp.lt.s32.totalorder %v2075, %v2076
    %v2078 = vsel %vm2077, %v2075, %v2076
    %v2079 = vrot.slane %v2078, 2
    %vm2080 = vcmp.lt.s32.totalorder %v2078, %v2079
    %v2081 = vsel %vm2080, %v2078, %v2079
    %v2082 = vrot.slane %v2081, 1
    %vm2083 = vcmp.lt.s32.totalorder %v2081, %v2082
    %v2084 = vsel %vm2083, %v2081, %v2082
    %v2085 = vsel %vm2056, %v2074, 2147483647
    %v2086 = vrot.slane %v2085, 4
    %vm2087 = vcmp.lt.s32.totalorder %v2085, %v2086
    %v2088 = vsel %vm2087, %v2085, %v2086
    %v2089 = vrot.slane %v2088, 2
    %vm2090 = vcmp.lt.s32.totalorder %v2088, %v2089
    %v2091 = vsel %vm2090, %v2088, %v2089
    %v2092 = vrot.slane %v2091, 1
    %vm2093 = vcmp.lt.s32.totalorder %v2091, %v2092
    %v2094 = vsel %vm2093, %v2091, %v2092
    %2096 = vbcast.lane.b32.xlu0 %v2063, 256
    %v2097 = vpop.permute.xlu0 %2096
    %2099 = vbcast.lane.b32.xlu0 %v2070, 256
    %v2100 = vpop.permute.xlu0 %2099
    %v2101 = vadd.f32 %v2097, %v2015
    %v2102 = vadd.f32 %v2100, %v2015
    %v2103 = vcombine.high %v1986, %v1986
    %v2105 = vunpack.c.l.s4 1966171168
    %v2106 = vunpack.c.0.s8 %v2105
    %v2107 = vlaneseq
    %v2108 = vshrl.u32 %v2107, 7
    %v2109 = vsub.s32 %v2106, %v2108
    %v2110 = vrot.slane %v2103, %v2109
    %v2111 = vcombine.high %v2110, %v2110
    %v2113 = vunpack.c.l.s4 1966171168
    %v2114 = vunpack.c.0.s8 %v2113
    %v2115 = vlaneseq
    %v2116 = vshrl.u32 %v2115, 7
    %v2117 = vsub.s32 %v2114, %v2116
    %v2118 = vrot.slane %v2110, %v2117
    %v2120 = vunpack.c.l.s4 1966171168
    %v2121 = vunpack.c.0.s8 %v2120
    %v2122 = vlaneseq
    %v2123 = vshrl.u32 %v2122, 7
    %v2124 = vsub.s32 %v2121, %v2123
    %v2125 = vrot.slane %v2111, %v2124
    %v2126 = vlaneseq
    %v2127 = vshrl.u32 %v2126, 7
    %v2128 = vsub.s32 0, %v2127
    %v2129 = vrot.slane %v2118, %v2128
    %v2130 = vlaneseq
    %v2131 = vshrl.u32 %v2130, 7
    %v2132 = vsub.s32 0, %v2131
    %v2133 = vrot.slane %v2125, %v2132
    %v2136 = vadd.f32 %v2101, %v2129
    %v2137 = vadd.f32 %v2102, %v2133
    %v2138 = vsel %vm2056, %v2136, -inf
    %v2139 = vrot.slane %v2138, 4
    %v2140 = vmax.f32 %v2138, %v2139
    %v2141 = vrot.slane %v2140, 2
    %v2142 = vmax.f32 %v2140, %v2141
    %v2143 = vrot.slane %v2142, 1
    %v2144 = vmax.f32 %v2142, %v2143
    %v2145 = vsel %vm2056, %v2137, -inf
    %v2146 = vrot.slane %v2145, 4
    %v2147 = vmax.f32 %v2145, %v2146
    %v2148 = vrot.slane %v2147, 2
    %v2149 = vmax.f32 %v2147, %v2148
    %v2150 = vrot.slane %v2149, 1
    %v2151 = vmax.f32 %v2149, %v2150
    %vm2152 = vcmp.eq.f32.partialorder %v2136, %v2144
    %vm2153 = vcmp.eq.f32.partialorder %v2137, %v2151
    %v2154 = vsel %vm2152, %v1996, 7
    %v2155 = vsel %vm2153, %v1996, 7
    %v2156 = vsel %vm2056, %v2154, 2147483647
    %v2157 = vrot.slane %v2156, 4
    %vm2158 = vcmp.lt.s32.totalorder %v2156, %v2157
    %v2159 = vsel %vm2158, %v2156, %v2157
    %v2160 = vrot.slane %v2159, 2
    %vm2161 = vcmp.lt.s32.totalorder %v2159, %v2160
    %v2162 = vsel %vm2161, %v2159, %v2160
    %v2163 = vrot.slane %v2162, 1
    %vm2164 = vcmp.lt.s32.totalorder %v2162, %v2163
    %v2165 = vsel %vm2164, %v2162, %v2163
    %v2166 = vsel %vm2056, %v2155, 2147483647
    %v2167 = vrot.slane %v2166, 4
    %vm2168 = vcmp.lt.s32.totalorder %v2166, %v2167
    %v2169 = vsel %vm2168, %v2166, %v2167
    %v2170 = vrot.slane %v2169, 2
    %vm2171 = vcmp.lt.s32.totalorder %v2169, %v2170
    %v2172 = vsel %vm2171, %v2169, %v2170
    %v2173 = vrot.slane %v2172, 1
    %vm2174 = vcmp.lt.s32.totalorder %v2172, %v2173
    %v2175 = vsel %vm2174, %v2172, %v2173
    %2177 = vbcast.lane.b32.xlu0 %v2144, 256
    %v2178 = vpop.permute.xlu0 %2177
    %2180 = vbcast.lane.b32.xlu0 %v2151, 256
    %v2181 = vpop.permute.xlu0 %2180
    %v2182 = vadd.f32 %v2178, %v2015
    %v2183 = vadd.f32 %v2181, %v2015
    %v2184 = vcombine.high %v2118, %v2118
    %v2185 = vcombine.high %v2125, %v2125
    %v2186 = vlaneseq
    %v2187 = vshrl.u32 %v2186, 7
    %v2188 = vsub.s32 0, %v2187
    %v2189 = vrot.slane %v2184, %v2188
    %v2190 = vlaneseq
    %v2191 = vshrl.u32 %v2190, 7
    %v2192 = vsub.s32 0, %v2191
    %v2193 = vrot.slane %v2185, %v2192
    %v2196 = vadd.f32 %v2182, %v2189
    %v2197 = vadd.f32 %v2183, %v2193
    %v2198 = vsel %vm2056, %v2196, -inf
    %v2199 = vrot.slane %v2198, 4
    %v2200 = vmax.f32 %v2198, %v2199
    %v2201 = vrot.slane %v2200, 2
    %v2202 = vmax.f32 %v2200, %v2201
    %v2203 = vrot.slane %v2202, 1
    %v2204 = vmax.f32 %v2202, %v2203
    %v2205 = vsel %vm2056, %v2197, -inf
    %v2206 = vrot.slane %v2205, 4
    %v2207 = vmax.f32 %v2205, %v2206
    %v2208 = vrot.slane %v2207, 2
    %v2209 = vmax.f32 %v2207, %v2208
    %v2210 = vrot.slane %v2209, 1
    %v2211 = vmax.f32 %v2209, %v2210
    %vm2212 = vcmp.eq.f32.partialorder %v2196, %v2204
    %vm2213 = vcmp.eq.f32.partialorder %v2197, %v2211
    %v2214 = vsel %vm2212, %v1996, 7
    %v2215 = vsel %vm2213, %v1996, 7
    %v2216 = vsel %vm2056, %v2214, 2147483647
    %v2217 = vrot.slane %v2216, 4
    %vm2218 = vcmp.lt.s32.totalorder %v2216, %v2217
    %v2219 = vsel %vm2218, %v2216, %v2217
    %v2220 = vrot.slane %v2219, 2
    %vm2221 = vcmp.lt.s32.totalorder %v2219, %v2220
    %v2222 = vsel %vm2221, %v2219, %v2220
    %v2223 = vrot.slane %v2222, 1
    %vm2224 = vcmp.lt.s32.totalorder %v2222, %v2223
    %v2225 = vsel %vm2224, %v2222, %v2223
    %v2226 = vsel %vm2056, %v2215, 2147483647
    %v2227 = vrot.slane %v2226, 4
    %vm2228 = vcmp.lt.s32.totalorder %v2226, %v2227
    %v2229 = vsel %vm2228, %v2226, %v2227
    %v2230 = vrot.slane %v2229, 2
    %vm2231 = vcmp.lt.s32.totalorder %v2229, %v2230
    %v2232 = vsel %vm2231, %v2229, %v2230
    %v2233 = vrot.slane %v2232, 1
    %vm2234 = vcmp.lt.s32.totalorder %v2232, %v2233
    %v2235 = vsel %vm2234, %v2232, %v2233
    %2237 = vbcast.lane.b32.xlu0 %v2204, 256
    %v2238 = vpop.permute.xlu0 %2237
    %2240 = vbcast.lane.b32.xlu0 %v2211, 256
    %v2241 = vpop.permute.xlu0 %2240
    %v2242 = vadd.f32 %v2238, %v2015
    %v2243 = vadd.f32 %v2241, %v2015
    %v2246 = vunpack.c.l.s4 1966171168
    %v2247 = vunpack.c.0.s8 %v2246
    %v2248 = vlaneseq
    %v2249 = vshrl.u32 %v2248, 7
    %v2250 = vsub.s32 %v2247, %v2249
    %v2251 = vrot.slane %v1991, %v2250
    %v2252 = vcombine.high %v2251, %v2251
    %v2254 = vunpack.c.l.s4 1966171168
    %v2255 = vunpack.c.0.s8 %v2254
    %v2256 = vlaneseq
    %v2257 = vshrl.u32 %v2256, 7
    %v2258 = vsub.s32 %v2255, %v2257
    %v2259 = vrot.slane %v2251, %v2258
    %v2261 = vunpack.c.l.s4 1966171168
    %v2262 = vunpack.c.0.s8 %v2261
    %v2263 = vlaneseq
    %v2264 = vshrl.u32 %v2263, 7
    %v2265 = vsub.s32 %v2262, %v2264
    %v2266 = vrot.slane %v2252, %v2265
    %v2267 = vlaneseq
    %v2268 = vshrl.u32 %v2267, 7
    %v2269 = vsub.s32 0, %v2268
    %v2270 = vrot.slane %v2259, %v2269
    %v2271 = vlaneseq
    %v2272 = vshrl.u32 %v2271, 7
    %v2273 = vsub.s32 0, %v2272
    %v2274 = vrot.slane %v2266, %v2273
    %v2277 = vadd.f32 %v2242, %v2270
    %v2278 = vadd.f32 %v2243, %v2274
    %v2279 = vsel %vm2056, %v2277, -inf
    %v2280 = vrot.slane %v2279, 4
    %v2281 = vmax.f32 %v2279, %v2280
    %v2282 = vrot.slane %v2281, 2
    %v2283 = vmax.f32 %v2281, %v2282
    %v2284 = vrot.slane %v2283, 1
    %v2285 = vmax.f32 %v2283, %v2284
    %v2286 = vsel %vm2056, %v2278, -inf
    %v2287 = vrot.slane %v2286, 4
    %v2288 = vmax.f32 %v2286, %v2287
    %v2289 = vrot.slane %v2288, 2
    %v2290 = vmax.f32 %v2288, %v2289
    %v2291 = vrot.slane %v2290, 1
    %v2292 = vmax.f32 %v2290, %v2291
    %vm2293 = vcmp.eq.f32.partialorder %v2277, %v2285
    %vm2294 = vcmp.eq.f32.partialorder %v2278, %v2292
    %v2295 = vsel %vm2293, %v1996, 7
    %v2296 = vsel %vm2294, %v1996, 7
    %v2297 = vsel %vm2056, %v2295, 2147483647
    %v2298 = vrot.slane %v2297, 4
    %vm2299 = vcmp.lt.s32.totalorder %v2297, %v2298
    %v2300 = vsel %vm2299, %v2297, %v2298
    %v2301 = vrot.slane %v2300, 2
    %vm2302 = vcmp.lt.s32.totalorder %v2300, %v2301
    %v2303 = vsel %vm2302, %v2300, %v2301
    %v2304 = vrot.slane %v2303, 1
    %vm2305 = vcmp.lt.s32.totalorder %v2303, %v2304
    %v2306 = vsel %vm2305, %v2303, %v2304
    %v2307 = vsel %vm2056, %v2296, 2147483647
    %v2308 = vrot.slane %v2307, 4
    %vm2309 = vcmp.lt.s32.totalorder %v2307, %v2308
    %v2310 = vsel %vm2309, %v2307, %v2308
    %v2311 = vrot.slane %v2310, 2
    %vm2312 = vcmp.lt.s32.totalorder %v2310, %v2311
    %v2313 = vsel %vm2312, %v2310, %v2311
    %v2314 = vrot.slane %v2313, 1
    %vm2315 = vcmp.lt.s32.totalorder %v2313, %v2314
    %v2316 = vsel %vm2315, %v2313, %v2314
    %2318 = vbcast.lane.b32.xlu0 %v2285, 256
    %v2319 = vpop.permute.xlu0 %2318
    %2321 = vbcast.lane.b32.xlu0 %v2292, 256
    %v2322 = vpop.permute.xlu0 %2321
    %v2323 = vadd.f32 %v2319, %v2015
    %v2324 = vadd.f32 %v2322, %v2015
    %v2325 = vcombine.high %v2259, %v2259
    %v2326 = vcombine.high %v2266, %v2266
    %v2327 = vlaneseq
    %v2328 = vshrl.u32 %v2327, 7
    %v2329 = vsub.s32 0, %v2328
    %v2330 = vrot.slane %v2325, %v2329
    %v2331 = vlaneseq
    %v2332 = vshrl.u32 %v2331, 7
    %v2333 = vsub.s32 0, %v2332
    %v2334 = vrot.slane %v2326, %v2333
    %v2337 = vadd.f32 %v2323, %v2330
    %v2338 = vadd.f32 %v2324, %v2334
    %v2339 = vsel %vm2056, %v2337, -inf
    %v2340 = vrot.slane %v2339, 4
    %v2341 = vmax.f32 %v2339, %v2340
    %v2342 = vrot.slane %v2341, 2
    %v2343 = vmax.f32 %v2341, %v2342
    %v2344 = vrot.slane %v2343, 1
    %v2345 = vmax.f32 %v2343, %v2344
    %v2346 = vsel %vm2056, %v2338, -inf
    %v2347 = vrot.slane %v2346, 4
    %v2348 = vmax.f32 %v2346, %v2347
    %v2349 = vrot.slane %v2348, 2
    %v2350 = vmax.f32 %v2348, %v2349
    %v2351 = vrot.slane %v2350, 1
    %v2352 = vmax.f32 %v2350, %v2351
    %vm2353 = vcmp.eq.f32.partialorder %v2337, %v2345
    %vm2354 = vcmp.eq.f32.partialorder %v2338, %v2352
    %v2355 = vsel %vm2353, %v1996, 7
    %v2356 = vsel %vm2354, %v1996, 7
    %v2357 = vsel %vm2056, %v2355, 2147483647
    %v2358 = vrot.slane %v2357, 4
    %vm2359 = vcmp.lt.s32.totalorder %v2357, %v2358
    %v2360 = vsel %vm2359, %v2357, %v2358
    %v2361 = vrot.slane %v2360, 2
    %vm2362 = vcmp.lt.s32.totalorder %v2360, %v2361
    %v2363 = vsel %vm2362, %v2360, %v2361
    %v2364 = vrot.slane %v2363, 1
    %vm2365 = vcmp.lt.s32.totalorder %v2363, %v2364
    %v2366 = vsel %vm2365, %v2363, %v2364
    %v2367 = vsel %vm2056, %v2356, 2147483647
    %v2368 = vrot.slane %v2367, 4
    %vm2369 = vcmp.lt.s32.totalorder %v2367, %v2368
    %v2370 = vsel %vm2369, %v2367, %v2368
    %v2371 = vrot.slane %v2370, 2
    %vm2372 = vcmp.lt.s32.totalorder %v2370, %v2371
    %v2373 = vsel %vm2372, %v2370, %v2371
    %v2374 = vrot.slane %v2373, 1
    %vm2375 = vcmp.lt.s32.totalorder %v2373, %v2374
    %v2376 = vsel %vm2375, %v2373, %v2374
    %2378 = vbcast.lane.b32.xlu0 %v2345, 256
    %v2379 = vpop.permute.xlu0 %2378
    %2381 = vbcast.lane.b32.xlu0 %v2352, 256
    %v2382 = vpop.permute.xlu0 %2381
    %v2383 = vadd.f32 %v2379, %v2015
    %v2384 = vadd.f32 %v2382, %v2015
    %v2385 = vcombine.high %v1991, %v1991
    %v2387 = vunpack.c.l.s4 1966171168
    %v2388 = vunpack.c.0.s8 %v2387
    %v2389 = vlaneseq
    %v2390 = vshrl.u32 %v2389, 7
    %v2391 = vsub.s32 %v2388, %v2390
    %v2392 = vrot.slane %v2385, %v2391
    %v2393 = vcombine.high %v2392, %v2392
    %v2395 = vunpack.c.l.s4 1966171168
    %v2396 = vunpack.c.0.s8 %v2395
    %v2397 = vlaneseq
    %v2398 = vshrl.u32 %v2397, 7
    %v2399 = vsub.s32 %v2396, %v2398
    %v2400 = vrot.slane %v2392, %v2399
    %v2402 = vunpack.c.l.s4 1966171168
    %v2403 = vunpack.c.0.s8 %v2402
    %v2404 = vlaneseq
    %v2405 = vshrl.u32 %v2404, 7
    %v2406 = vsub.s32 %v2403, %v2405
    %v2407 = vrot.slane %v2393, %v2406
    %v2408 = vlaneseq
    %v2409 = vshrl.u32 %v2408, 7
    %v2410 = vsub.s32 0, %v2409
    %v2411 = vrot.slane %v2400, %v2410
    %v2412 = vlaneseq
    %v2413 = vshrl.u32 %v2412, 7
    %v2414 = vsub.s32 0, %v2413
    %v2415 = vrot.slane %v2407, %v2414
    %v2418 = vadd.f32 %v2383, %v2411
    %v2419 = vadd.f32 %v2384, %v2415
    %v2420 = vsel %vm2056, %v2418, -inf
    %v2421 = vrot.slane %v2420, 4
    %v2422 = vmax.f32 %v2420, %v2421
    %v2423 = vrot.slane %v2422, 2
    %v2424 = vmax.f32 %v2422, %v2423
    %v2425 = vrot.slane %v2424, 1
    %v2426 = vmax.f32 %v2424, %v2425
    %v2427 = vsel %vm2056, %v2419, -inf
    %v2428 = vrot.slane %v2427, 4
    %v2429 = vmax.f32 %v2427, %v2428
    %v2430 = vrot.slane %v2429, 2
    %v2431 = vmax.f32 %v2429, %v2430
    %v2432 = vrot.slane %v2431, 1
    %v2433 = vmax.f32 %v2431, %v2432
    %vm2434 = vcmp.eq.f32.partialorder %v2418, %v2426
    %vm2435 = vcmp.eq.f32.partialorder %v2419, %v2433
    %v2436 = vsel %vm2434, %v1996, 7
    %v2437 = vsel %vm2435, %v1996, 7
    %v2438 = vsel %vm2056, %v2436, 2147483647
    %v2439 = vrot.slane %v2438, 4
    %vm2440 = vcmp.lt.s32.totalorder %v2438, %v2439
    %v2441 = vsel %vm2440, %v2438, %v2439
    %v2442 = vrot.slane %v2441, 2
    %vm2443 = vcmp.lt.s32.totalorder %v2441, %v2442
    %v2444 = vsel %vm2443, %v2441, %v2442
    %v2445 = vrot.slane %v2444, 1
    %vm2446 = vcmp.lt.s32.totalorder %v2444, %v2445
    %v2447 = vsel %vm2446, %v2444, %v2445
    %v2448 = vsel %vm2056, %v2437, 2147483647
    %v2449 = vrot.slane %v2448, 4
    %vm2450 = vcmp.lt.s32.totalorder %v2448, %v2449
    %v2451 = vsel %vm2450, %v2448, %v2449
    %v2452 = vrot.slane %v2451, 2
    %vm2453 = vcmp.lt.s32.totalorder %v2451, %v2452
    %v2454 = vsel %vm2453, %v2451, %v2452
    %v2455 = vrot.slane %v2454, 1
    %vm2456 = vcmp.lt.s32.totalorder %v2454, %v2455
    %v2457 = vsel %vm2456, %v2454, %v2455
    %2459 = vbcast.lane.b32.xlu0 %v2426, 256
    %v2460 = vpop.permute.xlu0 %2459
    %2462 = vbcast.lane.b32.xlu0 %v2433, 256
    %v2463 = vpop.permute.xlu0 %2462
    %v2464 = vadd.f32 %v2460, %v2015
    %v2465 = vadd.f32 %v2463, %v2015
    %v2466 = vcombine.high %v2400, %v2400
    %v2467 = vcombine.high %v2407, %v2407
    %v2468 = vlaneseq
    %v2469 = vshrl.u32 %v2468, 7
    %v2470 = vsub.s32 0, %v2469
    %v2471 = vrot.slane %v2466, %v2470
    %v2472 = vlaneseq
    %v2473 = vshrl.u32 %v2472, 7
    %v2474 = vsub.s32 0, %v2473
    %v2475 = vrot.slane %v2467, %v2474
    %v2478 = vadd.f32 %v2464, %v2471
    %v2479 = vadd.f32 %v2465, %v2475
    %v2480 = vsel %vm2056, %v2478, -inf
    %v2481 = vrot.slane %v2480, 4
    %v2482 = vmax.f32 %v2480, %v2481
    %v2483 = vrot.slane %v2482, 2
    %v2484 = vmax.f32 %v2482, %v2483
    %v2485 = vrot.slane %v2484, 1
    %v2486 = vmax.f32 %v2484, %v2485
    %v2487 = vsel %vm2056, %v2479, -inf
    %v2488 = vrot.slane %v2487, 4
    %v2489 = vmax.f32 %v2487, %v2488
    %v2490 = vrot.slane %v2489, 2
    %v2491 = vmax.f32 %v2489, %v2490
    %v2492 = vrot.slane %v2491, 1
    %v2493 = vmax.f32 %v2491, %v2492
    %vm2494 = vcmp.eq.f32.partialorder %v2478, %v2486
    %vm2495 = vcmp.eq.f32.partialorder %v2479, %v2493
    %v2496 = vsel %vm2494, %v1996, 7
    %v2497 = vsel %vm2495, %v1996, 7
    %v2498 = vsel %vm2056, %v2496, 2147483647
    %v2499 = vrot.slane %v2498, 4
    %vm2500 = vcmp.lt.s32.totalorder %v2498, %v2499
    %v2501 = vsel %vm2500, %v2498, %v2499
    %v2502 = vrot.slane %v2501, 2
    %vm2503 = vcmp.lt.s32.totalorder %v2501, %v2502
    %v2504 = vsel %vm2503, %v2501, %v2502
    %v2505 = vrot.slane %v2504, 1
    %vm2506 = vcmp.lt.s32.totalorder %v2504, %v2505
    %v2507 = vsel %vm2506, %v2504, %v2505
    %v2508 = vsel %vm2056, %v2497, 2147483647
    %v2509 = vrot.slane %v2508, 4
    %vm2510 = vcmp.lt.s32.totalorder %v2508, %v2509
    %v2511 = vsel %vm2510, %v2508, %v2509
    %v2512 = vrot.slane %v2511, 2
    %vm2513 = vcmp.lt.s32.totalorder %v2511, %v2512
    %v2514 = vsel %vm2513, %v2511, %v2512
    %v2515 = vrot.slane %v2514, 1
    %vm2516 = vcmp.lt.s32.totalorder %v2514, %v2515
    %v2517 = vsel %vm2516, %v2514, %v2515
    %v2518 = vadd.f32 %v2486, %v82
    %v2519 = vadd.f32 %v2493, %v82
    %v2522 = vrot.slane %v2519, 7
    %v2523 = vsel %vm425, %v2522, %v2518
    %vm2525 = vcmask 50176
    %v2526 = vsel %vm2525, %v2523, -inf
    %2527 = vmax.xlane.f32.xlu0 %v2526
    %v2528 = vpop.xlane.xlu0 %2527
    %v2529 = vlaneseq
    %v2530 = vand.u32 %v2529, 127
    %v2532 = vrot.slane %v2528, 1
    %vm2535 = vcmp.eq.f32.partialorder %v2518, %v2528
    %vm2536 = vcmp.eq.f32.partialorder %v2519, %v2532
    %v2537 = vsel %vm2535, %v2530, 7
    %v2538 = vsel %vm2536, %v2530, 7
    %v2539 = vrot.slane %v2538, 7
    %v2540 = vsel %vm425, %v2539, %v2537
    %v2541 = vsel %vm2525, %v2540, 2147483647
    %v2542 = vand.u32 %v2541, 65535
    %v2543 = vshra.s32 %v2541, 16
    %v2544 = vcvt.s32.f32 %v2542
    %v2545 = vcvt.s32.f32 %v2543
    %2546 = vmin.xlane.f32.xlu0 %v2545
    %v2547 = vpop.xlane.xlu0 %2546
    %vm2548 = vcmp.eq.f32.partialorder %v2545, %v2547
    %v2549 = vsel %vm2548, %v2544, inf
    %2550 = vmin.xlane.f32.xlu0 %v2549
    %v2551 = vpop.xlane.xlu0 %2550
    %v2552 = vcvt.f32.s32 %v2551
    %v2553 = vcvt.f32.s32 %v2547
    %v2554 = vshll.u32 %v2553, 16
    %v2555 = vadd.s32 %v2554, %v2552
    %vm2556 = vcmp.eq.s32.totalorder %v2530, %v2555
    %v2557 = vsel %vm425, %v2517, %v2507
    %v2558 = vsel %vm2556, %v2557, 0
    %v2559 = vsel %vm2525, %v2558, 0
    %v2560 = vand.u32 %v2559, 65535
    %v2561 = vshrl.u32 %v2559, 16
    %v2562 = vcvt.s32.f32 %v2560
    %v2563 = vcvt.s32.f32 %v2561
    %2564 = vadd.xlane.f32.xlu0 %v2562
    %v2565 = vpop.xlane.xlu0 %2564
    %2566 = vadd.xlane.f32.xlu0 %v2563
    %v2567 = vpop.xlane.xlu0 %2566
    %v2568 = vcvt.f32.s32 %v2565
    %v2569 = vcvt.f32.s32 %v2567
    %v2570 = vshll.u32 %v2569, 16
    %v2571 = vadd.s32 %v2570, %v2568
    %vm2572 = vcmp.eq.s32.totalorder %v2530, %v2571
    %v2573 = vsel %vm425, %v2457, %v2447
    %v2574 = vsel %vm2572, %v2573, 0
    %v2575 = vsel %vm2525, %v2574, 0
    %v2576 = vand.u32 %v2575, 65535
    %v2577 = vshrl.u32 %v2575, 16
    %v2578 = vcvt.s32.f32 %v2576
    %v2579 = vcvt.s32.f32 %v2577
    %2580 = vadd.xlane.f32.xlu0 %v2578
    %v2581 = vpop.xlane.xlu0 %2580
    %2582 = vadd.xlane.f32.xlu0 %v2579
    %v2583 = vpop.xlane.xlu0 %2582
    %v2584 = vcvt.f32.s32 %v2581
    %v2585 = vcvt.f32.s32 %v2583
    %v2586 = vshll.u32 %v2585, 16
    %v2587 = vadd.s32 %v2586, %v2584
    %vm2588 = vcmp.eq.s32.totalorder %v2530, %v2587
    %v2589 = vsel %vm425, %v2376, %v2366
    %v2590 = vsel %vm2588, %v2589, 0
    %v2591 = vsel %vm2525, %v2590, 0
    %v2592 = vand.u32 %v2591, 65535
    %v2593 = vshrl.u32 %v2591, 16
    %v2594 = vcvt.s32.f32 %v2592
    %v2595 = vcvt.s32.f32 %v2593
    %2596 = vadd.xlane.f32.xlu0 %v2594
    %v2597 = vpop.xlane.xlu0 %2596
    %2598 = vadd.xlane.f32.xlu0 %v2595
    %v2599 = vpop.xlane.xlu0 %2598
    %v2600 = vcvt.f32.s32 %v2597
    %v2601 = vcvt.f32.s32 %v2599
    %v2602 = vshll.u32 %v2601, 16
    %v2603 = vadd.s32 %v2602, %v2600
    %vm2604 = vcmp.eq.s32.totalorder %v2530, %v2603
    %v2605 = vsel %vm425, %v2316, %v2306
    %v2606 = vsel %vm2604, %v2605, 0
    %v2607 = vsel %vm2525, %v2606, 0
    %v2608 = vand.u32 %v2607, 65535
    %v2609 = vshrl.u32 %v2607, 16
    %v2610 = vcvt.s32.f32 %v2608
    %v2611 = vcvt.s32.f32 %v2609
    %2612 = vadd.xlane.f32.xlu0 %v2610
    %v2613 = vpop.xlane.xlu0 %2612
    %2614 = vadd.xlane.f32.xlu0 %v2611
    %v2615 = vpop.xlane.xlu0 %2614
    %v2616 = vcvt.f32.s32 %v2613
    %v2617 = vcvt.f32.s32 %v2615
    %v2618 = vshll.u32 %v2617, 16
    %v2619 = vadd.s32 %v2618, %v2616
    %vm2620 = vcmp.eq.s32.totalorder %v2530, %v2619
    %v2621 = vsel %vm425, %v2235, %v2225
    %v2622 = vsel %vm2620, %v2621, 0
    %v2623 = vsel %vm2525, %v2622, 0
    %v2624 = vand.u32 %v2623, 65535
    %v2625 = vshrl.u32 %v2623, 16
    %v2626 = vcvt.s32.f32 %v2624
    %v2627 = vcvt.s32.f32 %v2625
    %2628 = vadd.xlane.f32.xlu0 %v2626
    %v2629 = vpop.xlane.xlu0 %2628
    %2630 = vadd.xlane.f32.xlu0 %v2627
    %v2631 = vpop.xlane.xlu0 %2630
    %v2632 = vcvt.f32.s32 %v2629
    %v2633 = vcvt.f32.s32 %v2631
    %v2634 = vshll.u32 %v2633, 16
    %v2635 = vadd.s32 %v2634, %v2632
    %vm2636 = vcmp.eq.s32.totalorder %v2530, %v2635
    %v2637 = vsel %vm425, %v2175, %v2165
    %v2638 = vsel %vm2636, %v2637, 0
    %v2639 = vsel %vm2525, %v2638, 0
    %v2640 = vand.u32 %v2639, 65535
    %v2641 = vshrl.u32 %v2639, 16
    %v2642 = vcvt.s32.f32 %v2640
    %v2643 = vcvt.s32.f32 %v2641
    %2644 = vadd.xlane.f32.xlu0 %v2642
    %v2645 = vpop.xlane.xlu0 %2644
    %2646 = vadd.xlane.f32.xlu0 %v2643
    %v2647 = vpop.xlane.xlu0 %2646
    %v2648 = vcvt.f32.s32 %v2645
    %v2649 = vcvt.f32.s32 %v2647
    %v2650 = vshll.u32 %v2649, 16
    %v2651 = vadd.s32 %v2650, %v2648
    %vm2652 = vcmp.eq.s32.totalorder %v2530, %v2651
    %v2653 = vsel %vm425, %v2094, %v2084
    %v2654 = vsel %vm2652, %v2653, 0
    %v2655 = vsel %vm2525, %v2654, 0
    %v2656 = vand.u32 %v2655, 65535
    %v2657 = vshrl.u32 %v2655, 16
    %v2658 = vcvt.s32.f32 %v2656
    %v2659 = vcvt.s32.f32 %v2657
    %2660 = vadd.xlane.f32.xlu0 %v2658
    %v2661 = vpop.xlane.xlu0 %2660
    %2662 = vadd.xlane.f32.xlu0 %v2659
    %v2663 = vpop.xlane.xlu0 %2662
    %v2664 = vcvt.f32.s32 %v2661
    %v2665 = vcvt.f32.s32 %v2663
    %v2666 = vshll.u32 %v2665, 16
    %v2667 = vadd.s32 %v2666, %v2664
    %vm2668 = vcmask 7168
    %v2669 = vsel %vm2668, %v2667, %v2651
    %vm2670 = vcmask 15360
    %v2671 = vsel %vm2670, %v2669, %v2635
    %vm2672 = vcmask 23552
    %v2673 = vsel %vm2672, %v2671, %v2619
    %vm2674 = vcmask 31744
    %v2675 = vsel %vm2674, %v2673, %v2603
    %vm2676 = vcmask 39936
    %v2677 = vsel %vm2676, %v2675, %v2587
    %vm2678 = vcmask 48128
    %v2679 = vsel %vm2678, %v2677, %v2571
    %vm2680 = vcmask 56320
    %v2681 = vsel %vm2680, %v2679, %v2555
    %vm2682 = vcmask 1024
    %2683 = vst.msk [vmem:[%s2] sm:$0x3] %vm2682, %v2528
    %vm2684 = vcmask 58368
    %2685 = vst.msk [vmem:[#allocation7] sm:$0x3] %vm2684, %v2681
    // Predicated region
    $region18: #{prnn_crf_forward.1} parent=1 // pred_check
      _
    $region19: #{prnn_crf_forward.1} parent=1 // pred_check_branch
      %2687 = sbr.rel (0) target = $region21
    $region20: #{prnn_crf_forward.1} parent=1 // pred_region
      _
    $region21: #{prnn_crf_forward.1} parent=1 // pred_fallthru
      _
    // Predicated region
    $region22: #{prnn_crf_forward.1} parent=1 // pred_check
      _
    $region23: #{prnn_crf_forward.1} parent=1 // pred_check_branch
      %2689 = sbr.rel (0) target = $region25
    $region24: #{prnn_crf_forward.1} parent=1 // pred_region
      %s2691 = ssub.s32 32, 32
      %2692 = vsyncadd [#allocation4], %s2691
      %s2694 = sshll.u32 [#allocation7], 4
      %s2695 = int_to_ptr.vmem [resolvable:$true] %s2694
      %2697 = dma.vmem_to_hbm [thread:$0]  %s2695, 32, %s3, [#allocation4]
    $region25: #{prnn_crf_forward.1} parent=1 // pred_fallthru
      _
    // Predicated region
    $region26: #{prnn_crf_forward.1} parent=1 // pred_check
      _
    $region27: #{prnn_crf_forward.1} parent=1 // pred_check_branch
      %2699 = sbr.rel (0) target = $region29
    $region28: #{prnn_crf_forward.1} parent=1 // pred_region
      _
    $region29: #{prnn_crf_forward.1} parent=1 // pred_fallthru
      _
    // Predicated region
    $region30: #{prnn_crf_forward.1} parent=1 // pred_check
      _
    $region31: #{prnn_crf_forward.1} parent=1 // pred_check_branch
      %2701 = sbr.rel (0) target = $region33
    $region32: #{prnn_crf_forward.1} parent=1 // pred_region
      %2702 = dma.done [#allocation4], 32
    $region33: #{prnn_crf_forward.1} parent=1 // pred_fallthru
      _
    %2703 = vsyncpa [#allocation3], 1
    %2704 = vsyncpa [#allocation6], 1
    %2705 = vsyncpa [#allocation4], 1

</llo_original>
